<compile_context>
chip_gen: v5e
topology: v5e:2x2
jax: 0.10.0
libtpu: 0.0.40
codegen_flags: <defaults>
</compile_context>

<pallas_src>
import functools

import jax
import jax.numpy as jnp
from jax.experimental import pallas as pl
from jax.experimental.pallas import tpu as pltpu

LANE = 128
SUBLANE = 8

# Static architecture description (kernel, stride, pad) per conv layer.
CONV_CFG = [(4, 2, 1), (4, 2, 1), (4, 2, 1), (4, 2, 1), (4, 1, 0), (3, 1, 1), (3, 1, 1)]
NUM_HEAD = 3        # conv1..conv3 run as standalone fused-matmul calls
TAIL_TAPS = 16      # conv4 output positions (4x4 map) == conv5 taps


def _rup(n, m):
    return ((n + m - 1) // m) * m


# ----------------------------------------------------------------------------
# Pallas kernel 1: fused  out = relu?( x @ w + bias )   (BN scale pre-folded)
# ----------------------------------------------------------------------------
def _matmul_bias_act_kernel(x_ref, w_ref, b_ref, o_ref, *, apply_relu):
    acc = jnp.dot(x_ref[...], w_ref[...], preferred_element_type=jnp.float32)
    acc = acc + b_ref[...]
    if apply_relu:
        acc = jnp.maximum(acc, 0.0)
    o_ref[...] = acc.astype(o_ref.dtype)


def _pick_tm(m, k, n, budget_bytes=24 * 1024 * 1024):
    """Largest row tile that (a) divides m, (b) keeps the double-buffered bf16
    x/out tiles plus weights within the VMEM budget (safe for v7x's 64 MiB),
    and (c) leaves >= 2 grid steps on large layers so the M axis can be split
    across TensorCores."""
    fixed = 2 * (k * n * 2 + n * 4)                # weights + bias, double-buffered
    for cand in (4096, 2048, 1024, 512, 256, 128, 64, 32, 16, 8):
        if cand > m or m % cand:
            continue
        if cand == m and m >= 512:                 # prefer >= 2 grid steps when big
            continue
        if fixed + 2 * cand * (k + n) * 2 <= budget_bytes:
            return cand
    return m


def fused_matmul(x, w, bias_row, *, apply_relu, out_dtype):
    """x: [M, K] -> relu?(x @ w + bias): [M, N].  bf16 operands, f32 acc."""
    m, k = x.shape
    k2, n = w.shape
    assert k == k2 and bias_row.shape == (1, n)
    tm = _pick_tm(m, k, n)
    kernel = functools.partial(_matmul_bias_act_kernel, apply_relu=apply_relu)
    # TODO(synk): on v7x, pltpu.CORE_PARALLEL (or create_tensorcore_mesh +
    # core_map) would guarantee both TensorCores split the M grid; kept
    # "parallel" for portability and rely on grid >= 2 for the large layers.
    return pl.pallas_call(
        kernel,
        out_shape=jax.ShapeDtypeStruct((m, n), out_dtype),
        grid=(m // tm,),
        in_specs=[
            pl.BlockSpec((tm, k), lambda i: (i, 0)),
            pl.BlockSpec((k, n), lambda i: (0, 0)),
            pl.BlockSpec((1, n), lambda i: (0, 0)),
        ],
        out_specs=pl.BlockSpec((tm, n), lambda i: (i, 0)),
        compiler_params=pltpu.CompilerParams(
            dimension_semantics=("parallel",),
            vmem_limit_bytes=32 * 1024 * 1024),
    )(x.astype(jnp.bfloat16), w.astype(jnp.bfloat16), bias_row.astype(jnp.float32))


# ----------------------------------------------------------------------------
# Pallas kernel 2: fused tail (conv4, conv5, conv6, conv7, fc1..fc3), all VMEM
# ----------------------------------------------------------------------------
def _tail_kernel(p4_ref,
                 w4_ref, b4_ref, w5_ref, b5_ref, w6_ref, b6_ref, w7_ref, b7_ref,
                 wf1_ref, bf1_ref, wf2_ref, bf2_ref, wf3_ref, bf3_ref,
                 o_ref, *, n_taps):
    # conv4 + conv5 fused over conv4's 16 output positions (== conv5 taps):
    #   y4_t = relu(patches4[t] @ w4 + b4);   acc5 += y4_t @ w5[t]
    batch = p4_ref.shape[1]
    acc5 = jnp.zeros((batch, w5_ref.shape[-1]), jnp.float32)
    for t in range(n_taps):                        # static unroll, tiny matmuls
        y4 = jnp.dot(p4_ref[t], w4_ref[...], preferred_element_type=jnp.float32)
        y4 = jnp.maximum(y4 + b4_ref[...], 0.0).astype(jnp.bfloat16)
        acc5 = acc5 + jnp.dot(y4, w5_ref[t], preferred_element_type=jnp.float32)
    x = jnp.maximum(acc5 + b5_ref[...], 0.0)       # conv5 + BN + ReLU (1x1 map)

    def layer(v, w_ref, b_ref, relu):
        y = jnp.dot(v.astype(w_ref.dtype), w_ref[...],
                    preferred_element_type=jnp.float32) + b_ref[...]
        return jnp.maximum(y, 0.0) if relu else y

    x = layer(x, w6_ref, b6_ref, True)    # conv6: 3x3/p1 on 1x1 map == centre tap
    x = layer(x, w7_ref, b7_ref, True)    # conv7 centre tap
    x = layer(x, wf1_ref, bf1_ref, True)  # fc1 + ReLU   (dropout = identity)
    x = layer(x, wf2_ref, bf2_ref, True)  # fc2 + ReLU
    x = layer(x, wf3_ref, bf3_ref, False) # fc3
    o_ref[...] = x.astype(o_ref.dtype)


_TAIL_ORDER = ("w4", "b4", "w5", "b5", "w6", "b6", "w7", "b7",
               "wf1", "bf1", "wf2", "bf2", "wf3", "bf3")


def fused_tail(patches4, tail):
    """patches4: (taps, B, K4) tap-major conv4 patches; tail: dict of weights."""
    n_taps, batch, _ = patches4.shape
    n_out = tail["wf3"].shape[1]
    args = [patches4.astype(jnp.bfloat16)] + [tail[name] for name in _TAIL_ORDER]
    in_specs = [pl.BlockSpec(a.shape, lambda i, _nd=a.ndim: (0,) * _nd) for a in args]
    return pl.pallas_call(
        functools.partial(_tail_kernel, n_taps=n_taps),
        out_shape=jax.ShapeDtypeStruct((batch, n_out), jnp.float32),
        grid=(1,),
        in_specs=in_specs,
        out_specs=pl.BlockSpec((batch, n_out), lambda i: (0, 0)),
        compiler_params=pltpu.CompilerParams(
            dimension_semantics=("arbitrary",),
            vmem_limit_bytes=32 * 1024 * 1024),
    )(*args)


# ----------------------------------------------------------------------------
# Plain-JAX glue: im2col patch extraction (NHWC) + channel fit.
# TODO(synk): patch extraction for conv1-conv3 is still XLA glue; moving it
# in-kernel (implicit GEMM on stride-2 shifted windows) needs manual DMA since
# a plain BlockSpec index_map cannot express the strided windows.
# ----------------------------------------------------------------------------
def im2col(x, kh, kw, stride, pad):
    n, h, w, c = x.shape
    if pad > 0:                            # static Python int
        x = jnp.pad(x, ((0, 0), (pad, pad), (pad, pad), (0, 0)))
    oh = (h + 2 * pad - kh) // stride + 1
    ow = (w + 2 * pad - kw) // stride + 1
    cols = []
    for dy in range(kh):
        for dx in range(kw):
            cols.append(x[:, dy:dy + stride * (oh - 1) + 1:stride,
                            dx:dx + stride * (ow - 1) + 1:stride, :])
    # patch flat index: dy*KW*C + dx*C + c  (matches (KH,KW,I,O) weight reshape)
    return jnp.concatenate(cols, axis=-1), (oh, ow)    # (n, oh, ow, kh*kw*c)


def _fit_channels(x, c):
    cur = x.shape[-1]
    if cur > c:                            # drop all-zero padded lanes
        return x[..., :c]
    if cur < c:
        return jnp.pad(x, ((0, 0),) * (x.ndim - 1) + ((0, c - cur),))
    return x


# ----------------------------------------------------------------------------
# Parameter preparation: fold BN, transpose, pad channels, cast to bf16.
# Padded weight columns / bias entries are zero, so padded output lanes stay
# zero through ReLU and never leak into the next layer's K.
# ----------------------------------------------------------------------------
def _fold_conv_bn(w_oihw, gamma, beta, mean, var, c_in_pad, c_out_pad, eps=1e-5):
    o, i, kh, kw = w_oihw.shape
    scale = gamma / jnp.sqrt(var + eps)
    bias = beta - mean * scale
    w = w_oihw * scale[:, None, None, None]             # fold BN scale into weights
    w = jnp.transpose(w, (2, 3, 1, 0))                  # (KH, KW, I, O)
    w = jnp.pad(w, ((0, 0), (0, 0), (0, c_in_pad - i), (0, c_out_pad - o)))
    w = w.reshape(kh * kw * c_in_pad, c_out_pad)
    bias = jnp.pad(bias, (0, c_out_pad - o)).reshape(1, c_out_pad)
    return w.astype(jnp.bfloat16), bias.astype(jnp.float32)


def _fold_conv_bn_taps(w_oihw, gamma, beta, mean, var, c_in_pad, c_out_pad, eps=1e-5):
    """Full-window conv (kernel == input spatial size): per-tap weight stack
    of shape (kh*kw, c_in_pad, c_out_pad), BN scale folded."""
    o, i, kh, kw = w_oihw.shape
    scale = gamma / jnp.sqrt(var + eps)
    bias = beta - mean * scale
    w = w_oihw * scale[:, None, None, None]
    w = jnp.transpose(w, (2, 3, 1, 0)).reshape(kh * kw, i, o)
    w = jnp.pad(w, ((0, 0), (0, c_in_pad - i), (0, c_out_pad - o)))
    bias = jnp.pad(bias, (0, c_out_pad - o)).reshape(1, c_out_pad)
    return w.astype(jnp.bfloat16), bias.astype(jnp.float32)


def _fold_center_tap(w_oihw, gamma, beta, mean, var, c_in_pad, c_out_pad, eps=1e-5):
    # 3x3/pad=1 conv applied to a 1x1 feature map: only the centre tap matters.
    o, i, kh, kw = w_oihw.shape
    scale = gamma / jnp.sqrt(var + eps)
    bias = beta - mean * scale
    w = w_oihw[:, :, kh // 2, kw // 2] * scale[:, None]     # (O, I)
    w = jnp.pad(jnp.transpose(w, (1, 0)), ((0, c_in_pad - i), (0, c_out_pad - o)))
    bias = jnp.pad(bias, (0, c_out_pad - o)).reshape(1, c_out_pad)
    return w.astype(jnp.bfloat16), bias.astype(jnp.float32)


def _prep_fc(w_oi, b_o, c_in_pad, c_out_pad):     # PyTorch Linear weight is (out, in)
    o, i = w_oi.shape
    w = jnp.pad(jnp.transpose(w_oi, (1, 0)), ((0, c_in_pad - i), (0, c_out_pad - o)))
    b = jnp.pad(b_o, (0, c_out_pad - o)).reshape(1, c_out_pad)
    return w.astype(jnp.bfloat16), b.astype(jnp.float32)


def init_raw_params(key, nc=3, ndf=4, num_classes=7):
    """Deterministic PyTorch-shaped parameters (eval-mode BN statistics)."""
    chans = [nc, ndf, ndf * 2, ndf * 4, ndf * 8, ndf * 16, ndf * 32, ndf * 64]
    raw = {"convs": [], "fcs": []}
    for li, (k, _s, _p) in enumerate(CONV_CFG):
        ci, co = chans[li], chans[li + 1]
        key, wk = jax.random.split(key)
        raw["convs"].append(dict(
            w=0.05 * jax.random.normal(wk, (co, ci, k, k), jnp.float32),
            gamma=jnp.ones((co,), jnp.float32),
            beta=jnp.zeros((co,), jnp.float32),
            mean=jnp.zeros((co,), jnp.float32),
            var=jnp.ones((co,), jnp.float32)))
    fc_dims = [(ndf * 64, 256), (256, 128), (128, num_classes)]
    for fi, fo in fc_dims:
        key, wk, bk = jax.random.split(key, 3)
        raw["fcs"].append(dict(
            w=0.05 * jax.random.normal(wk, (fo, fi), jnp.float32),   # (out, in)
            b=0.01 * jax.random.normal(bk, (fo,), jnp.float32)))
    return raw


def prepare_params(raw, nc, ndf, num_classes):
    """Kernel-ready (BN-folded, padded, bf16) matrices.  K (input channels) is
    only rounded to a multiple of 8; N (output channels) is padded to 128."""
    chans = [nc, ndf, ndf * 2, ndf * 4, ndf * 8, ndf * 16, ndf * 32, ndf * 64]

    head = []
    for li in range(NUM_HEAD):                       # conv1..conv3
        c = raw["convs"][li]
        head.append(_fold_conv_bn(c["w"], c["gamma"], c["beta"], c["mean"], c["var"],
                                  _rup(chans[li], SUBLANE), _rup(chans[li + 1], LANE)))

    tail = {}
    c4 = raw["convs"][3]                             # conv4 fused into the tail
    tail["w4"], tail["b4"] = _fold_conv_bn(
        c4["w"], c4["gamma"], c4["beta"], c4["mean"], c4["var"],
        _rup(chans[3], SUBLANE), _rup(chans[4], LANE))
    c5 = raw["convs"][4]                             # conv5: 4x4/s1/p0 on 4x4 -> 1x1
    tail["w5"], tail["b5"] = _fold_conv_bn_taps(
        c5["w"], c5["gamma"], c5["beta"], c5["mean"], c5["var"],
        _rup(chans[4], LANE), _rup(chans[5], LANE))
    for name, li in (("w6", 5), ("w7", 6)):          # conv6/conv7 on 1x1 maps
        c = raw["convs"][li]
        tail[name], tail["b" + name[1:]] = _fold_center_tap(
            c["w"], c["gamma"], c["beta"], c["mean"], c["var"],
            _rup(chans[li], LANE), _rup(chans[li + 1], LANE))
    fc_in_pads = [_rup(chans[7], LANE), _rup(256, LANE), _rup(128, LANE)]
    fc_out_pads = [_rup(256, LANE), _rup(128, LANE), _rup(num_classes, LANE)]
    for fi, (fc, ip, op) in enumerate(zip(raw["fcs"], fc_in_pads, fc_out_pads)):
        tail[f"wf{fi + 1}"], tail[f"bf{fi + 1}"] = _prep_fc(fc["w"], fc["b"], ip, op)

    return {"head": head, "tail": tail}              # arrays only -> safe to jit


# ----------------------------------------------------------------------------
# Forward pass
# ----------------------------------------------------------------------------
def hand_gesture_cnn_forward(params, x_nchw, *, num_classes):
    # NCHW (PyTorch) -> NHWC internal layout, bf16 activations.
    x = jnp.transpose(x_nchw, (0, 2, 3, 1)).astype(jnp.bfloat16)
    batch = x.shape[0]

    # conv1..conv3: XLA im2col + Pallas fused matmul (+BN+ReLU).  K carries
    # channels rounded to 8 only; the 128-lane padded output is sliced back to
    # the channels the next layer actually consumes.
    for li, (w_mat, bias_row) in enumerate(params["head"]):
        k, s, p = CONV_CFG[li]
        c_in = w_mat.shape[0] // (k * k)             # static, from array shape
        x = _fit_channels(x, c_in)
        patches, (oh, ow) = im2col(x, k, k, s, p)
        out = fused_matmul(patches.reshape(batch * oh * ow, -1), w_mat, bias_row,
                           apply_relu=True, out_dtype=jnp.bfloat16)
        x = out.reshape(batch, oh, ow, -1)
        # Dropout is identity at inference time.

    # conv4..conv7 + fc1..fc3: single fused VMEM-resident Pallas call.  conv4's
    # patches are tap-major (16, B, K4); each conv4 output position is exactly
    # one tap of the full-window conv5, so nothing round-trips HBM and conv5
    # needs no separate im2col/flatten.
    k4, s4, p4 = CONV_CFG[3]
    c_in4 = params["tail"]["w4"].shape[0] // (k4 * k4)
    x = _fit_channels(x, c_in4)
    patches4, (oh4, ow4) = im2col(x, k4, k4, s4, p4)
    assert oh4 * ow4 == TAIL_TAPS, "HandGestureCNN expects 64x64 spatial inputs"
    patches4 = jnp.transpose(patches4, (1, 2, 0, 3)).reshape(TAIL_TAPS, batch, -1)
    logits_pad = fused_tail(patches4, params["tail"])
    return logits_pad[:, :num_classes]


if __name__ == "__main__":
    key = jax.random.PRNGKey(0)
    pkey, xkey = jax.random.split(key)

    NC, NDF, NUM_CLASSES = 3, 4, 7     # small ndf for a quick synthetic run
    # Spatial must be 64x64 so conv5 reduces to 1x1 and flatten gives ndf*64.
    x = jax.random.normal(xkey, (2, NC, 64, 64), jnp.float32)

    raw = init_raw_params(pkey, nc=NC, ndf=NDF, num_classes=NUM_CLASSES)
    kparams = prepare_params(raw, NC, NDF, NUM_CLASSES)

    fwd = jax.jit(functools.partial(hand_gesture_cnn_forward,
                                    num_classes=NUM_CLASSES))
    out = jax.block_until_ready(fwd(kparams, x))

    assert out.shape == (2, NUM_CLASSES), out.shape
    assert bool(jnp.all(jnp.isfinite(out)))
    print("KERNEL_OK")
</pallas_src>

<mosaic_0001>
module attributes {stable_mosaic.version = 11 : i64} {
  func.func @_matmul_bias_act_kernel(%arg0: i32, %arg1: memref<1024x128xbf16, #tpu.memory_space<vmem>>, %arg2: memref<128x128xbf16, #tpu.memory_space<vmem>>, %arg3: memref<1x128xf32, #tpu.memory_space<vmem>>, %arg4: memref<1024x128xbf16, #tpu.memory_space<vmem>>) attributes {dimension_semantics = [#tpu.dimension_semantics<parallel>], iteration_bounds = array<i64: 2>, scalar_prefetch = 0 : i64, scratch_operands = 0 : i64, tpu.core_type = #tpu.core_type<tc>, window_params = [{transform_indices = @transform_0, window_bounds = array<i64: 1024, 128>}, {pipeline_mode = #tpu.pipeline_mode<synchronous>, transform_indices = @transform_1, window_bounds = array<i64: 128, 128>}, {pipeline_mode = #tpu.pipeline_mode<synchronous>, transform_indices = @transform_2, window_bounds = array<i64: 1, 128>}, {transform_indices = @transform_3, window_bounds = array<i64: 1024, 128>}]} {
    %c0 = arith.constant 0 : index
    %c0_0 = arith.constant 0 : index
    %0 = vector.load %arg1[%c0, %c0_0] : memref<1024x128xbf16, #tpu.memory_space<vmem>>, vector<1024x128xbf16>
    %c0_1 = arith.constant 0 : index
    %c0_2 = arith.constant 0 : index
    %1 = vector.load %arg2[%c0_1, %c0_2] : memref<128x128xbf16, #tpu.memory_space<vmem>>, vector<128x128xbf16>
    %cst = arith.constant dense<0.000000e+00> : vector<1024x128xf32>
    %2 = tpu.matmul %0, %1, %cst {dimension_numbers = #tpu.dot_dimension_numbers<[1], [0], [0], [1], [0, 0, 1, 1], [], []>} : vector<1024x128xbf16>, vector<128x128xbf16>, vector<1024x128xf32> -> vector<1024x128xf32>
    %c0_3 = arith.constant 0 : index
    %c0_4 = arith.constant 0 : index
    %3 = vector.load %arg3[%c0_3, %c0_4] : memref<1x128xf32, #tpu.memory_space<vmem>>, vector<1x128xf32>
    %4 = vector.broadcast %3 : vector<1x128xf32> to vector<1024x128xf32>
    %5 = arith.addf %2, %4 : vector<1024x128xf32>
    %cst_5 = arith.constant 0.000000e+00 : f32
    %6 = vector.broadcast %cst_5 : f32 to vector<1024x128xf32>
    %7 = arith.maximumf %5, %6 : vector<1024x128xf32>
    %8 = arith.truncf %7 : vector<1024x128xf32> to vector<1024x128xbf16>
    %c0_6 = arith.constant 0 : index
    %c0_7 = arith.constant 0 : index
    %9 = vector.load %arg4[%c0_6, %c0_7] : memref<1024x128xbf16, #tpu.memory_space<vmem>>, vector<1024x128xbf16>
    tpu.vector_store %arg4[%c0_6, %c0_7], %8 {strides = array<i32>} : memref<1024x128xbf16, #tpu.memory_space<vmem>>, vector<1024x128xbf16>,
    return
  }
  func.func @transform_0(%arg0: i32) -> (i32, i32) {
    %c0_i32 = arith.constant 0 : i32
    %c0_i32_0 = arith.constant 0 : i32
    return %arg0, %c0_i32 : i32, i32
  }
  func.func @transform_1(%arg0: i32) -> (i32, i32) {
    %c0_i32 = arith.constant 0 : i32
    %c0_i32_0 = arith.constant 0 : i32
    %c0_i32_1 = arith.constant 0 : i32
    return %c0_i32, %c0_i32_0 : i32, i32
  }
  func.func @transform_2(%arg0: i32) -> (i32, i32) {
    %c0_i32 = arith.constant 0 : i32
    %c0_i32_0 = arith.constant 0 : i32
    %c0_i32_1 = arith.constant 0 : i32
    return %c0_i32, %c0_i32_0 : i32, i32
  }
  func.func @transform_3(%arg0: i32) -> (i32, i32) {
    %c0_i32 = arith.constant 0 : i32
    %c0_i32_0 = arith.constant 0 : i32
    return %arg0, %c0_i32 : i32, i32
  }
}

module attributes {stable_mosaic.version = 11 : i64} {
  func.func @_matmul_bias_act_kernel(%arg0: i32, %arg1: memref<256x128xbf16, #tpu.memory_space<vmem>>, %arg2: memref<128x128xbf16, #tpu.memory_space<vmem>>, %arg3: memref<1x128xf32, #tpu.memory_space<vmem>>, %arg4: memref<256x128xbf16, #tpu.memory_space<vmem>>) attributes {dimension_semantics = [#tpu.dimension_semantics<parallel>], iteration_bounds = array<i64: 2>, scalar_prefetch = 0 : i64, scratch_operands = 0 : i64, tpu.core_type = #tpu.core_type<tc>, window_params = [{transform_indices = @transform_0, window_bounds = array<i64: 256, 128>}, {pipeline_mode = #tpu.pipeline_mode<synchronous>, transform_indices = @transform_1, window_bounds = array<i64: 128, 128>}, {pipeline_mode = #tpu.pipeline_mode<synchronous>, transform_indices = @transform_2, window_bounds = array<i64: 1, 128>}, {transform_indices = @transform_3, window_bounds = array<i64: 256, 128>}]} {
    %c0 = arith.constant 0 : index
    %c0_0 = arith.constant 0 : index
    %0 = vector.load %arg1[%c0, %c0_0] : memref<256x128xbf16, #tpu.memory_space<vmem>>, vector<256x128xbf16>
    %c0_1 = arith.constant 0 : index
    %c0_2 = arith.constant 0 : index
    %1 = vector.load %arg2[%c0_1, %c0_2] : memref<128x128xbf16, #tpu.memory_space<vmem>>, vector<128x128xbf16>
    %cst = arith.constant dense<0.000000e+00> : vector<256x128xf32>
    %2 = tpu.matmul %0, %1, %cst {dimension_numbers = #tpu.dot_dimension_numbers<[1], [0], [0], [1], [0, 0, 1, 1], [], []>} : vector<256x128xbf16>, vector<128x128xbf16>, vector<256x128xf32> -> vector<256x128xf32>
    %c0_3 = arith.constant 0 : index
    %c0_4 = arith.constant 0 : index
    %3 = vector.load %arg3[%c0_3, %c0_4] : memref<1x128xf32, #tpu.memory_space<vmem>>, vector<1x128xf32>
    %4 = vector.broadcast %3 : vector<1x128xf32> to vector<256x128xf32>
    %5 = arith.addf %2, %4 : vector<256x128xf32>
    %cst_5 = arith.constant 0.000000e+00 : f32
    %6 = vector.broadcast %cst_5 : f32 to vector<256x128xf32>
    %7 = arith.maximumf %5, %6 : vector<256x128xf32>
    %8 = arith.truncf %7 : vector<256x128xf32> to vector<256x128xbf16>
    %c0_6 = arith.constant 0 : index
    %c0_7 = arith.constant 0 : index
    %9 = vector.load %arg4[%c0_6, %c0_7] : memref<256x128xbf16, #tpu.memory_space<vmem>>, vector<256x128xbf16>
    tpu.vector_store %arg4[%c0_6, %c0_7], %8 {strides = array<i32>} : memref<256x128xbf16, #tpu.memory_space<vmem>>, vector<256x128xbf16>,
    return
  }
  func.func @transform_0(%arg0: i32) -> (i32, i32) {
    %c0_i32 = arith.constant 0 : i32
    %c0_i32_0 = arith.constant 0 : i32
    return %arg0, %c0_i32 : i32, i32
  }
  func.func @transform_1(%arg0: i32) -> (i32, i32) {
    %c0_i32 = arith.constant 0 : i32
    %c0_i32_0 = arith.constant 0 : i32
    %c0_i32_1 = arith.constant 0 : i32
    return %c0_i32, %c0_i32_0 : i32, i32
  }
  func.func @transform_2(%arg0: i32) -> (i32, i32) {
    %c0_i32 = arith.constant 0 : i32
    %c0_i32_0 = arith.constant 0 : i32
    %c0_i32_1 = arith.constant 0 : i32
    return %c0_i32, %c0_i32_0 : i32, i32
  }
  func.func @transform_3(%arg0: i32) -> (i32, i32) {
    %c0_i32 = arith.constant 0 : i32
    %c0_i32_0 = arith.constant 0 : i32
    return %arg0, %c0_i32 : i32, i32
  }
}

module attributes {stable_mosaic.version = 11 : i64} {
  func.func @_matmul_bias_act_kernel(%arg0: i32, %arg1: memref<128x128xbf16, #tpu.memory_space<vmem>>, %arg2: memref<128x128xbf16, #tpu.memory_space<vmem>>, %arg3: memref<1x128xf32, #tpu.memory_space<vmem>>, %arg4: memref<128x128xbf16, #tpu.memory_space<vmem>>) attributes {dimension_semantics = [#tpu.dimension_semantics<parallel>], iteration_bounds = array<i64: 1>, scalar_prefetch = 0 : i64, scratch_operands = 0 : i64, tpu.core_type = #tpu.core_type<tc>, window_params = [{transform_indices = @transform_0, window_bounds = array<i64: 128, 128>}, {pipeline_mode = #tpu.pipeline_mode<synchronous>, transform_indices = @transform_1, window_bounds = array<i64: 128, 128>}, {pipeline_mode = #tpu.pipeline_mode<synchronous>, transform_indices = @transform_2, window_bounds = array<i64: 1, 128>}, {transform_indices = @transform_3, window_bounds = array<i64: 128, 128>}]} {
    %c0 = arith.constant 0 : index
    %c0_0 = arith.constant 0 : index
    %0 = vector.load %arg1[%c0, %c0_0] : memref<128x128xbf16, #tpu.memory_space<vmem>>, vector<128x128xbf16>
    %c0_1 = arith.constant 0 : index
    %c0_2 = arith.constant 0 : index
    %1 = vector.load %arg2[%c0_1, %c0_2] : memref<128x128xbf16, #tpu.memory_space<vmem>>, vector<128x128xbf16>
    %cst = arith.constant dense<0.000000e+00> : vector<128x128xf32>
    %2 = tpu.matmul %0, %1, %cst {dimension_numbers = #tpu.dot_dimension_numbers<[1], [0], [0], [1], [0, 0, 1, 1], [], []>} : vector<128x128xbf16>, vector<128x128xbf16>, vector<128x128xf32> -> vector<128x128xf32>
    %c0_3 = arith.constant 0 : index
    %c0_4 = arith.constant 0 : index
    %3 = vector.load %arg3[%c0_3, %c0_4] : memref<1x128xf32, #tpu.memory_space<vmem>>, vector<1x128xf32>
    %4 = vector.broadcast %3 : vector<1x128xf32> to vector<128x128xf32>
    %5 = arith.addf %2, %4 : vector<128x128xf32>
    %cst_5 = arith.constant 0.000000e+00 : f32
    %6 = vector.broadcast %cst_5 : f32 to vector<128x128xf32>
    %7 = arith.maximumf %5, %6 : vector<128x128xf32>
    %8 = arith.truncf %7 : vector<128x128xf32> to vector<128x128xbf16>
    %c0_6 = arith.constant 0 : index
    %c0_7 = arith.constant 0 : index
    %9 = vector.load %arg4[%c0_6, %c0_7] : memref<128x128xbf16, #tpu.memory_space<vmem>>, vector<128x128xbf16>
    tpu.vector_store %arg4[%c0_6, %c0_7], %8 {strides = array<i32>} : memref<128x128xbf16, #tpu.memory_space<vmem>>, vector<128x128xbf16>,
    return
  }
  func.func @transform_0(%arg0: i32) -> (i32, i32) {
    %c0_i32 = arith.constant 0 : i32
    %c0_i32_0 = arith.constant 0 : i32
    return %arg0, %c0_i32 : i32, i32
  }
  func.func @transform_1(%arg0: i32) -> (i32, i32) {
    %c0_i32 = arith.constant 0 : i32
    %c0_i32_0 = arith.constant 0 : i32
    %c0_i32_1 = arith.constant 0 : i32
    return %c0_i32, %c0_i32_0 : i32, i32
  }
  func.func @transform_2(%arg0: i32) -> (i32, i32) {
    %c0_i32 = arith.constant 0 : i32
    %c0_i32_0 = arith.constant 0 : i32
    %c0_i32_1 = arith.constant 0 : i32
    return %c0_i32, %c0_i32_0 : i32, i32
  }
  func.func @transform_3(%arg0: i32) -> (i32, i32) {
    %c0_i32 = arith.constant 0 : i32
    %c0_i32_0 = arith.constant 0 : i32
    return %arg0, %c0_i32 : i32, i32
  }
}

module attributes {stable_mosaic.version = 11 : i64} {
  func.func @_tail_kernel(%arg0: i32, %arg1: memref<16x2x256xbf16, #tpu.memory_space<vmem>>, %arg2: memref<256x128xbf16, #tpu.memory_space<vmem>>, %arg3: memref<1x128xf32, #tpu.memory_space<vmem>>, %arg4: memref<16x128x128xbf16, #tpu.memory_space<vmem>>, %arg5: memref<1x128xf32, #tpu.memory_space<vmem>>, %arg6: memref<128x128xbf16, #tpu.memory_space<vmem>>, %arg7: memref<1x128xf32, #tpu.memory_space<vmem>>, %arg8: memref<128x256xbf16, #tpu.memory_space<vmem>>, %arg9: memref<1x256xf32, #tpu.memory_space<vmem>>, %arg10: memref<256x256xbf16, #tpu.memory_space<vmem>>, %arg11: memref<1x256xf32, #tpu.memory_space<vmem>>, %arg12: memref<256x128xbf16, #tpu.memory_space<vmem>>, %arg13: memref<1x128xf32, #tpu.memory_space<vmem>>, %arg14: memref<128x128xbf16, #tpu.memory_space<vmem>>, %arg15: memref<1x128xf32, #tpu.memory_space<vmem>>, %arg16: memref<2x128xf32, #tpu.memory_space<vmem>>) attributes {dimension_semantics = [#tpu.dimension_semantics<arbitrary>], iteration_bounds = array<i64: 1>, scalar_prefetch = 0 : i64, scratch_operands = 0 : i64, tpu.core_type = #tpu.core_type<tc>, window_params = [{pipeline_mode = #tpu.pipeline_mode<synchronous>, transform_indices = @transform_0, window_bounds = array<i64: 16, 2, 256>}, {pipeline_mode = #tpu.pipeline_mode<synchronous>, transform_indices = @transform_1, window_bounds = array<i64: 256, 128>}, {pipeline_mode = #tpu.pipeline_mode<synchronous>, transform_indices = @transform_2, window_bounds = array<i64: 1, 128>}, {pipeline_mode = #tpu.pipeline_mode<synchronous>, transform_indices = @transform_3, window_bounds = array<i64: 16, 128, 128>}, {pipeline_mode = #tpu.pipeline_mode<synchronous>, transform_indices = @transform_4, window_bounds = array<i64: 1, 128>}, {pipeline_mode = #tpu.pipeline_mode<synchronous>, transform_indices = @transform_5, window_bounds = array<i64: 128, 128>}, {pipeline_mode = #tpu.pipeline_mode<synchronous>, transform_indices = @transform_6, window_bounds = array<i64: 1, 128>}, {pipeline_mode = #tpu.pipeline_mode<synchronous>, transform_indices = @transform_7, window_bounds = array<i64: 128, 256>}, {pipeline_mode = #tpu.pipeline_mode<synchronous>, transform_indices = @transform_8, window_bounds = array<i64: 1, 256>}, {pipeline_mode = #tpu.pipeline_mode<synchronous>, transform_indices = @transform_9, window_bounds = array<i64: 256, 256>}, {pipeline_mode = #tpu.pipeline_mode<synchronous>, transform_indices = @transform_10, window_bounds = array<i64: 1, 256>}, {pipeline_mode = #tpu.pipeline_mode<synchronous>, transform_indices = @transform_11, window_bounds = array<i64: 256, 128>}, {pipeline_mode = #tpu.pipeline_mode<synchronous>, transform_indices = @transform_12, window_bounds = array<i64: 1, 128>}, {pipeline_mode = #tpu.pipeline_mode<synchronous>, transform_indices = @transform_13, window_bounds = array<i64: 128, 128>}, {pipeline_mode = #tpu.pipeline_mode<synchronous>, transform_indices = @transform_14, window_bounds = array<i64: 1, 128>}, {pipeline_mode = #tpu.pipeline_mode<synchronous>, transform_indices = @transform_15, window_bounds = array<i64: 2, 128>}]} {
    %cst = arith.constant 0.000000e+00 : f32
    %0 = vector.broadcast %cst : f32 to vector<2x128xf32>
    %c0 = arith.constant 0 : index
    %c0_0 = arith.constant 0 : index
    %c0_1 = arith.constant 0 : index
    %1 = vector.load %arg1[%c0, %c0_0, %c0_1] : memref<16x2x256xbf16, #tpu.memory_space<vmem>>, vector<1x2x256xbf16>
    %2 = vector.shape_cast %1 : vector<1x2x256xbf16> to vector<2x256xbf16>
    %c0_2 = arith.constant 0 : index
    %c0_3 = arith.constant 0 : index
    %3 = vector.load %arg2[%c0_2, %c0_3] : memref<256x128xbf16, #tpu.memory_space<vmem>>, vector<256x128xbf16>
    %cst_4 = arith.constant dense<0.000000e+00> : vector<2x128xf32>
    %4 = tpu.matmul %2, %3, %cst_4 {dimension_numbers = #tpu.dot_dimension_numbers<[1], [0], [0], [1], [0, 0, 1, 1], [], []>} : vector<2x256xbf16>, vector<256x128xbf16>, vector<2x128xf32> -> vector<2x128xf32>
    %c0_5 = arith.constant 0 : index
    %c0_6 = arith.constant 0 : index
    %5 = vector.load %arg3[%c0_5, %c0_6] : memref<1x128xf32, #tpu.memory_space<vmem>>, vector<1x128xf32>
    %6 = vector.broadcast %5 : vector<1x128xf32> to vector<2x128xf32>
    %7 = arith.addf %4, %6 : vector<2x128xf32>
    %cst_7 = arith.constant 0.000000e+00 : f32
    %8 = vector.broadcast %cst_7 : f32 to vector<2x128xf32>
    %9 = arith.maximumf %7, %8 : vector<2x128xf32>
    %10 = arith.truncf %9 : vector<2x128xf32> to vector<2x128xbf16>
    %c0_8 = arith.constant 0 : index
    %c0_9 = arith.constant 0 : index
    %c0_10 = arith.constant 0 : index
    %11 = vector.load %arg4[%c0_8, %c0_9, %c0_10] : memref<16x128x128xbf16, #tpu.memory_space<vmem>>, vector<1x128x128xbf16>
    %12 = vector.shape_cast %11 : vector<1x128x128xbf16> to vector<128x128xbf16>
    %cst_11 = arith.constant dense<0.000000e+00> : vector<2x128xf32>
    %13 = tpu.matmul %10, %12, %cst_11 {dimension_numbers = #tpu.dot_dimension_numbers<[1], [0], [0], [1], [0, 0, 1, 1], [], []>} : vector<2x128xbf16>, vector<128x128xbf16>, vector<2x128xf32> -> vector<2x128xf32>
    %14 = arith.addf %0, %13 : vector<2x128xf32>
    %c1 = arith.constant 1 : index
    %c0_12 = arith.constant 0 : index
    %c0_13 = arith.constant 0 : index
    %15 = vector.load %arg1[%c1, %c0_12, %c0_13] : memref<16x2x256xbf16, #tpu.memory_space<vmem>>, vector<1x2x256xbf16>
    %16 = vector.shape_cast %15 : vector<1x2x256xbf16> to vector<2x256xbf16>
    %c0_14 = arith.constant 0 : index
    %c0_15 = arith.constant 0 : index
    %17 = vector.load %arg2[%c0_14, %c0_15] : memref<256x128xbf16, #tpu.memory_space<vmem>>, vector<256x128xbf16>
    %cst_16 = arith.constant dense<0.000000e+00> : vector<2x128xf32>
    %18 = tpu.matmul %16, %17, %cst_16 {dimension_numbers = #tpu.dot_dimension_numbers<[1], [0], [0], [1], [0, 0, 1, 1], [], []>} : vector<2x256xbf16>, vector<256x128xbf16>, vector<2x128xf32> -> vector<2x128xf32>
    %c0_17 = arith.constant 0 : index
    %c0_18 = arith.constant 0 : index
    %19 = vector.load %arg3[%c0_17, %c0_18] : memref<1x128xf32, #tpu.memory_space<vmem>>, vector<1x128xf32>
    %20 = vector.broadcast %19 : vector<1x128xf32> to vector<2x128xf32>
    %21 = arith.addf %18, %20 : vector<2x128xf32>
    %cst_19 = arith.constant 0.000000e+00 : f32
    %22 = vector.broadcast %cst_19 : f32 to vector<2x128xf32>
    %23 = arith.maximumf %21, %22 : vector<2x128xf32>
    %24 = arith.truncf %23 : vector<2x128xf32> to vector<2x128xbf16>
    %c1_20 = arith.constant 1 : index
    %c0_21 = arith.constant 0 : index
    %c0_22 = arith.constant 0 : index
    %25 = vector.load %arg4[%c1_20, %c0_21, %c0_22] : memref<16x128x128xbf16, #tpu.memory_space<vmem>>, vector<1x128x128xbf16>
    %26 = vector.shape_cast %25 : vector<1x128x128xbf16> to vector<128x128xbf16>
    %cst_23 = arith.constant dense<0.000000e+00> : vector<2x128xf32>
    %27 = tpu.matmul %24, %26, %cst_23 {dimension_numbers = #tpu.dot_dimension_numbers<[1], [0], [0], [1], [0, 0, 1, 1], [], []>} : vector<2x128xbf16>, vector<128x128xbf16>, vector<2x128xf32> -> vector<2x128xf32>
    %28 = arith.addf %14, %27 : vector<2x128xf32>
    %c2 = arith.constant 2 : index
    %c0_24 = arith.constant 0 : index
    %c0_25 = arith.constant 0 : index
    %29 = vector.load %arg1[%c2, %c0_24, %c0_25] : memref<16x2x256xbf16, #tpu.memory_space<vmem>>, vector<1x2x256xbf16>
    %30 = vector.shape_cast %29 : vector<1x2x256xbf16> to vector<2x256xbf16>
    %c0_26 = arith.constant 0 : index
    %c0_27 = arith.constant 0 : index
    %31 = vector.load %arg2[%c0_26, %c0_27] : memref<256x128xbf16, #tpu.memory_space<vmem>>, vector<256x128xbf16>
    %cst_28 = arith.constant dense<0.000000e+00> : vector<2x128xf32>
    %32 = tpu.matmul %30, %31, %cst_28 {dimension_numbers = #tpu.dot_dimension_numbers<[1], [0], [0], [1], [0, 0, 1, 1], [], []>} : vector<2x256xbf16>, vector<256x128xbf16>, vector<2x128xf32> -> vector<2x128xf32>
    %c0_29 = arith.constant 0 : index
    %c0_30 = arith.constant 0 : index
    %33 = vector.load %arg3[%c0_29, %c0_30] : memref<1x128xf32, #tpu.memory_space<vmem>>, vector<1x128xf32>
    %34 = vector.broadcast %33 : vector<1x128xf32> to vector<2x128xf32>
    %35 = arith.addf %32, %34 : vector<2x128xf32>
    %cst_31 = arith.constant 0.000000e+00 : f32
    %36 = vector.broadcast %cst_31 : f32 to vector<2x128xf32>
    %37 = arith.maximumf %35, %36 : vector<2x128xf32>
    %38 = arith.truncf %37 : vector<2x128xf32> to vector<2x128xbf16>
    %c2_32 = arith.constant 2 : index
    %c0_33 = arith.constant 0 : index
    %c0_34 = arith.constant 0 : index
    %39 = vector.load %arg4[%c2_32, %c0_33, %c0_34] : memref<16x128x128xbf16, #tpu.memory_space<vmem>>, vector<1x128x128xbf16>
    %40 = vector.shape_cast %39 : vector<1x128x128xbf16> to vector<128x128xbf16>
    %cst_35 = arith.constant dense<0.000000e+00> : vector<2x128xf32>
    %41 = tpu.matmul %38, %40, %cst_35 {dimension_numbers = #tpu.dot_dimension_numbers<[1], [0], [0], [1], [0, 0, 1, 1], [], []>} : vector<2x128xbf16>, vector<128x128xbf16>, vector<2x128xf32> -> vector<2x128xf32>
    %42 = arith.addf %28, %41 : vector<2x128xf32>
    %c3 = arith.constant 3 : index
    %c0_36 = arith.constant 0 : index
    %c0_37 = arith.constant 0 : index
    %43 = vector.load %arg1[%c3, %c0_36, %c0_37] : memref<16x2x256xbf16, #tpu.memory_space<vmem>>, vector<1x2x256xbf16>
    %44 = vector.shape_cast %43 : vector<1x2x256xbf16> to vector<2x256xbf16>
    %c0_38 = arith.constant 0 : index
    %c0_39 = arith.constant 0 : index
    %45 = vector.load %arg2[%c0_38, %c0_39] : memref<256x128xbf16, #tpu.memory_space<vmem>>, vector<256x128xbf16>
    %cst_40 = arith.constant dense<0.000000e+00> : vector<2x128xf32>
    %46 = tpu.matmul %44, %45, %cst_40 {dimension_numbers = #tpu.dot_dimension_numbers<[1], [0], [0], [1], [0, 0, 1, 1], [], []>} : vector<2x256xbf16>, vector<256x128xbf16>, vector<2x128xf32> -> vector<2x128xf32>
    %c0_41 = arith.constant 0 : index
    %c0_42 = arith.constant 0 : index
    %47 = vector.load %arg3[%c0_41, %c0_42] : memref<1x128xf32, #tpu.memory_space<vmem>>, vector<1x128xf32>
    %48 = vector.broadcast %47 : vector<1x128xf32> to vector<2x128xf32>
    %49 = arith.addf %46, %48 : vector<2x128xf32>
    %cst_43 = arith.constant 0.000000e+00 : f32
    %50 = vector.broadcast %cst_43 : f32 to vector<2x128xf32>
    %51 = arith.maximumf %49, %50 : vector<2x128xf32>
    %52 = arith.truncf %51 : vector<2x128xf32> to vector<2x128xbf16>
    %c3_44 = arith.constant 3 : index
    %c0_45 = arith.constant 0 : index
    %c0_46 = arith.constant 0 : index
    %53 = vector.load %arg4[%c3_44, %c0_45, %c0_46] : memref<16x128x128xbf16, #tpu.memory_space<vmem>>, vector<1x128x128xbf16>
    %54 = vector.shape_cast %53 : vector<1x128x128xbf16> to vector<128x128xbf16>
    %cst_47 = arith.constant dense<0.000000e+00> : vector<2x128xf32>
    %55 = tpu.matmul %52, %54, %cst_47 {dimension_numbers = #tpu.dot_dimension_numbers<[1], [0], [0], [1], [0, 0, 1, 1], [], []>} : vector<2x128xbf16>, vector<128x128xbf16>, vector<2x128xf32> -> vector<2x128xf32>
    %56 = arith.addf %42, %55 : vector<2x128xf32>
    %c4 = arith.constant 4 : index
    %c0_48 = arith.constant 0 : index
    %c0_49 = arith.constant 0 : index
    %57 = vector.load %arg1[%c4, %c0_48, %c0_49] : memref<16x2x256xbf16, #tpu.memory_space<vmem>>, vector<1x2x256xbf16>
    %58 = vector.shape_cast %57 : vector<1x2x256xbf16> to vector<2x256xbf16>
    %c0_50 = arith.constant 0 : index
    %c0_51 = arith.constant 0 : index
    %59 = vector.load %arg2[%c0_50, %c0_51] : memref<256x128xbf16, #tpu.memory_space<vmem>>, vector<256x128xbf16>
    %cst_52 = arith.constant dense<0.000000e+00> : vector<2x128xf32>
    %60 = tpu.matmul %58, %59, %cst_52 {dimension_numbers = #tpu.dot_dimension_numbers<[1], [0], [0], [1], [0, 0, 1, 1], [], []>} : vector<2x256xbf16>, vector<256x128xbf16>, vector<2x128xf32> -> vector<2x128xf32>
    %c0_53 = arith.constant 0 : index
    %c0_54 = arith.constant 0 : index
    %61 = vector.load %arg3[%c0_53, %c0_54] : memref<1x128xf32, #tpu.memory_space<vmem>>, vector<1x128xf32>
    %62 = vector.broadcast %61 : vector<1x128xf32> to vector<2x128xf32>
    %63 = arith.addf %60, %62 : vector<2x128xf32>
    %cst_55 = arith.constant 0.000000e+00 : f32
    %64 = vector.broadcast %cst_55 : f32 to vector<2x128xf32>
    %65 = arith.maximumf %63, %64 : vector<2x128xf32>
    %66 = arith.truncf %65 : vector<2x128xf32> to vector<2x128xbf16>
    %c4_56 = arith.constant 4 : index
    %c0_57 = arith.constant 0 : index
    %c0_58 = arith.constant 0 : index
    %67 = vector.load %arg4[%c4_56, %c0_57, %c0_58] : memref<16x128x128xbf16, #tpu.memory_space<vmem>>, vector<1x128x128xbf16>
    %68 = vector.shape_cast %67 : vector<1x128x128xbf16> to vector<128x128xbf16>
    %cst_59 = arith.constant dense<0.000000e+00> : vector<2x128xf32>
    %69 = tpu.matmul %66, %68, %cst_59 {dimension_numbers = #tpu.dot_dimension_numbers<[1], [0], [0], [1], [0, 0, 1, 1], [], []>} : vector<2x128xbf16>, vector<128x128xbf16>, vector<2x128xf32> -> vector<2x128xf32>
    %70 = arith.addf %56, %69 : vector<2x128xf32>
    %c5 = arith.constant 5 : index
    %c0_60 = arith.constant 0 : index
    %c0_61 = arith.constant 0 : index
    %71 = vector.load %arg1[%c5, %c0_60, %c0_61] : memref<16x2x256xbf16, #tpu.memory_space<vmem>>, vector<1x2x256xbf16>
    %72 = vector.shape_cast %71 : vector<1x2x256xbf16> to vector<2x256xbf16>
    %c0_62 = arith.constant 0 : index
    %c0_63 = arith.constant 0 : index
    %73 = vector.load %arg2[%c0_62, %c0_63] : memref<256x128xbf16, #tpu.memory_space<vmem>>, vector<256x128xbf16>
    %cst_64 = arith.constant dense<0.000000e+00> : vector<2x128xf32>
    %74 = tpu.matmul %72, %73, %cst_64 {dimension_numbers = #tpu.dot_dimension_numbers<[1], [0], [0], [1], [0, 0, 1, 1], [], []>} : vector<2x256xbf16>, vector<256x128xbf16>, vector<2x128xf32> -> vector<2x128xf32>
    %c0_65 = arith.constant 0 : index
    %c0_66 = arith.constant 0 : index
    %75 = vector.load %arg3[%c0_65, %c0_66] : memref<1x128xf32, #tpu.memory_space<vmem>>, vector<1x128xf32>
    %76 = vector.broadcast %75 : vector<1x128xf32> to vector<2x128xf32>
    %77 = arith.addf %74, %76 : vector<2x128xf32>
    %cst_67 = arith.constant 0.000000e+00 : f32
    %78 = vector.broadcast %cst_67 : f32 to vector<2x128xf32>
    %79 = arith.maximumf %77, %78 : vector<2x128xf32>
    %80 = arith.truncf %79 : vector<2x128xf32> to vector<2x128xbf16>
    %c5_68 = arith.constant 5 : index
    %c0_69 = arith.constant 0 : index
    %c0_70 = arith.constant 0 : index
    %81 = vector.load %arg4[%c5_68, %c0_69, %c0_70] : memref<16x128x128xbf16, #tpu.memory_space<vmem>>, vector<1x128x128xbf16>
    %82 = vector.shape_cast %81 : vector<1x128x128xbf16> to vector<128x128xbf16>
    %cst_71 = arith.constant dense<0.000000e+00> : vector<2x128xf32>
    %83 = tpu.matmul %80, %82, %cst_71 {dimension_numbers = #tpu.dot_dimension_numbers<[1], [0], [0], [1], [0, 0, 1, 1], [], []>} : vector<2x128xbf16>, vector<128x128xbf16>, vector<2x128xf32> -> vector<2x128xf32>
    %84 = arith.addf %70, %83 : vector<2x128xf32>
    %c6 = arith.constant 6 : index
    %c0_72 = arith.constant 0 : index
    %c0_73 = arith.constant 0 : index
    %85 = vector.load %arg1[%c6, %c0_72, %c0_73] : memref<16x2x256xbf16, #tpu.memory_space<vmem>>, vector<1x2x256xbf16>
    %86 = vector.shape_cast %85 : vector<1x2x256xbf16> to vector<2x256xbf16>
    %c0_74 = arith.constant 0 : index
    %c0_75 = arith.constant 0 : index
    %87 = vector.load %arg2[%c0_74, %c0_75] : memref<256x128xbf16, #tpu.memory_space<vmem>>, vector<256x128xbf16>
    %cst_76 = arith.constant dense<0.000000e+00> : vector<2x128xf32>
    %88 = tpu.matmul %86, %87, %cst_76 {dimension_numbers = #tpu.dot_dimension_numbers<[1], [0], [0], [1], [0, 0, 1, 1], [], []>} : vector<2x256xbf16>, vector<256x128xbf16>, vector<2x128xf32> -> vector<2x128xf32>
    %c0_77 = arith.constant 0 : index
    %c0_78 = arith.constant 0 : index
    %89 = vector.load %arg3[%c0_77, %c0_78] : memref<1x128xf32, #tpu.memory_space<vmem>>, vector<1x128xf32>
    %90 = vector.broadcast %89 : vector<1x128xf32> to vector<2x128xf32>
    %91 = arith.addf %88, %90 : vector<2x128xf32>
    %cst_79 = arith.constant 0.000000e+00 : f32
    %92 = vector.broadcast %cst_79 : f32 to vector<2x128xf32>
    %93 = arith.maximumf %91, %92 : vector<2x128xf32>
    %94 = arith.truncf %93 : vector<2x128xf32> to vector<2x128xbf16>
    %c6_80 = arith.constant 6 : index
    %c0_81 = arith.constant 0 : index
    %c0_82 = arith.constant 0 : index
    %95 = vector.load %arg4[%c6_80, %c0_81, %c0_82] : memref<16x128x128xbf16, #tpu.memory_space<vmem>>, vector<1x128x128xbf16>
    %96 = vector.shape_cast %95 : vector<1x128x128xbf16> to vector<128x128xbf16>
    %cst_83 = arith.constant dense<0.000000e+00> : vector<2x128xf32>
    %97 = tpu.matmul %94, %96, %cst_83 {dimension_numbers = #tpu.dot_dimension_numbers<[1], [0], [0], [1], [0, 0, 1, 1], [], []>} : vector<2x128xbf16>, vector<128x128xbf16>, vector<2x128xf32> -> vector<2x128xf32>
    %98 = arith.addf %84, %97 : vector<2x128xf32>
    %c7 = arith.constant 7 : index
    %c0_84 = arith.constant 0 : index
    %c0_85 = arith.constant 0 : index
    %99 = vector.load %arg1[%c7, %c0_84, %c0_85] : memref<16x2x256xbf16, #tpu.memory_space<vmem>>, vector<1x2x256xbf16>
    %100 = vector.shape_cast %99 : vector<1x2x256xbf16> to vector<2x256xbf16>
    %c0_86 = arith.constant 0 : index
    %c0_87 = arith.constant 0 : index
    %101 = vector.load %arg2[%c0_86, %c0_87] : memref<256x128xbf16, #tpu.memory_space<vmem>>, vector<256x128xbf16>
    %cst_88 = arith.constant dense<0.000000e+00> : vector<2x128xf32>
    %102 = tpu.matmul %100, %101, %cst_88 {dimension_numbers = #tpu.dot_dimension_numbers<[1], [0], [0], [1], [0, 0, 1, 1], [], []>} : vector<2x256xbf16>, vector<256x128xbf16>, vector<2x128xf32> -> vector<2x128xf32>
    %c0_89 = arith.constant 0 : index
    %c0_90 = arith.constant 0 : index
    %103 = vector.load %arg3[%c0_89, %c0_90] : memref<1x128xf32, #tpu.memory_space<vmem>>, vector<1x128xf32>
    %104 = vector.broadcast %103 : vector<1x128xf32> to vector<2x128xf32>
    %105 = arith.addf %102, %104 : vector<2x128xf32>
    %cst_91 = arith.constant 0.000000e+00 : f32
    %106 = vector.broadcast %cst_91 : f32 to vector<2x128xf32>
    %107 = arith.maximumf %105, %106 : vector<2x128xf32>
    %108 = arith.truncf %107 : vector<2x128xf32> to vector<2x128xbf16>
    %c7_92 = arith.constant 7 : index
    %c0_93 = arith.constant 0 : index
    %c0_94 = arith.constant 0 : index
    %109 = vector.load %arg4[%c7_92, %c0_93, %c0_94] : memref<16x128x128xbf16, #tpu.memory_space<vmem>>, vector<1x128x128xbf16>
    %110 = vector.shape_cast %109 : vector<1x128x128xbf16> to vector<128x128xbf16>
    %cst_95 = arith.constant dense<0.000000e+00> : vector<2x128xf32>
    %111 = tpu.matmul %108, %110, %cst_95 {dimension_numbers = #tpu.dot_dimension_numbers<[1], [0], [0], [1], [0, 0, 1, 1], [], []>} : vector<2x128xbf16>, vector<128x128xbf16>, vector<2x128xf32> -> vector<2x128xf32>
    %112 = arith.addf %98, %111 : vector<2x128xf32>
    %c8 = arith.constant 8 : index
    %c0_96 = arith.constant 0 : index
    %c0_97 = arith.constant 0 : index
    %113 = vector.load %arg1[%c8, %c0_96, %c0_97] : memref<16x2x256xbf16, #tpu.memory_space<vmem>>, vector<1x2x256xbf16>
    %114 = vector.shape_cast %113 : vector<1x2x256xbf16> to vector<2x256xbf16>
    %c0_98 = arith.constant 0 : index
    %c0_99 = arith.constant 0 : index
    %115 = vector.load %arg2[%c0_98, %c0_99] : memref<256x128xbf16, #tpu.memory_space<vmem>>, vector<256x128xbf16>
    %cst_100 = arith.constant dense<0.000000e+00> : vector<2x128xf32>
    %116 = tpu.matmul %114, %115, %cst_100 {dimension_numbers = #tpu.dot_dimension_numbers<[1], [0], [0], [1], [0, 0, 1, 1], [], []>} : vector<2x256xbf16>, vector<256x128xbf16>, vector<2x128xf32> -> vector<2x128xf32>
    %c0_101 = arith.constant 0 : index
    %c0_102 = arith.constant 0 : index
    %117 = vector.load %arg3[%c0_101, %c0_102] : memref<1x128xf32, #tpu.memory_space<vmem>>, vector<1x128xf32>
    %118 = vector.broadcast %117 : vector<1x128xf32> to vector<2x128xf32>
    %119 = arith.addf %116, %118 : vector<2x128xf32>
    %cst_103 = arith.constant 0.000000e+00 : f32
    %120 = vector.broadcast %cst_103 : f32 to vector<2x128xf32>
    %121 = arith.maximumf %119, %120 : vector<2x128xf32>
    %122 = arith.truncf %121 : vector<2x128xf32> to vector<2x128xbf16>
    %c8_104 = arith.constant 8 : index
    %c0_105 = arith.constant 0 : index
    %c0_106 = arith.constant 0 : index
    %123 = vector.load %arg4[%c8_104, %c0_105, %c0_106] : memref<16x128x128xbf16, #tpu.memory_space<vmem>>, vector<1x128x128xbf16>
    %124 = vector.shape_cast %123 : vector<1x128x128xbf16> to vector<128x128xbf16>
    %cst_107 = arith.constant dense<0.000000e+00> : vector<2x128xf32>
    %125 = tpu.matmul %122, %124, %cst_107 {dimension_numbers = #tpu.dot_dimension_numbers<[1], [0], [0], [1], [0, 0, 1, 1], [], []>} : vector<2x128xbf16>, vector<128x128xbf16>, vector<2x128xf32> -> vector<2x128xf32>
    %126 = arith.addf %112, %125 : vector<2x128xf32>
    %c9 = arith.constant 9 : index
    %c0_108 = arith.constant 0 : index
    %c0_109 = arith.constant 0 : index
    %127 = vector.load %arg1[%c9, %c0_108, %c0_109] : memref<16x2x256xbf16, #tpu.memory_space<vmem>>, vector<1x2x256xbf16>
    %128 = vector.shape_cast %127 : vector<1x2x256xbf16> to vector<2x256xbf16>
    %c0_110 = arith.constant 0 : index
    %c0_111 = arith.constant 0 : index
    %129 = vector.load %arg2[%c0_110, %c0_111] : memref<256x128xbf16, #tpu.memory_space<vmem>>, vector<256x128xbf16>
    %cst_112 = arith.constant dense<0.000000e+00> : vector<2x128xf32>
    %130 = tpu.matmul %128, %129, %cst_112 {dimension_numbers = #tpu.dot_dimension_numbers<[1], [0], [0], [1], [0, 0, 1, 1], [], []>} : vector<2x256xbf16>, vector<256x128xbf16>, vector<2x128xf32> -> vector<2x128xf32>
    %c0_113 = arith.constant 0 : index
    %c0_114 = arith.constant 0 : index
    %131 = vector.load %arg3[%c0_113, %c0_114] : memref<1x128xf32, #tpu.memory_space<vmem>>, vector<1x128xf32>
    %132 = vector.broadcast %131 : vector<1x128xf32> to vector<2x128xf32>
    %133 = arith.addf %130, %132 : vector<2x128xf32>
    %cst_115 = arith.constant 0.000000e+00 : f32
    %134 = vector.broadcast %cst_115 : f32 to vector<2x128xf32>
    %135 = arith.maximumf %133, %134 : vector<2x128xf32>
    %136 = arith.truncf %135 : vector<2x128xf32> to vector<2x128xbf16>
    %c9_116 = arith.constant 9 : index
    %c0_117 = arith.constant 0 : index
    %c0_118 = arith.constant 0 : index
    %137 = vector.load %arg4[%c9_116, %c0_117, %c0_118] : memref<16x128x128xbf16, #tpu.memory_space<vmem>>, vector<1x128x128xbf16>
    %138 = vector.shape_cast %137 : vector<1x128x128xbf16> to vector<128x128xbf16>
    %cst_119 = arith.constant dense<0.000000e+00> : vector<2x128xf32>
    %139 = tpu.matmul %136, %138, %cst_119 {dimension_numbers = #tpu.dot_dimension_numbers<[1], [0], [0], [1], [0, 0, 1, 1], [], []>} : vector<2x128xbf16>, vector<128x128xbf16>, vector<2x128xf32> -> vector<2x128xf32>
    %140 = arith.addf %126, %139 : vector<2x128xf32>
    %c10 = arith.constant 10 : index
    %c0_120 = arith.constant 0 : index
    %c0_121 = arith.constant 0 : index
    %141 = vector.load %arg1[%c10, %c0_120, %c0_121] : memref<16x2x256xbf16, #tpu.memory_space<vmem>>, vector<1x2x256xbf16>
    %142 = vector.shape_cast %141 : vector<1x2x256xbf16> to vector<2x256xbf16>
    %c0_122 = arith.constant 0 : index
    %c0_123 = arith.constant 0 : index
    %143 = vector.load %arg2[%c0_122, %c0_123] : memref<256x128xbf16, #tpu.memory_space<vmem>>, vector<256x128xbf16>
    %cst_124 = arith.constant dense<0.000000e+00> : vector<2x128xf32>
    %144 = tpu.matmul %142, %143, %cst_124 {dimension_numbers = #tpu.dot_dimension_numbers<[1], [0], [0], [1], [0, 0, 1, 1], [], []>} : vector<2x256xbf16>, vector<256x128xbf16>, vector<2x128xf32> -> vector<2x128xf32>
    %c0_125 = arith.constant 0 : index
    %c0_126 = arith.constant 0 : index
    %145 = vector.load %arg3[%c0_125, %c0_126] : memref<1x128xf32, #tpu.memory_space<vmem>>, vector<1x128xf32>
    %146 = vector.broadcast %145 : vector<1x128xf32> to vector<2x128xf32>
    %147 = arith.addf %144, %146 : vector<2x128xf32>
    %cst_127 = arith.constant 0.000000e+00 : f32
    %148 = vector.broadcast %cst_127 : f32 to vector<2x128xf32>
    %149 = arith.maximumf %147, %148 : vector<2x128xf32>
    %150 = arith.truncf %149 : vector<2x128xf32> to vector<2x128xbf16>
    %c10_128 = arith.constant 10 : index
    %c0_129 = arith.constant 0 : index
    %c0_130 = arith.constant 0 : index
    %151 = vector.load %arg4[%c10_128, %c0_129, %c0_130] : memref<16x128x128xbf16, #tpu.memory_space<vmem>>, vector<1x128x128xbf16>
    %152 = vector.shape_cast %151 : vector<1x128x128xbf16> to vector<128x128xbf16>
    %cst_131 = arith.constant dense<0.000000e+00> : vector<2x128xf32>
    %153 = tpu.matmul %150, %152, %cst_131 {dimension_numbers = #tpu.dot_dimension_numbers<[1], [0], [0], [1], [0, 0, 1, 1], [], []>} : vector<2x128xbf16>, vector<128x128xbf16>, vector<2x128xf32> -> vector<2x128xf32>
    %154 = arith.addf %140, %153 : vector<2x128xf32>
    %c11 = arith.constant 11 : index
    %c0_132 = arith.constant 0 : index
    %c0_133 = arith.constant 0 : index
    %155 = vector.load %arg1[%c11, %c0_132, %c0_133] : memref<16x2x256xbf16, #tpu.memory_space<vmem>>, vector<1x2x256xbf16>
    %156 = vector.shape_cast %155 : vector<1x2x256xbf16> to vector<2x256xbf16>
    %c0_134 = arith.constant 0 : index
    %c0_135 = arith.constant 0 : index
    %157 = vector.load %arg2[%c0_134, %c0_135] : memref<256x128xbf16, #tpu.memory_space<vmem>>, vector<256x128xbf16>
    %cst_136 = arith.constant dense<0.000000e+00> : vector<2x128xf32>
    %158 = tpu.matmul %156, %157, %cst_136 {dimension_numbers = #tpu.dot_dimension_numbers<[1], [0], [0], [1], [0, 0, 1, 1], [], []>} : vector<2x256xbf16>, vector<256x128xbf16>, vector<2x128xf32> -> vector<2x128xf32>
    %c0_137 = arith.constant 0 : index
    %c0_138 = arith.constant 0 : index
    %159 = vector.load %arg3[%c0_137, %c0_138] : memref<1x128xf32, #tpu.memory_space<vmem>>, vector<1x128xf32>
    %160 = vector.broadcast %159 : vector<1x128xf32> to vector<2x128xf32>
    %161 = arith.addf %158, %160 : vector<2x128xf32>
    %cst_139 = arith.constant 0.000000e+00 : f32
    %162 = vector.broadcast %cst_139 : f32 to vector<2x128xf32>
    %163 = arith.maximumf %161, %162 : vector<2x128xf32>
    %164 = arith.truncf %163 : vector<2x128xf32> to vector<2x128xbf16>
    %c11_140 = arith.constant 11 : index
    %c0_141 = arith.constant 0 : index
    %c0_142 = arith.constant 0 : index
    %165 = vector.load %arg4[%c11_140, %c0_141, %c0_142] : memref<16x128x128xbf16, #tpu.memory_space<vmem>>, vector<1x128x128xbf16>
    %166 = vector.shape_cast %165 : vector<1x128x128xbf16> to vector<128x128xbf16>
    %cst_143 = arith.constant dense<0.000000e+00> : vector<2x128xf32>
    %167 = tpu.matmul %164, %166, %cst_143 {dimension_numbers = #tpu.dot_dimension_numbers<[1], [0], [0], [1], [0, 0, 1, 1], [], []>} : vector<2x128xbf16>, vector<128x128xbf16>, vector<2x128xf32> -> vector<2x128xf32>
    %168 = arith.addf %154, %167 : vector<2x128xf32>
    %c12 = arith.constant 12 : index
    %c0_144 = arith.constant 0 : index
    %c0_145 = arith.constant 0 : index
    %169 = vector.load %arg1[%c12, %c0_144, %c0_145] : memref<16x2x256xbf16, #tpu.memory_space<vmem>>, vector<1x2x256xbf16>
    %170 = vector.shape_cast %169 : vector<1x2x256xbf16> to vector<2x256xbf16>
    %c0_146 = arith.constant 0 : index
    %c0_147 = arith.constant 0 : index
    %171 = vector.load %arg2[%c0_146, %c0_147] : memref<256x128xbf16, #tpu.memory_space<vmem>>, vector<256x128xbf16>
    %cst_148 = arith.constant dense<0.000000e+00> : vector<2x128xf32>
    %172 = tpu.matmul %170, %171, %cst_148 {dimension_numbers = #tpu.dot_dimension_numbers<[1], [0], [0], [1], [0, 0, 1, 1], [], []>} : vector<2x256xbf16>, vector<256x128xbf16>, vector<2x128xf32> -> vector<2x128xf32>
    %c0_149 = arith.constant 0 : index
    %c0_150 = arith.constant 0 : index
    %173 = vector.load %arg3[%c0_149, %c0_150] : memref<1x128xf32, #tpu.memory_space<vmem>>, vector<1x128xf32>
    %174 = vector.broadcast %173 : vector<1x128xf32> to vector<2x128xf32>
    %175 = arith.addf %172, %174 : vector<2x128xf32>
    %cst_151 = arith.constant 0.000000e+00 : f32
    %176 = vector.broadcast %cst_151 : f32 to vector<2x128xf32>
    %177 = arith.maximumf %175, %176 : vector<2x128xf32>
    %178 = arith.truncf %177 : vector<2x128xf32> to vector<2x128xbf16>
    %c12_152 = arith.constant 12 : index
    %c0_153 = arith.constant 0 : index
    %c0_154 = arith.constant 0 : index
    %179 = vector.load %arg4[%c12_152, %c0_153, %c0_154] : memref<16x128x128xbf16, #tpu.memory_space<vmem>>, vector<1x128x128xbf16>
    %180 = vector.shape_cast %179 : vector<1x128x128xbf16> to vector<128x128xbf16>
    %cst_155 = arith.constant dense<0.000000e+00> : vector<2x128xf32>
    %181 = tpu.matmul %178, %180, %cst_155 {dimension_numbers = #tpu.dot_dimension_numbers<[1], [0], [0], [1], [0, 0, 1, 1], [], []>} : vector<2x128xbf16>, vector<128x128xbf16>, vector<2x128xf32> -> vector<2x128xf32>
    %182 = arith.addf %168, %181 : vector<2x128xf32>
    %c13 = arith.constant 13 : index
    %c0_156 = arith.constant 0 : index
    %c0_157 = arith.constant 0 : index
    %183 = vector.load %arg1[%c13, %c0_156, %c0_157] : memref<16x2x256xbf16, #tpu.memory_space<vmem>>, vector<1x2x256xbf16>
    %184 = vector.shape_cast %183 : vector<1x2x256xbf16> to vector<2x256xbf16>
    %c0_158 = arith.constant 0 : index
    %c0_159 = arith.constant 0 : index
    %185 = vector.load %arg2[%c0_158, %c0_159] : memref<256x128xbf16, #tpu.memory_space<vmem>>, vector<256x128xbf16>
    %cst_160 = arith.constant dense<0.000000e+00> : vector<2x128xf32>
    %186 = tpu.matmul %184, %185, %cst_160 {dimension_numbers = #tpu.dot_dimension_numbers<[1], [0], [0], [1], [0, 0, 1, 1], [], []>} : vector<2x256xbf16>, vector<256x128xbf16>, vector<2x128xf32> -> vector<2x128xf32>
    %c0_161 = arith.constant 0 : index
    %c0_162 = arith.constant 0 : index
    %187 = vector.load %arg3[%c0_161, %c0_162] : memref<1x128xf32, #tpu.memory_space<vmem>>, vector<1x128xf32>
    %188 = vector.broadcast %187 : vector<1x128xf32> to vector<2x128xf32>
    %189 = arith.addf %186, %188 : vector<2x128xf32>
    %cst_163 = arith.constant 0.000000e+00 : f32
    %190 = vector.broadcast %cst_163 : f32 to vector<2x128xf32>
    %191 = arith.maximumf %189, %190 : vector<2x128xf32>
    %192 = arith.truncf %191 : vector<2x128xf32> to vector<2x128xbf16>
    %c13_164 = arith.constant 13 : index
    %c0_165 = arith.constant 0 : index
    %c0_166 = arith.constant 0 : index
    %193 = vector.load %arg4[%c13_164, %c0_165, %c0_166] : memref<16x128x128xbf16, #tpu.memory_space<vmem>>, vector<1x128x128xbf16>
    %194 = vector.shape_cast %193 : vector<1x128x128xbf16> to vector<128x128xbf16>
    %cst_167 = arith.constant dense<0.000000e+00> : vector<2x128xf32>
    %195 = tpu.matmul %192, %194, %cst_167 {dimension_numbers = #tpu.dot_dimension_numbers<[1], [0], [0], [1], [0, 0, 1, 1], [], []>} : vector<2x128xbf16>, vector<128x128xbf16>, vector<2x128xf32> -> vector<2x128xf32>
    %196 = arith.addf %182, %195 : vector<2x128xf32>
    %c14 = arith.constant 14 : index
    %c0_168 = arith.constant 0 : index
    %c0_169 = arith.constant 0 : index
    %197 = vector.load %arg1[%c14, %c0_168, %c0_169] : memref<16x2x256xbf16, #tpu.memory_space<vmem>>, vector<1x2x256xbf16>
    %198 = vector.shape_cast %197 : vector<1x2x256xbf16> to vector<2x256xbf16>
    %c0_170 = arith.constant 0 : index
    %c0_171 = arith.constant 0 : index
    %199 = vector.load %arg2[%c0_170, %c0_171] : memref<256x128xbf16, #tpu.memory_space<vmem>>, vector<256x128xbf16>
    %cst_172 = arith.constant dense<0.000000e+00> : vector<2x128xf32>
    %200 = tpu.matmul %198, %199, %cst_172 {dimension_numbers = #tpu.dot_dimension_numbers<[1], [0], [0], [1], [0, 0, 1, 1], [], []>} : vector<2x256xbf16>, vector<256x128xbf16>, vector<2x128xf32> -> vector<2x128xf32>
    %c0_173 = arith.constant 0 : index
    %c0_174 = arith.constant 0 : index
    %201 = vector.load %arg3[%c0_173, %c0_174] : memref<1x128xf32, #tpu.memory_space<vmem>>, vector<1x128xf32>
    %202 = vector.broadcast %201 : vector<1x128xf32> to vector<2x128xf32>
    %203 = arith.addf %200, %202 : vector<2x128xf32>
    %cst_175 = arith.constant 0.000000e+00 : f32
    %204 = vector.broadcast %cst_175 : f32 to vector<2x128xf32>
    %205 = arith.maximumf %203, %204 : vector<2x128xf32>
    %206 = arith.truncf %205 : vector<2x128xf32> to vector<2x128xbf16>
    %c14_176 = arith.constant 14 : index
    %c0_177 = arith.constant 0 : index
    %c0_178 = arith.constant 0 : index
    %207 = vector.load %arg4[%c14_176, %c0_177, %c0_178] : memref<16x128x128xbf16, #tpu.memory_space<vmem>>, vector<1x128x128xbf16>
    %208 = vector.shape_cast %207 : vector<1x128x128xbf16> to vector<128x128xbf16>
    %cst_179 = arith.constant dense<0.000000e+00> : vector<2x128xf32>
    %209 = tpu.matmul %206, %208, %cst_179 {dimension_numbers = #tpu.dot_dimension_numbers<[1], [0], [0], [1], [0, 0, 1, 1], [], []>} : vector<2x128xbf16>, vector<128x128xbf16>, vector<2x128xf32> -> vector<2x128xf32>
    %210 = arith.addf %196, %209 : vector<2x128xf32>
    %c15 = arith.constant 15 : index
    %c0_180 = arith.constant 0 : index
    %c0_181 = arith.constant 0 : index
    %211 = vector.load %arg1[%c15, %c0_180, %c0_181] : memref<16x2x256xbf16, #tpu.memory_space<vmem>>, vector<1x2x256xbf16>
    %212 = vector.shape_cast %211 : vector<1x2x256xbf16> to vector<2x256xbf16>
    %c0_182 = arith.constant 0 : index
    %c0_183 = arith.constant 0 : index
    %213 = vector.load %arg2[%c0_182, %c0_183] : memref<256x128xbf16, #tpu.memory_space<vmem>>, vector<256x128xbf16>
    %cst_184 = arith.constant dense<0.000000e+00> : vector<2x128xf32>
    %214 = tpu.matmul %212, %213, %cst_184 {dimension_numbers = #tpu.dot_dimension_numbers<[1], [0], [0], [1], [0, 0, 1, 1], [], []>} : vector<2x256xbf16>, vector<256x128xbf16>, vector<2x128xf32> -> vector<2x128xf32>
    %c0_185 = arith.constant 0 : index
    %c0_186 = arith.constant 0 : index
    %215 = vector.load %arg3[%c0_185, %c0_186] : memref<1x128xf32, #tpu.memory_space<vmem>>, vector<1x128xf32>
    %216 = vector.broadcast %215 : vector<1x128xf32> to vector<2x128xf32>
    %217 = arith.addf %214, %216 : vector<2x128xf32>
    %cst_187 = arith.constant 0.000000e+00 : f32
    %218 = vector.broadcast %cst_187 : f32 to vector<2x128xf32>
    %219 = arith.maximumf %217, %218 : vector<2x128xf32>
    %220 = arith.truncf %219 : vector<2x128xf32> to vector<2x128xbf16>
    %c15_188 = arith.constant 15 : index
    %c0_189 = arith.constant 0 : index
    %c0_190 = arith.constant 0 : index
    %221 = vector.load %arg4[%c15_188, %c0_189, %c0_190] : memref<16x128x128xbf16, #tpu.memory_space<vmem>>, vector<1x128x128xbf16>
    %222 = vector.shape_cast %221 : vector<1x128x128xbf16> to vector<128x128xbf16>
    %cst_191 = arith.constant dense<0.000000e+00> : vector<2x128xf32>
    %223 = tpu.matmul %220, %222, %cst_191 {dimension_numbers = #tpu.dot_dimension_numbers<[1], [0], [0], [1], [0, 0, 1, 1], [], []>} : vector<2x128xbf16>, vector<128x128xbf16>, vector<2x128xf32> -> vector<2x128xf32>
    %224 = arith.addf %210, %223 : vector<2x128xf32>
    %c0_192 = arith.constant 0 : index
    %c0_193 = arith.constant 0 : index
    %225 = vector.load %arg5[%c0_192, %c0_193] : memref<1x128xf32, #tpu.memory_space<vmem>>, vector<1x128xf32>
    %226 = vector.broadcast %225 : vector<1x128xf32> to vector<2x128xf32>
    %227 = arith.addf %224, %226 : vector<2x128xf32>
    %cst_194 = arith.constant 0.000000e+00 : f32
    %228 = vector.broadcast %cst_194 : f32 to vector<2x128xf32>
    %229 = arith.maximumf %227, %228 : vector<2x128xf32>
    %230 = arith.truncf %229 : vector<2x128xf32> to vector<2x128xbf16>
    %c0_195 = arith.constant 0 : index
    %c0_196 = arith.constant 0 : index
    %231 = vector.load %arg6[%c0_195, %c0_196] : memref<128x128xbf16, #tpu.memory_space<vmem>>, vector<128x128xbf16>
    %cst_197 = arith.constant dense<0.000000e+00> : vector<2x128xf32>
    %232 = tpu.matmul %230, %231, %cst_197 {dimension_numbers = #tpu.dot_dimension_numbers<[1], [0], [0], [1], [0, 0, 1, 1], [], []>} : vector<2x128xbf16>, vector<128x128xbf16>, vector<2x128xf32> -> vector<2x128xf32>
    %c0_198 = arith.constant 0 : index
    %c0_199 = arith.constant 0 : index
    %233 = vector.load %arg7[%c0_198, %c0_199] : memref<1x128xf32, #tpu.memory_space<vmem>>, vector<1x128xf32>
    %234 = vector.broadcast %233 : vector<1x128xf32> to vector<2x128xf32>
    %235 = arith.addf %232, %234 : vector<2x128xf32>
    %cst_200 = arith.constant 0.000000e+00 : f32
    %236 = vector.broadcast %cst_200 : f32 to vector<2x128xf32>
    %237 = arith.maximumf %235, %236 : vector<2x128xf32>
    %238 = arith.truncf %237 : vector<2x128xf32> to vector<2x128xbf16>
    %c0_201 = arith.constant 0 : index
    %c0_202 = arith.constant 0 : index
    %239 = vector.load %arg8[%c0_201, %c0_202] : memref<128x256xbf16, #tpu.memory_space<vmem>>, vector<128x256xbf16>
    %cst_203 = arith.constant dense<0.000000e+00> : vector<2x256xf32>
    %240 = tpu.matmul %238, %239, %cst_203 {dimension_numbers = #tpu.dot_dimension_numbers<[1], [0], [0], [1], [0, 0, 1, 1], [], []>} : vector<2x128xbf16>, vector<128x256xbf16>, vector<2x256xf32> -> vector<2x256xf32>
    %c0_204 = arith.constant 0 : index
    %c0_205 = arith.constant 0 : index
    %241 = vector.load %arg9[%c0_204, %c0_205] : memref<1x256xf32, #tpu.memory_space<vmem>>, vector<1x256xf32>
    %242 = vector.broadcast %241 : vector<1x256xf32> to vector<2x256xf32>
    %243 = arith.addf %240, %242 : vector<2x256xf32>
    %cst_206 = arith.constant 0.000000e+00 : f32
    %244 = vector.broadcast %cst_206 : f32 to vector<2x256xf32>
    %245 = arith.maximumf %243, %244 : vector<2x256xf32>
    %246 = arith.truncf %245 : vector<2x256xf32> to vector<2x256xbf16>
    %c0_207 = arith.constant 0 : index
    %c0_208 = arith.constant 0 : index
    %247 = vector.load %arg10[%c0_207, %c0_208] : memref<256x256xbf16, #tpu.memory_space<vmem>>, vector<256x256xbf16>
    %cst_209 = arith.constant dense<0.000000e+00> : vector<2x256xf32>
    %248 = tpu.matmul %246, %247, %cst_209 {dimension_numbers = #tpu.dot_dimension_numbers<[1], [0], [0], [1], [0, 0, 1, 1], [], []>} : vector<2x256xbf16>, vector<256x256xbf16>, vector<2x256xf32> -> vector<2x256xf32>
    %c0_210 = arith.constant 0 : index
    %c0_211 = arith.constant 0 : index
    %249 = vector.load %arg11[%c0_210, %c0_211] : memref<1x256xf32, #tpu.memory_space<vmem>>, vector<1x256xf32>
    %250 = vector.broadcast %249 : vector<1x256xf32> to vector<2x256xf32>
    %251 = arith.addf %248, %250 : vector<2x256xf32>
    %cst_212 = arith.constant 0.000000e+00 : f32
    %252 = vector.broadcast %cst_212 : f32 to vector<2x256xf32>
    %253 = arith.maximumf %251, %252 : vector<2x256xf32>
    %254 = arith.truncf %253 : vector<2x256xf32> to vector<2x256xbf16>
    %c0_213 = arith.constant 0 : index
    %c0_214 = arith.constant 0 : index
    %255 = vector.load %arg12[%c0_213, %c0_214] : memref<256x128xbf16, #tpu.memory_space<vmem>>, vector<256x128xbf16>
    %cst_215 = arith.constant dense<0.000000e+00> : vector<2x128xf32>
    %256 = tpu.matmul %254, %255, %cst_215 {dimension_numbers = #tpu.dot_dimension_numbers<[1], [0], [0], [1], [0, 0, 1, 1], [], []>} : vector<2x256xbf16>, vector<256x128xbf16>, vector<2x128xf32> -> vector<2x128xf32>
    %c0_216 = arith.constant 0 : index
    %c0_217 = arith.constant 0 : index
    %257 = vector.load %arg13[%c0_216, %c0_217] : memref<1x128xf32, #tpu.memory_space<vmem>>, vector<1x128xf32>
    %258 = vector.broadcast %257 : vector<1x128xf32> to vector<2x128xf32>
    %259 = arith.addf %256, %258 : vector<2x128xf32>
    %cst_218 = arith.constant 0.000000e+00 : f32
    %260 = vector.broadcast %cst_218 : f32 to vector<2x128xf32>
    %261 = arith.maximumf %259, %260 : vector<2x128xf32>
    %262 = arith.truncf %261 : vector<2x128xf32> to vector<2x128xbf16>
    %c0_219 = arith.constant 0 : index
    %c0_220 = arith.constant 0 : index
    %263 = vector.load %arg14[%c0_219, %c0_220] : memref<128x128xbf16, #tpu.memory_space<vmem>>, vector<128x128xbf16>
    %cst_221 = arith.constant dense<0.000000e+00> : vector<2x128xf32>
    %264 = tpu.matmul %262, %263, %cst_221 {dimension_numbers = #tpu.dot_dimension_numbers<[1], [0], [0], [1], [0, 0, 1, 1], [], []>} : vector<2x128xbf16>, vector<128x128xbf16>, vector<2x128xf32> -> vector<2x128xf32>
    %c0_222 = arith.constant 0 : index
    %c0_223 = arith.constant 0 : index
    %265 = vector.load %arg15[%c0_222, %c0_223] : memref<1x128xf32, #tpu.memory_space<vmem>>, vector<1x128xf32>
    %266 = vector.broadcast %265 : vector<1x128xf32> to vector<2x128xf32>
    %267 = arith.addf %264, %266 : vector<2x128xf32>
    %c0_224 = arith.constant 0 : index
    %c0_225 = arith.constant 0 : index
    %268 = vector.load %arg16[%c0_224, %c0_225] : memref<2x128xf32, #tpu.memory_space<vmem>>, vector<2x128xf32>
    tpu.vector_store %arg16[%c0_224, %c0_225], %267 {strides = array<i32>} : memref<2x128xf32, #tpu.memory_space<vmem>>, vector<2x128xf32>,
    return
  }
  func.func @transform_0(%arg0: i32) -> (i32, i32, i32) {
    %c0_i32 = arith.constant 0 : i32
    %c0_i32_0 = arith.constant 0 : i32
    %c0_i32_1 = arith.constant 0 : i32
    %c0_i32_2 = arith.constant 0 : i32
    return %c0_i32, %c0_i32_0, %c0_i32_1 : i32, i32, i32
  }
  func.func @transform_1(%arg0: i32) -> (i32, i32) {
    %c0_i32 = arith.constant 0 : i32
    %c0_i32_0 = arith.constant 0 : i32
    %c0_i32_1 = arith.constant 0 : i32
    return %c0_i32, %c0_i32_0 : i32, i32
  }
  func.func @transform_2(%arg0: i32) -> (i32, i32) {
    %c0_i32 = arith.constant 0 : i32
    %c0_i32_0 = arith.constant 0 : i32
    %c0_i32_1 = arith.constant 0 : i32
    return %c0_i32, %c0_i32_0 : i32, i32
  }
  func.func @transform_3(%arg0: i32) -> (i32, i32, i32) {
    %c0_i32 = arith.constant 0 : i32
    %c0_i32_0 = arith.constant 0 : i32
    %c0_i32_1 = arith.constant 0 : i32
    %c0_i32_2 = arith.constant 0 : i32
    return %c0_i32, %c0_i32_0, %c0_i32_1 : i32, i32, i32
  }
  func.func @transform_4(%arg0: i32) -> (i32, i32) {
    %c0_i32 = arith.constant 0 : i32
    %c0_i32_0 = arith.constant 0 : i32
    %c0_i32_1 = arith.constant 0 : i32
    return %c0_i32, %c0_i32_0 : i32, i32
  }
  func.func @transform_5(%arg0: i32) -> (i32, i32) {
    %c0_i32 = arith.constant 0 : i32
    %c0_i32_0 = arith.constant 0 : i32
    %c0_i32_1 = arith.constant 0 : i32
    return %c0_i32, %c0_i32_0 : i32, i32
  }
  func.func @transform_6(%arg0: i32) -> (i32, i32) {
    %c0_i32 = arith.constant 0 : i32
    %c0_i32_0 = arith.constant 0 : i32
    %c0_i32_1 = arith.constant 0 : i32
    return %c0_i32, %c0_i32_0 : i32, i32
  }
  func.func @transform_7(%arg0: i32) -> (i32, i32) {
    %c0_i32 = arith.constant 0 : i32
    %c0_i32_0 = arith.constant 0 : i32
    %c0_i32_1 = arith.constant 0 : i32
    return %c0_i32, %c0_i32_0 : i32, i32
  }
  func.func @transform_8(%arg0: i32) -> (i32, i32) {
    %c0_i32 = arith.constant 0 : i32
    %c0_i32_0 = arith.constant 0 : i32
    %c0_i32_1 = arith.constant 0 : i32
    return %c0_i32, %c0_i32_0 : i32, i32
  }
  func.func @transform_9(%arg0: i32) -> (i32, i32) {
    %c0_i32 = arith.constant 0 : i32
    %c0_i32_0 = arith.constant 0 : i32
    %c0_i32_1 = arith.constant 0 : i32
    return %c0_i32, %c0_i32_0 : i32, i32
  }
  func.func @transform_10(%arg0: i32) -> (i32, i32) {
    %c0_i32 = arith.constant 0 : i32
    %c0_i32_0 = arith.constant 0 : i32
    %c0_i32_1 = arith.constant 0 : i32
    return %c0_i32, %c0_i32_0 : i32, i32
  }
  func.func @transform_11(%arg0: i32) -> (i32, i32) {
    %c0_i32 = arith.constant 0 : i32
    %c0_i32_0 = arith.constant 0 : i32
    %c0_i32_1 = arith.constant 0 : i32
    return %c0_i32, %c0_i32_0 : i32, i32
  }
  func.func @transform_12(%arg0: i32) -> (i32, i32) {
    %c0_i32 = arith.constant 0 : i32
    %c0_i32_0 = arith.constant 0 : i32
    %c0_i32_1 = arith.constant 0 : i32
    return %c0_i32, %c0_i32_0 : i32, i32
  }
  func.func @transform_13(%arg0: i32) -> (i32, i32) {
    %c0_i32 = arith.constant 0 : i32
    %c0_i32_0 = arith.constant 0 : i32
    %c0_i32_1 = arith.constant 0 : i32
    return %c0_i32, %c0_i32_0 : i32, i32
  }
  func.func @transform_14(%arg0: i32) -> (i32, i32) {
    %c0_i32 = arith.constant 0 : i32
    %c0_i32_0 = arith.constant 0 : i32
    %c0_i32_1 = arith.constant 0 : i32
    return %c0_i32, %c0_i32_0 : i32, i32
  }
  func.func @transform_15(%arg0: i32) -> (i32, i32) {
    %c0_i32 = arith.constant 0 : i32
    %c0_i32_0 = arith.constant 0 : i32
    %c0_i32_1 = arith.constant 0 : i32
    return %c0_i32, %c0_i32_0 : i32, i32
  }
}

</mosaic_0001>

<llo_original>
// kernel: hand_gesture_cnn_forward.4
$region0: #{hand_gesture_cnn_forward.4}
  #allocation0 [shape = 'u32[]', space=smem, size = 0x4, offset = 0x4, fixed_abs, tag = 'smem constant byte address 0x4 - core index']
  #allocation1 [shape = 'u32[72,128]{1,0:T(1,128)}', space=vmem, size = 0x9000, scoped, tag = 'internal scratch']
  %s0 = inlined_call_operand.vmem [shape: bf16[2048,128], index: 0, kind: input, shape index: {}]
  %s1 = inlined_call_operand.vmem [shape: bf16[128,128], index: 1, kind: input, shape index: {}]
  %s2 = inlined_call_operand.vmem [shape: f32[1,128], index: 2, kind: input, shape index: {}]
  %s3 = inlined_call_operand.vmem [shape: bf16[2048,128], index: 3, kind: output, shape index: {}]
  %s4 = sld [smem:[#allocation0]]
  $region45: #{hand_gesture_cnn_forward.4} parent=0
    _
  %s6 = ssub.s32 1, %s4
  %s7 = scalar_select 0, %s6, %s4
  loop: start=0, step=1, limit=4
  $region2: #{hand_gesture_cnn_forward.4} parent=0 // loop_pre_header
    _
  $region3: #{hand_gesture_cnn_forward.4} parent=0 // loop_header
    %s9 = sphi 0, %s13
    %p10 = scmp.ge.s32.totalorder %s9, 4
    %s19 = sphi 0, %s21
    %s22 = sphi 0, %s19
    %s23 = sphi 0, %s22
    %s39 = sphi 0, %s23
    %s43 = sphi 0, %s43
    %s45 = sphi 0, %s43
    %s46 = sphi 0, %s45
    %s60 = sphi 0, %s46
    %s64 = sphi 0, %s64
    %s66 = sphi 0, %s64
    %s67 = sphi 0, %s66
    %s81 = sphi 0, %s67
    %s87 = sphi 0, %s89
    %s90 = sphi 0, %s87
    %s91 = sphi 0, %s90
    %s107 = sphi 0, %s91
  $region4: #{hand_gesture_cnn_forward.4} parent=0 // loop_header_branch
    %12 = sbr.rel (%p10) target = $region8
  $region5: #{hand_gesture_cnn_forward.4} parent=0 // loop_body
    %s14 = ssub.s32 %s9, 1
    %s15 = ssub.s32 %s9, 2
    %s16 = sadd.s32 %s9, 1
    %s17 = ssub.s32 %s9, %s16
    %p18 = scmp.eq.s32.totalorder %s17, 0
    %s20 = sadd.s32 %s19, 1
    %s21 = scalar_select %p18, %s19, %s20
    %p24 = pneg %p18
    %p25 = scmp.eq.s32.totalorder %s9, 1
    %p26 = por %p24, %p25
    %p27 = scmp.ne.s32.totalorder %s19, %s22
    %p28 = scmp.eq.s32.totalorder %s9, 0
    %p29 = por %p27, %p28
    %p30 = scmp.ne.s32.totalorder %s19, %s22
    %p31 = scmp.eq.s32.totalorder %s14, 1
    %p32 = por %p30, %p31
    %p33 = scmp.ne.s32.totalorder %s22, %s23
    %p34 = scmp.eq.s32.totalorder %s14, 0
    %p35 = por %p33, %p34
    %p36 = scmp.ne.s32.totalorder %s22, %s23
    %p37 = scmp.eq.s32.totalorder %s15, 1
    %p38 = por %p36, %p37
    %p40 = scmp.ne.s32.totalorder %s23, %s39
    %p41 = scmp.eq.s32.totalorder %s15, 0
    %p42 = por %p40, %p41
    %s44 = sadd.s32 %s43, 1
    %p47 = scmp.eq.s32.totalorder %s9, 1
    %p48 = scmp.ne.s32.totalorder %s43, %s45
    %p49 = scmp.eq.s32.totalorder %s9, 0
    %p50 = por %p48, %p49
    %p51 = scmp.ne.s32.totalorder %s43, %s45
    %p52 = scmp.eq.s32.totalorder %s14, 1
    %p53 = por %p51, %p52
    %p54 = scmp.ne.s32.totalorder %s45, %s46
    %p55 = scmp.eq.s32.totalorder %s14, 0
    %p56 = por %p54, %p55
    %p57 = scmp.ne.s32.totalorder %s45, %s46
    %p58 = scmp.eq.s32.totalorder %s15, 1
    %p59 = por %p57, %p58
    %p61 = scmp.ne.s32.totalorder %s46, %s60
    %p62 = scmp.eq.s32.totalorder %s15, 0
    %p63 = por %p61, %p62
    %s65 = sadd.s32 %s64, 1
    %p68 = scmp.eq.s32.totalorder %s9, 1
    %p69 = scmp.ne.s32.totalorder %s64, %s66
    %p70 = scmp.eq.s32.totalorder %s9, 0
    %p71 = por %p69, %p70
    %p72 = scmp.ne.s32.totalorder %s64, %s66
    %p73 = scmp.eq.s32.totalorder %s14, 1
    %p74 = por %p72, %p73
    %p75 = scmp.ne.s32.totalorder %s66, %s67
    %p76 = scmp.eq.s32.totalorder %s14, 0
    %p77 = por %p75, %p76
    %p78 = scmp.ne.s32.totalorder %s66, %s67
    %p79 = scmp.eq.s32.totalorder %s15, 1
    %p80 = por %p78, %p79
    %p82 = scmp.ne.s32.totalorder %s67, %s81
    %p83 = scmp.eq.s32.totalorder %s15, 0
    %p84 = por %p82, %p83
    %s85 = ssub.s32 %s9, %s16
    %p86 = scmp.eq.s32.totalorder %s85, 0
    %s88 = sadd.s32 %s87, 1
    %s89 = scalar_select %p86, %s87, %s88
    %p92 = pneg %p86
    %p93 = scmp.eq.s32.totalorder %s9, 1
    %p94 = por %p92, %p93
    %p95 = scmp.ne.s32.totalorder %s87, %s90
    %p96 = scmp.eq.s32.totalorder %s9, 0
    %p97 = por %p95, %p96
    %p98 = scmp.ne.s32.totalorder %s87, %s90
    %p99 = scmp.eq.s32.totalorder %s14, 1
    %p100 = por %p98, %p99
    %p101 = scmp.ne.s32.totalorder %s90, %s91
    %p102 = scmp.eq.s32.totalorder %s14, 0
    %p103 = por %p101, %p102
    %p104 = scmp.ne.s32.totalorder %s90, %s91
    %p105 = scmp.eq.s32.totalorder %s15, 1
    %p106 = por %p104, %p105
    %p108 = scmp.ne.s32.totalorder %s91, %s107
    %p109 = scmp.eq.s32.totalorder %s15, 0
    %p110 = por %p108, %p109
    %p111 = scmp.le.s32.totalorder 1, %s9
    %p112 = scmp.lt.s32.totalorder %s9, 3
    %p113 = pnand %p111, %p112
    %p114 = pneg %p113
    // Predicated region
    $region9: #{hand_gesture_cnn_forward.4} parent=5 // pred_check
      _
    $region10: #{hand_gesture_cnn_forward.4} parent=5 // pred_check_branch
      %116 = sbr.rel (%p113) target = $region12
    $region11: #{hand_gesture_cnn_forward.4} parent=5 // pred_region
      %s117 = ssub.s32 %s9, 1
      // Predicated region
      $region13: #{hand_gesture_cnn_forward.4} parent=11 // pred_check
        %p118 = pneg %p56
      $region14: #{hand_gesture_cnn_forward.4} parent=11 // pred_check_branch
        %120 = sbr.rel (%p118) target = $region16
      $region15: #{hand_gesture_cnn_forward.4} parent=11 // pred_region
        _
      $region16: #{hand_gesture_cnn_forward.4} parent=11 // pred_fallthru
        _
      // Predicated region
      $region17: #{hand_gesture_cnn_forward.4} parent=11 // pred_check
        %p121 = pneg %p77
      $region18: #{hand_gesture_cnn_forward.4} parent=11 // pred_check_branch
        %123 = sbr.rel (%p121) target = $region20
      $region19: #{hand_gesture_cnn_forward.4} parent=11 // pred_region
        _
      $region20: #{hand_gesture_cnn_forward.4} parent=11 // pred_fallthru
        _
    $region12: #{hand_gesture_cnn_forward.4} parent=5 // pred_fallthru
      _
    %p124 = scmp.lt.s32.totalorder %s9, 2
    // Predicated region
    $region21: #{hand_gesture_cnn_forward.4} parent=5 // pred_check
      %p125 = pneg %p124
    $region22: #{hand_gesture_cnn_forward.4} parent=5 // pred_check_branch
      %127 = sbr.rel (%p125) target = $region24
    $region23: #{hand_gesture_cnn_forward.4} parent=5 // pred_region
      // Predicated region
      $region25: #{hand_gesture_cnn_forward.4} parent=23 // pred_check
        %p128 = pneg %p29
      $region26: #{hand_gesture_cnn_forward.4} parent=23 // pred_check_branch
        %130 = sbr.rel (%p128) target = $region28
      $region27: #{hand_gesture_cnn_forward.4} parent=23 // pred_region
        %s131 = smul.u32 128, %s9
        %p132 = scmp.lt.s32.totalorder %s131, 255
        %s133 = scalar_select %p132, %s131, 255
        %s134 = smul.addr %s133, 4
        %s135 = scalar_lea.vmem %s0, %s134
        %s136 = smul.u32 128, %s9
      $region28: #{hand_gesture_cnn_forward.4} parent=23 // pred_fallthru
        _
    $region24: #{hand_gesture_cnn_forward.4} parent=5 // pred_fallthru
      _
    %p137 = scmp.le.s32.totalorder 1, %s9
    %p138 = scmp.lt.s32.totalorder %s9, 3
    %p139 = pnand %p137, %p138
    %p140 = pneg %p139
    // Predicated region
    $region29: #{hand_gesture_cnn_forward.4} parent=5 // pred_check
      _
    $region30: #{hand_gesture_cnn_forward.4} parent=5 // pred_check_branch
      %142 = sbr.rel (%p139) target = $region32
    $region31: #{hand_gesture_cnn_forward.4} parent=5 // pred_region
      %s143 = ssub.s32 %s9, 1
      %s144 = smul.u32 128, %s14
      %p145 = scmp.lt.s32.totalorder %s144, 255
      %s146 = scalar_select %p145, %s144, 255
      %s147 = smul.addr %s146, 4
      %s148 = scalar_lea.vmem %s0, %s147
      %p149 = pneg %p35
      %p150 = pneg %p32
      %p151 = pneg %p56
      %p152 = pneg %p53
      %p153 = pneg %p77
      %p154 = pneg %p74
      %p155 = pneg %p103
      %p156 = pneg %p100
      %s157 = smul.u32 128, %s14
      %p158 = scmp.lt.s32.totalorder %s157, 255
      %s159 = scalar_select %p158, %s157, 255
      %s160 = smul.addr %s159, 4
      %s161 = scalar_lea.vmem %s3, %s160
      %s162 = smul.u32 128, %s14
      %p163 = scmp.lt.s32.totalorder %s162, 255
      %s164 = scalar_select %p163, %s162, 255
      %s165 = smul.addr %s164, 4
      %s166 = scalar_lea.vmem %s0, %s165
      %s167 = smul.u32 128, %s14
      %s168 = smul.u32 128, %s14
      %p169 = scmp.lt.s32.totalorder %s168, 255
      %s170 = scalar_select %p169, %s168, 255
      %s171 = smul.addr %s170, 4
      %s172 = scalar_lea.vmem %s3, %s171
      %s173 = smul.u32 128, %s14
      %v174 = vld [vmem:[%s166] sm:$0xf]
      %v175 = vld [vmem:[%s166 + $0x4] sm:$0xf]
      %v176 = vld [vmem:[%s166 + $0x8] sm:$0xf]
      %v177 = vld [vmem:[%s166 + $0xc] sm:$0xf]
      %v178 = vld [vmem:[%s166 + $0x10] sm:$0xf]
      %v179 = vld [vmem:[%s166 + $0x14] sm:$0xf]
      %v180 = vld [vmem:[%s166 + $0x18] sm:$0xf]
      %v181 = vld [vmem:[%s166 + $0x1c] sm:$0xf]
      %v182 = vld [vmem:[%s166 + $0x20] sm:$0xf]
      %v183 = vld [vmem:[%s166 + $0x24] sm:$0xf]
      %v184 = vld [vmem:[%s166 + $0x28] sm:$0xf]
      %v185 = vld [vmem:[%s166 + $0x2c] sm:$0xf]
      %v186 = vld [vmem:[%s166 + $0x30] sm:$0xf]
      %v187 = vld [vmem:[%s166 + $0x34] sm:$0xf]
      %v188 = vld [vmem:[%s166 + $0x38] sm:$0xf]
      %v189 = vld [vmem:[%s166 + $0x3c] sm:$0xf]
      %v190 = vld [vmem:[%s166 + $0x40] sm:$0xf]
      %v191 = vld [vmem:[%s166 + $0x44] sm:$0xf]
      %v192 = vld [vmem:[%s166 + $0x48] sm:$0xf]
      %v193 = vld [vmem:[%s166 + $0x4c] sm:$0xf]
      %v194 = vld [vmem:[%s166 + $0x50] sm:$0xf]
      %v195 = vld [vmem:[%s166 + $0x54] sm:$0xf]
      %v196 = vld [vmem:[%s166 + $0x58] sm:$0xf]
      %v197 = vld [vmem:[%s166 + $0x5c] sm:$0xf]
      %v198 = vld [vmem:[%s166 + $0x60] sm:$0xf]
      %v199 = vld [vmem:[%s166 + $0x64] sm:$0xf]
      %v200 = vld [vmem:[%s166 + $0x68] sm:$0xf]
      %v201 = vld [vmem:[%s166 + $0x6c] sm:$0xf]
      %v202 = vld [vmem:[%s166 + $0x70] sm:$0xf]
      %v203 = vld [vmem:[%s166 + $0x74] sm:$0xf]
      %v204 = vld [vmem:[%s166 + $0x78] sm:$0xf]
      %v205 = vld [vmem:[%s166 + $0x7c] sm:$0xf]
      %v206 = vld [vmem:[%s166 + $0x80] sm:$0xf]
      %v207 = vld [vmem:[%s166 + $0x84] sm:$0xf]
      %v208 = vld [vmem:[%s166 + $0x88] sm:$0xf]
      %v209 = vld [vmem:[%s166 + $0x8c] sm:$0xf]
      %v210 = vld [vmem:[%s166 + $0x90] sm:$0xf]
      %v211 = vld [vmem:[%s166 + $0x94] sm:$0xf]
      %v212 = vld [vmem:[%s166 + $0x98] sm:$0xf]
      %v213 = vld [vmem:[%s166 + $0x9c] sm:$0xf]
      %v214 = vld [vmem:[%s166 + $0xa0] sm:$0xf]
      %v215 = vld [vmem:[%s166 + $0xa4] sm:$0xf]
      %v216 = vld [vmem:[%s166 + $0xa8] sm:$0xf]
      %v217 = vld [vmem:[%s166 + $0xac] sm:$0xf]
      %v218 = vld [vmem:[%s166 + $0xb0] sm:$0xf]
      %v219 = vld [vmem:[%s166 + $0xb4] sm:$0xf]
      %v220 = vld [vmem:[%s166 + $0xb8] sm:$0xf]
      %v221 = vld [vmem:[%s166 + $0xbc] sm:$0xf]
      %v222 = vld [vmem:[%s166 + $0xc0] sm:$0xf]
      %v223 = vld [vmem:[%s166 + $0xc4] sm:$0xf]
      %v224 = vld [vmem:[%s166 + $0xc8] sm:$0xf]
      %v225 = vld [vmem:[%s166 + $0xcc] sm:$0xf]
      %v226 = vld [vmem:[%s166 + $0xd0] sm:$0xf]
      %v227 = vld [vmem:[%s166 + $0xd4] sm:$0xf]
      %v228 = vld [vmem:[%s166 + $0xd8] sm:$0xf]
      %v229 = vld [vmem:[%s166 + $0xdc] sm:$0xf]
      %v230 = vld [vmem:[%s166 + $0xe0] sm:$0xf]
      %v231 = vld [vmem:[%s166 + $0xe4] sm:$0xf]
      %v232 = vld [vmem:[%s166 + $0xe8] sm:$0xf]
      %v233 = vld [vmem:[%s166 + $0xec] sm:$0xf]
      %v234 = vld [vmem:[%s166 + $0xf0] sm:$0xf]
      %v235 = vld [vmem:[%s166 + $0xf4] sm:$0xf]
      %v236 = vld [vmem:[%s166 + $0xf8] sm:$0xf]
      %v237 = vld [vmem:[%s166 + $0xfc] sm:$0xf]
      %v238 = vld [vmem:[%s166 + $0x100] sm:$0xf]
      %v239 = vld [vmem:[%s166 + $0x104] sm:$0xf]
      %v240 = vld [vmem:[%s166 + $0x108] sm:$0xf]
      %v241 = vld [vmem:[%s166 + $0x10c] sm:$0xf]
      %v242 = vld [vmem:[%s166 + $0x110] sm:$0xf]
      %v243 = vld [vmem:[%s166 + $0x114] sm:$0xf]
      %v244 = vld [vmem:[%s166 + $0x118] sm:$0xf]
      %v245 = vld [vmem:[%s166 + $0x11c] sm:$0xf]
      %v246 = vld [vmem:[%s166 + $0x120] sm:$0xf]
      %v247 = vld [vmem:[%s166 + $0x124] sm:$0xf]
      %v248 = vld [vmem:[%s166 + $0x128] sm:$0xf]
      %v249 = vld [vmem:[%s166 + $0x12c] sm:$0xf]
      %v250 = vld [vmem:[%s166 + $0x130] sm:$0xf]
      %v251 = vld [vmem:[%s166 + $0x134] sm:$0xf]
      %v252 = vld [vmem:[%s166 + $0x138] sm:$0xf]
      %v253 = vld [vmem:[%s166 + $0x13c] sm:$0xf]
      %v254 = vld [vmem:[%s166 + $0x140] sm:$0xf]
      %v255 = vld [vmem:[%s166 + $0x144] sm:$0xf]
      %v256 = vld [vmem:[%s166 + $0x148] sm:$0xf]
      %v257 = vld [vmem:[%s166 + $0x14c] sm:$0xf]
      %v258 = vld [vmem:[%s166 + $0x150] sm:$0xf]
      %v259 = vld [vmem:[%s166 + $0x154] sm:$0xf]
      %v260 = vld [vmem:[%s166 + $0x158] sm:$0xf]
      %v261 = vld [vmem:[%s166 + $0x15c] sm:$0xf]
      %v262 = vld [vmem:[%s166 + $0x160] sm:$0xf]
      %v263 = vld [vmem:[%s166 + $0x164] sm:$0xf]
      %v264 = vld [vmem:[%s166 + $0x168] sm:$0xf]
      %v265 = vld [vmem:[%s166 + $0x16c] sm:$0xf]
      %v266 = vld [vmem:[%s166 + $0x170] sm:$0xf]
      %v267 = vld [vmem:[%s166 + $0x174] sm:$0xf]
      %v268 = vld [vmem:[%s166 + $0x178] sm:$0xf]
      %v269 = vld [vmem:[%s166 + $0x17c] sm:$0xf]
      %v270 = vld [vmem:[%s166 + $0x180] sm:$0xf]
      %v271 = vld [vmem:[%s166 + $0x184] sm:$0xf]
      %v272 = vld [vmem:[%s166 + $0x188] sm:$0xf]
      %v273 = vld [vmem:[%s166 + $0x18c] sm:$0xf]
      %v274 = vld [vmem:[%s166 + $0x190] sm:$0xf]
      %v275 = vld [vmem:[%s166 + $0x194] sm:$0xf]
      %v276 = vld [vmem:[%s166 + $0x198] sm:$0xf]
      %v277 = vld [vmem:[%s166 + $0x19c] sm:$0xf]
      %v278 = vld [vmem:[%s166 + $0x1a0] sm:$0xf]
      %v279 = vld [vmem:[%s166 + $0x1a4] sm:$0xf]
      %v280 = vld [vmem:[%s166 + $0x1a8] sm:$0xf]
      %v281 = vld [vmem:[%s166 + $0x1ac] sm:$0xf]
      %v282 = vld [vmem:[%s166 + $0x1b0] sm:$0xf]
      %v283 = vld [vmem:[%s166 + $0x1b4] sm:$0xf]
      %v284 = vld [vmem:[%s166 + $0x1b8] sm:$0xf]
      %v285 = vld [vmem:[%s166 + $0x1bc] sm:$0xf]
      %v286 = vld [vmem:[%s166 + $0x1c0] sm:$0xf]
      %v287 = vld [vmem:[%s166 + $0x1c4] sm:$0xf]
      %v288 = vld [vmem:[%s166 + $0x1c8] sm:$0xf]
      %v289 = vld [vmem:[%s166 + $0x1cc] sm:$0xf]
      %v290 = vld [vmem:[%s166 + $0x1d0] sm:$0xf]
      %v291 = vld [vmem:[%s166 + $0x1d4] sm:$0xf]
      %v292 = vld [vmem:[%s166 + $0x1d8] sm:$0xf]
      %v293 = vld [vmem:[%s166 + $0x1dc] sm:$0xf]
      %v294 = vld [vmem:[%s166 + $0x1e0] sm:$0xf]
      %v295 = vld [vmem:[%s166 + $0x1e4] sm:$0xf]
      %v296 = vld [vmem:[%s166 + $0x1e8] sm:$0xf]
      %v297 = vld [vmem:[%s166 + $0x1ec] sm:$0xf]
      %v298 = vld [vmem:[%s166 + $0x1f0] sm:$0xf]
      %v299 = vld [vmem:[%s166 + $0x1f4] sm:$0xf]
      %v300 = vld [vmem:[%s166 + $0x1f8] sm:$0xf]
      %v301 = vld [vmem:[%s166 + $0x1fc] sm:$0xf]
      %v302 = vld [vmem:[%s1] sm:$0xf]
      %v303 = vld [vmem:[%s1 + $0x4] sm:$0xf]
      %v304 = vld [vmem:[%s1 + $0x8] sm:$0xf]
      %v305 = vld [vmem:[%s1 + $0xc] sm:$0xf]
      %v306 = vld [vmem:[%s1 + $0x10] sm:$0xf]
      %v307 = vld [vmem:[%s1 + $0x14] sm:$0xf]
      %v308 = vld [vmem:[%s1 + $0x18] sm:$0xf]
      %v309 = vld [vmem:[%s1 + $0x1c] sm:$0xf]
      %v310 = vld [vmem:[%s1 + $0x20] sm:$0xf]
      %v311 = vld [vmem:[%s1 + $0x24] sm:$0xf]
      %v312 = vld [vmem:[%s1 + $0x28] sm:$0xf]
      %v313 = vld [vmem:[%s1 + $0x2c] sm:$0xf]
      %v314 = vld [vmem:[%s1 + $0x30] sm:$0xf]
      %v315 = vld [vmem:[%s1 + $0x34] sm:$0xf]
      %v316 = vld [vmem:[%s1 + $0x38] sm:$0xf]
      %v317 = vld [vmem:[%s1 + $0x3c] sm:$0xf]
      %v318 = vld [vmem:[%s2] sm:$0x1]
      %v320 = vperm.slane %v318, 0
      %v450 = vunpack.c.l.b16 %v174
      %v451 = vunpack.c.l.b16 %v175
      %v452 = vunpack.c.l.b16 %v176
      %v453 = vunpack.c.l.b16 %v177
      %v454 = vunpack.c.l.b16 %v178
      %v455 = vunpack.c.l.b16 %v179
      %v456 = vunpack.c.l.b16 %v180
      %v457 = vunpack.c.l.b16 %v181
      %v458 = vunpack.c.l.b16 %v182
      %v459 = vunpack.c.l.b16 %v183
      %v460 = vunpack.c.l.b16 %v184
      %v461 = vunpack.c.l.b16 %v185
      %v462 = vunpack.c.l.b16 %v186
      %v463 = vunpack.c.l.b16 %v187
      %v464 = vunpack.c.l.b16 %v188
      %v465 = vunpack.c.l.b16 %v189
      %v466 = vunpack.c.l.b16 %v190
      %v467 = vunpack.c.l.b16 %v191
      %v468 = vunpack.c.l.b16 %v192
      %v469 = vunpack.c.l.b16 %v193
      %v470 = vunpack.c.l.b16 %v194
      %v471 = vunpack.c.l.b16 %v195
      %v472 = vunpack.c.l.b16 %v196
      %v473 = vunpack.c.l.b16 %v197
      %v474 = vunpack.c.l.b16 %v198
      %v475 = vunpack.c.l.b16 %v199
      %v476 = vunpack.c.l.b16 %v200
      %v477 = vunpack.c.l.b16 %v201
      %v478 = vunpack.c.l.b16 %v202
      %v479 = vunpack.c.l.b16 %v203
      %v480 = vunpack.c.l.b16 %v204
      %v481 = vunpack.c.l.b16 %v205
      %v482 = vunpack.c.l.b16 %v206
      %v483 = vunpack.c.l.b16 %v207
      %v484 = vunpack.c.l.b16 %v208
      %v485 = vunpack.c.l.b16 %v209
      %v486 = vunpack.c.l.b16 %v210
      %v487 = vunpack.c.l.b16 %v211
      %v488 = vunpack.c.l.b16 %v212
      %v489 = vunpack.c.l.b16 %v213
      %v490 = vunpack.c.l.b16 %v214
      %v491 = vunpack.c.l.b16 %v215
      %v492 = vunpack.c.l.b16 %v216
      %v493 = vunpack.c.l.b16 %v217
      %v494 = vunpack.c.l.b16 %v218
      %v495 = vunpack.c.l.b16 %v219
      %v496 = vunpack.c.l.b16 %v220
      %v497 = vunpack.c.l.b16 %v221
      %v498 = vunpack.c.l.b16 %v222
      %v499 = vunpack.c.l.b16 %v223
      %v500 = vunpack.c.l.b16 %v224
      %v501 = vunpack.c.l.b16 %v225
      %v502 = vunpack.c.l.b16 %v226
      %v503 = vunpack.c.l.b16 %v227
      %v504 = vunpack.c.l.b16 %v228
      %v505 = vunpack.c.l.b16 %v229
      %v506 = vunpack.c.l.b16 %v230
      %v507 = vunpack.c.l.b16 %v231
      %v508 = vunpack.c.l.b16 %v232
      %v509 = vunpack.c.l.b16 %v233
      %v510 = vunpack.c.l.b16 %v234
      %v511 = vunpack.c.l.b16 %v235
      %v512 = vunpack.c.l.b16 %v236
      %v513 = vunpack.c.l.b16 %v237
      %v514 = vunpack.c.l.b16 %v238
      %v515 = vunpack.c.l.b16 %v239
      %v516 = vunpack.c.l.b16 %v240
      %v517 = vunpack.c.l.b16 %v241
      %v518 = vunpack.c.l.b16 %v242
      %v519 = vunpack.c.l.b16 %v243
      %v520 = vunpack.c.l.b16 %v244
      %v521 = vunpack.c.l.b16 %v245
      %v522 = vunpack.c.l.b16 %v246
      %v523 = vunpack.c.l.b16 %v247
      %v524 = vunpack.c.l.b16 %v248
      %v525 = vunpack.c.l.b16 %v249
      %v526 = vunpack.c.l.b16 %v250
      %v527 = vunpack.c.l.b16 %v251
      %v528 = vunpack.c.l.b16 %v252
      %v529 = vunpack.c.l.b16 %v253
      %v530 = vunpack.c.l.b16 %v254
      %v531 = vunpack.c.l.b16 %v255
      %v532 = vunpack.c.l.b16 %v256
      %v533 = vunpack.c.l.b16 %v257
      %v534 = vunpack.c.l.b16 %v258
      %v535 = vunpack.c.l.b16 %v259
      %v536 = vunpack.c.l.b16 %v260
      %v537 = vunpack.c.l.b16 %v261
      %v538 = vunpack.c.l.b16 %v262
      %v539 = vunpack.c.l.b16 %v263
      %v540 = vunpack.c.l.b16 %v264
      %v541 = vunpack.c.l.b16 %v265
      %v542 = vunpack.c.l.b16 %v266
      %v543 = vunpack.c.l.b16 %v267
      %v544 = vunpack.c.l.b16 %v268
      %v545 = vunpack.c.l.b16 %v269
      %v546 = vunpack.c.l.b16 %v270
      %v547 = vunpack.c.l.b16 %v271
      %v548 = vunpack.c.l.b16 %v272
      %v549 = vunpack.c.l.b16 %v273
      %v550 = vunpack.c.l.b16 %v274
      %v551 = vunpack.c.l.b16 %v275
      %v552 = vunpack.c.l.b16 %v276
      %v553 = vunpack.c.l.b16 %v277
      %v554 = vunpack.c.l.b16 %v278
      %v555 = vunpack.c.l.b16 %v279
      %v556 = vunpack.c.l.b16 %v280
      %v557 = vunpack.c.l.b16 %v281
      %v558 = vunpack.c.l.b16 %v282
      %v559 = vunpack.c.l.b16 %v283
      %v560 = vunpack.c.l.b16 %v284
      %v561 = vunpack.c.l.b16 %v285
      %v562 = vunpack.c.l.b16 %v286
      %v563 = vunpack.c.l.b16 %v287
      %v564 = vunpack.c.l.b16 %v288
      %v565 = vunpack.c.l.b16 %v289
      %v566 = vunpack.c.l.b16 %v290
      %v567 = vunpack.c.l.b16 %v291
      %v568 = vunpack.c.l.b16 %v292
      %v569 = vunpack.c.l.b16 %v293
      %v570 = vunpack.c.l.b16 %v294
      %v571 = vunpack.c.l.b16 %v295
      %v572 = vunpack.c.l.b16 %v296
      %v573 = vunpack.c.l.b16 %v297
      %v574 = vunpack.c.l.b16 %v298
      %v575 = vunpack.c.l.b16 %v299
      %v576 = vunpack.c.l.b16 %v300
      %v577 = vunpack.c.l.b16 %v301
      %v578 = vpack.c.b16 %v451, %v450
      %v579 = vpack.c.b16 %v453, %v452
      %v580 = vpack.c.b16 %v455, %v454
      %v581 = vpack.c.b16 %v457, %v456
      %v582 = vpack.c.b16 %v459, %v458
      %v583 = vpack.c.b16 %v461, %v460
      %v584 = vpack.c.b16 %v463, %v462
      %v585 = vpack.c.b16 %v465, %v464
      %v586 = vpack.c.b16 %v467, %v466
      %v587 = vpack.c.b16 %v469, %v468
      %v588 = vpack.c.b16 %v471, %v470
      %v589 = vpack.c.b16 %v473, %v472
      %v590 = vpack.c.b16 %v475, %v474
      %v591 = vpack.c.b16 %v477, %v476
      %v592 = vpack.c.b16 %v479, %v478
      %v593 = vpack.c.b16 %v481, %v480
      %v594 = vpack.c.b16 %v483, %v482
      %v595 = vpack.c.b16 %v485, %v484
      %v596 = vpack.c.b16 %v487, %v486
      %v597 = vpack.c.b16 %v489, %v488
      %v598 = vpack.c.b16 %v491, %v490
      %v599 = vpack.c.b16 %v493, %v492
      %v600 = vpack.c.b16 %v495, %v494
      %v601 = vpack.c.b16 %v497, %v496
      %v602 = vpack.c.b16 %v499, %v498
      %v603 = vpack.c.b16 %v501, %v500
      %v604 = vpack.c.b16 %v503, %v502
      %v605 = vpack.c.b16 %v505, %v504
      %v606 = vpack.c.b16 %v507, %v506
      %v607 = vpack.c.b16 %v509, %v508
      %v608 = vpack.c.b16 %v511, %v510
      %v609 = vpack.c.b16 %v513, %v512
      %v610 = vpack.c.b16 %v515, %v514
      %v611 = vpack.c.b16 %v517, %v516
      %v612 = vpack.c.b16 %v519, %v518
      %v613 = vpack.c.b16 %v521, %v520
      %v614 = vpack.c.b16 %v523, %v522
      %v615 = vpack.c.b16 %v525, %v524
      %v616 = vpack.c.b16 %v527, %v526
      %v617 = vpack.c.b16 %v529, %v528
      %v618 = vpack.c.b16 %v531, %v530
      %v619 = vpack.c.b16 %v533, %v532
      %v620 = vpack.c.b16 %v535, %v534
      %v621 = vpack.c.b16 %v537, %v536
      %v622 = vpack.c.b16 %v539, %v538
      %v623 = vpack.c.b16 %v541, %v540
      %v624 = vpack.c.b16 %v543, %v542
      %v625 = vpack.c.b16 %v545, %v544
      %v626 = vpack.c.b16 %v547, %v546
      %v627 = vpack.c.b16 %v549, %v548
      %v628 = vpack.c.b16 %v551, %v550
      %v629 = vpack.c.b16 %v553, %v552
      %v630 = vpack.c.b16 %v555, %v554
      %v631 = vpack.c.b16 %v557, %v556
      %v632 = vpack.c.b16 %v559, %v558
      %v633 = vpack.c.b16 %v561, %v560
      %v634 = vpack.c.b16 %v563, %v562
      %v635 = vpack.c.b16 %v565, %v564
      %v636 = vpack.c.b16 %v567, %v566
      %v637 = vpack.c.b16 %v569, %v568
      %v638 = vpack.c.b16 %v571, %v570
      %v639 = vpack.c.b16 %v573, %v572
      %v640 = vpack.c.b16 %v575, %v574
      %v641 = vpack.c.b16 %v577, %v576
      %v722 = vunpack.c.l.b16 %v302
      %v723 = vunpack.c.l.b16 %v303
      %v724 = vunpack.c.l.b16 %v304
      %v725 = vunpack.c.l.b16 %v305
      %v726 = vunpack.c.l.b16 %v306
      %v727 = vunpack.c.l.b16 %v307
      %v728 = vunpack.c.l.b16 %v308
      %v729 = vunpack.c.l.b16 %v309
      %v730 = vunpack.c.l.b16 %v310
      %v731 = vunpack.c.l.b16 %v311
      %v732 = vunpack.c.l.b16 %v312
      %v733 = vunpack.c.l.b16 %v313
      %v734 = vunpack.c.l.b16 %v314
      %v735 = vunpack.c.l.b16 %v315
      %v736 = vunpack.c.l.b16 %v316
      %v737 = vunpack.c.l.b16 %v317
      %v738 = vpack.c.b16 %v723, %v722
      %v739 = vpack.c.b16 %v725, %v724
      %v740 = vpack.c.b16 %v727, %v726
      %v741 = vpack.c.b16 %v729, %v728
      %v742 = vpack.c.b16 %v731, %v730
      %v743 = vpack.c.b16 %v733, %v732
      %v744 = vpack.c.b16 %v735, %v734
      %v745 = vpack.c.b16 %v737, %v736
      %754 = vmatpush.bf16.msra.mxu0 %v745
      %755 = vmatpush.bf16.msra.mxu0 %v744
      %756 = vmatpush.bf16.msra.mxu0 %v743
      %757 = vmatpush.bf16.msra.mxu0 %v742
      %758 = vmatpush.bf16.msra.mxu0 %v741
      %759 = vmatpush.bf16.msra.mxu0 %v740
      %760 = vmatpush.bf16.msra.mxu0 %v739
      %761 = vmatpush.bf16.msra.mxu0 %v738
      %762 = vmatmul.bf16.gmra.mxu0 %v578
      %v763 = vpop.f32.mrf.mxu0
      %v764 = vadd.f32 %v320, %v763
      %v765 = vpop.f32.mrf.mxu0
      %v766 = vadd.f32 %v320, %v765
      %767 = vmatmul.bf16.gmra.mxu0 %v579
      %v768 = vpop.f32.mrf.mxu0
      %v769 = vadd.f32 %v320, %v768
      %v770 = vpop.f32.mrf.mxu0
      %v771 = vadd.f32 %v320, %v770
      %772 = vmatmul.bf16.gmra.mxu0 %v580
      %v773 = vpop.f32.mrf.mxu0
      %v774 = vadd.f32 %v320, %v773
      %v775 = vpop.f32.mrf.mxu0
      %v776 = vadd.f32 %v320, %v775
      %777 = vmatmul.bf16.gmra.mxu0 %v581
      %v778 = vpop.f32.mrf.mxu0
      %v779 = vadd.f32 %v320, %v778
      %v780 = vpop.f32.mrf.mxu0
      %v781 = vadd.f32 %v320, %v780
      %782 = vmatmul.bf16.gmra.mxu0 %v582
      %v783 = vpop.f32.mrf.mxu0
      %v784 = vadd.f32 %v320, %v783
      %v785 = vpop.f32.mrf.mxu0
      %v786 = vadd.f32 %v320, %v785
      %787 = vmatmul.bf16.gmra.mxu0 %v583
      %v788 = vpop.f32.mrf.mxu0
      %v789 = vadd.f32 %v320, %v788
      %v790 = vpop.f32.mrf.mxu0
      %v791 = vadd.f32 %v320, %v790
      %792 = vmatmul.bf16.gmra.mxu0 %v584
      %v793 = vpop.f32.mrf.mxu0
      %v794 = vadd.f32 %v320, %v793
      %v795 = vpop.f32.mrf.mxu0
      %v796 = vadd.f32 %v320, %v795
      %797 = vmatmul.bf16.gmra.mxu0 %v585
      %v798 = vpop.f32.mrf.mxu0
      %v799 = vadd.f32 %v320, %v798
      %v800 = vpop.f32.mrf.mxu0
      %v801 = vadd.f32 %v320, %v800
      %802 = vmatmul.bf16.gmra.mxu0 %v586
      %v803 = vpop.f32.mrf.mxu0
      %v804 = vadd.f32 %v320, %v803
      %v805 = vpop.f32.mrf.mxu0
      %v806 = vadd.f32 %v320, %v805
      %807 = vmatmul.bf16.gmra.mxu0 %v587
      %v808 = vpop.f32.mrf.mxu0
      %v809 = vadd.f32 %v320, %v808
      %v810 = vpop.f32.mrf.mxu0
      %v811 = vadd.f32 %v320, %v810
      %812 = vmatmul.bf16.gmra.mxu0 %v588
      %v813 = vpop.f32.mrf.mxu0
      %v814 = vadd.f32 %v320, %v813
      %v815 = vpop.f32.mrf.mxu0
      %v816 = vadd.f32 %v320, %v815
      %817 = vmatmul.bf16.gmra.mxu0 %v589
      %v818 = vpop.f32.mrf.mxu0
      %v819 = vadd.f32 %v320, %v818
      %v820 = vpop.f32.mrf.mxu0
      %v821 = vadd.f32 %v320, %v820
      %822 = vmatmul.bf16.gmra.mxu0 %v590
      %v823 = vpop.f32.mrf.mxu0
      %v824 = vadd.f32 %v320, %v823
      %v825 = vpop.f32.mrf.mxu0
      %v826 = vadd.f32 %v320, %v825
      %827 = vmatmul.bf16.gmra.mxu0 %v591
      %v828 = vpop.f32.mrf.mxu0
      %v829 = vadd.f32 %v320, %v828
      %v830 = vpop.f32.mrf.mxu0
      %v831 = vadd.f32 %v320, %v830
      %832 = vmatmul.bf16.gmra.mxu0 %v592
      %v833 = vpop.f32.mrf.mxu0
      %v834 = vadd.f32 %v320, %v833
      %v835 = vpop.f32.mrf.mxu0
      %v836 = vadd.f32 %v320, %v835
      %837 = vmatmul.bf16.gmra.mxu0 %v593
      %v838 = vpop.f32.mrf.mxu0
      %v839 = vadd.f32 %v320, %v838
      %v840 = vpop.f32.mrf.mxu0
      %v841 = vadd.f32 %v320, %v840
      %842 = vmatmul.bf16.gmra.mxu0 %v594
      %v843 = vpop.f32.mrf.mxu0
      %v844 = vadd.f32 %v320, %v843
      %v845 = vpop.f32.mrf.mxu0
      %v846 = vadd.f32 %v320, %v845
      %847 = vmatmul.bf16.gmra.mxu0 %v595
      %v848 = vpop.f32.mrf.mxu0
      %v849 = vadd.f32 %v320, %v848
      %v850 = vpop.f32.mrf.mxu0
      %v851 = vadd.f32 %v320, %v850
      %852 = vmatmul.bf16.gmra.mxu0 %v596
      %v853 = vpop.f32.mrf.mxu0
      %v854 = vadd.f32 %v320, %v853
      %v855 = vpop.f32.mrf.mxu0
      %v856 = vadd.f32 %v320, %v855
      %857 = vmatmul.bf16.gmra.mxu0 %v597
      %v858 = vpop.f32.mrf.mxu0
      %v859 = vadd.f32 %v320, %v858
      %v860 = vpop.f32.mrf.mxu0
      %v861 = vadd.f32 %v320, %v860
      %862 = vmatmul.bf16.gmra.mxu0 %v598
      %v863 = vpop.f32.mrf.mxu0
      %v864 = vadd.f32 %v320, %v863
      %v865 = vpop.f32.mrf.mxu0
      %v866 = vadd.f32 %v320, %v865
      %867 = vmatmul.bf16.gmra.mxu0 %v599
      %v868 = vpop.f32.mrf.mxu0
      %v869 = vadd.f32 %v320, %v868
      %v870 = vpop.f32.mrf.mxu0
      %v871 = vadd.f32 %v320, %v870
      %872 = vmatmul.bf16.gmra.mxu0 %v600
      %v873 = vpop.f32.mrf.mxu0
      %v874 = vadd.f32 %v320, %v873
      %v875 = vpop.f32.mrf.mxu0
      %v876 = vadd.f32 %v320, %v875
      %877 = vmatmul.bf16.gmra.mxu0 %v601
      %v878 = vpop.f32.mrf.mxu0
      %v879 = vadd.f32 %v320, %v878
      %v880 = vpop.f32.mrf.mxu0
      %v881 = vadd.f32 %v320, %v880
      %882 = vmatmul.bf16.gmra.mxu0 %v602
      %v883 = vpop.f32.mrf.mxu0
      %v884 = vadd.f32 %v320, %v883
      %v885 = vpop.f32.mrf.mxu0
      %v886 = vadd.f32 %v320, %v885
      %887 = vmatmul.bf16.gmra.mxu0 %v603
      %v888 = vpop.f32.mrf.mxu0
      %v889 = vadd.f32 %v320, %v888
      %v890 = vpop.f32.mrf.mxu0
      %v891 = vadd.f32 %v320, %v890
      %892 = vmatmul.bf16.gmra.mxu0 %v604
      %v893 = vpop.f32.mrf.mxu0
      %v894 = vadd.f32 %v320, %v893
      %v895 = vpop.f32.mrf.mxu0
      %v896 = vadd.f32 %v320, %v895
      %897 = vmatmul.bf16.gmra.mxu0 %v605
      %v898 = vpop.f32.mrf.mxu0
      %v899 = vadd.f32 %v320, %v898
      %v900 = vpop.f32.mrf.mxu0
      %v901 = vadd.f32 %v320, %v900
      %902 = vmatmul.bf16.gmra.mxu0 %v606
      %v903 = vpop.f32.mrf.mxu0
      %v904 = vadd.f32 %v320, %v903
      %v905 = vpop.f32.mrf.mxu0
      %v906 = vadd.f32 %v320, %v905
      %907 = vmatmul.bf16.gmra.mxu0 %v607
      %v908 = vpop.f32.mrf.mxu0
      %v909 = vadd.f32 %v320, %v908
      %v910 = vpop.f32.mrf.mxu0
      %v911 = vadd.f32 %v320, %v910
      %912 = vmatmul.bf16.gmra.mxu0 %v608
      %v913 = vpop.f32.mrf.mxu0
      %v914 = vadd.f32 %v320, %v913
      %v915 = vpop.f32.mrf.mxu0
      %v916 = vadd.f32 %v320, %v915
      %917 = vmatmul.bf16.gmra.mxu0 %v609
      %v918 = vpop.f32.mrf.mxu0
      %v919 = vadd.f32 %v320, %v918
      %v920 = vpop.f32.mrf.mxu0
      %v921 = vadd.f32 %v320, %v920
      %922 = vmatmul.bf16.gmra.mxu0 %v610
      %v923 = vpop.f32.mrf.mxu0
      %v924 = vadd.f32 %v320, %v923
      %v925 = vpop.f32.mrf.mxu0
      %v926 = vadd.f32 %v320, %v925
      %927 = vmatmul.bf16.gmra.mxu0 %v611
      %v928 = vpop.f32.mrf.mxu0
      %v929 = vadd.f32 %v320, %v928
      %v930 = vpop.f32.mrf.mxu0
      %v931 = vadd.f32 %v320, %v930
      %932 = vmatmul.bf16.gmra.mxu0 %v612
      %v933 = vpop.f32.mrf.mxu0
      %v934 = vadd.f32 %v320, %v933
      %v935 = vpop.f32.mrf.mxu0
      %v936 = vadd.f32 %v320, %v935
      %937 = vmatmul.bf16.gmra.mxu0 %v613
      %v938 = vpop.f32.mrf.mxu0
      %v939 = vadd.f32 %v320, %v938
      %v940 = vpop.f32.mrf.mxu0
      %v941 = vadd.f32 %v320, %v940
      %942 = vmatmul.bf16.gmra.mxu0 %v614
      %v943 = vpop.f32.mrf.mxu0
      %v944 = vadd.f32 %v320, %v943
      %v945 = vpop.f32.mrf.mxu0
      %v946 = vadd.f32 %v320, %v945
      %947 = vmatmul.bf16.gmra.mxu0 %v615
      %v948 = vpop.f32.mrf.mxu0
      %v949 = vadd.f32 %v320, %v948
      %v950 = vpop.f32.mrf.mxu0
      %v951 = vadd.f32 %v320, %v950
      %952 = vmatmul.bf16.gmra.mxu0 %v616
      %v953 = vpop.f32.mrf.mxu0
      %v954 = vadd.f32 %v320, %v953
      %v955 = vpop.f32.mrf.mxu0
      %v956 = vadd.f32 %v320, %v955
      %957 = vmatmul.bf16.gmra.mxu0 %v617
      %v958 = vpop.f32.mrf.mxu0
      %v959 = vadd.f32 %v320, %v958
      %v960 = vpop.f32.mrf.mxu0
      %v961 = vadd.f32 %v320, %v960
      %962 = vmatmul.bf16.gmra.mxu0 %v618
      %v963 = vpop.f32.mrf.mxu0
      %v964 = vadd.f32 %v320, %v963
      %v965 = vpop.f32.mrf.mxu0
      %v966 = vadd.f32 %v320, %v965
      %967 = vmatmul.bf16.gmra.mxu0 %v619
      %v968 = vpop.f32.mrf.mxu0
      %v969 = vadd.f32 %v320, %v968
      %v970 = vpop.f32.mrf.mxu0
      %v971 = vadd.f32 %v320, %v970
      %972 = vmatmul.bf16.gmra.mxu0 %v620
      %v973 = vpop.f32.mrf.mxu0
      %v974 = vadd.f32 %v320, %v973
      %v975 = vpop.f32.mrf.mxu0
      %v976 = vadd.f32 %v320, %v975
      %977 = vmatmul.bf16.gmra.mxu0 %v621
      %v978 = vpop.f32.mrf.mxu0
      %v979 = vadd.f32 %v320, %v978
      %v980 = vpop.f32.mrf.mxu0
      %v981 = vadd.f32 %v320, %v980
      %982 = vmatmul.bf16.gmra.mxu0 %v622
      %v983 = vpop.f32.mrf.mxu0
      %v984 = vadd.f32 %v320, %v983
      %v985 = vpop.f32.mrf.mxu0
      %v986 = vadd.f32 %v320, %v985
      %987 = vmatmul.bf16.gmra.mxu0 %v623
      %v988 = vpop.f32.mrf.mxu0
      %v989 = vadd.f32 %v320, %v988
      %v990 = vpop.f32.mrf.mxu0
      %v991 = vadd.f32 %v320, %v990
      %992 = vmatmul.bf16.gmra.mxu0 %v624
      %v993 = vpop.f32.mrf.mxu0
      %v994 = vadd.f32 %v320, %v993
      %v995 = vpop.f32.mrf.mxu0
      %v996 = vadd.f32 %v320, %v995
      %997 = vmatmul.bf16.gmra.mxu0 %v625
      %v998 = vpop.f32.mrf.mxu0
      %v999 = vadd.f32 %v320, %v998
      %v1000 = vpop.f32.mrf.mxu0
      %v1001 = vadd.f32 %v320, %v1000
      %1002 = vmatmul.bf16.gmra.mxu0 %v626
      %v1003 = vpop.f32.mrf.mxu0
      %v1004 = vadd.f32 %v320, %v1003
      %v1005 = vpop.f32.mrf.mxu0
      %v1006 = vadd.f32 %v320, %v1005
      %1007 = vmatmul.bf16.gmra.mxu0 %v627
      %v1008 = vpop.f32.mrf.mxu0
      %v1009 = vadd.f32 %v320, %v1008
      %v1010 = vpop.f32.mrf.mxu0
      %v1011 = vadd.f32 %v320, %v1010
      %1012 = vmatmul.bf16.gmra.mxu0 %v628
      %v1013 = vpop.f32.mrf.mxu0
      %v1014 = vadd.f32 %v320, %v1013
      %v1015 = vpop.f32.mrf.mxu0
      %v1016 = vadd.f32 %v320, %v1015
      %1017 = vmatmul.bf16.gmra.mxu0 %v629
      %v1018 = vpop.f32.mrf.mxu0
      %v1019 = vadd.f32 %v320, %v1018
      %v1020 = vpop.f32.mrf.mxu0
      %v1021 = vadd.f32 %v320, %v1020
      %1022 = vmatmul.bf16.gmra.mxu0 %v630
      %v1023 = vpop.f32.mrf.mxu0
      %v1024 = vadd.f32 %v320, %v1023
      %v1025 = vpop.f32.mrf.mxu0
      %v1026 = vadd.f32 %v320, %v1025
      %1027 = vmatmul.bf16.gmra.mxu0 %v631
      %v1028 = vpop.f32.mrf.mxu0
      %v1029 = vadd.f32 %v320, %v1028
      %v1030 = vpop.f32.mrf.mxu0
      %v1031 = vadd.f32 %v320, %v1030
      %1032 = vmatmul.bf16.gmra.mxu0 %v632
      %v1033 = vpop.f32.mrf.mxu0
      %v1034 = vadd.f32 %v320, %v1033
      %v1035 = vpop.f32.mrf.mxu0
      %v1036 = vadd.f32 %v320, %v1035
      %1037 = vmatmul.bf16.gmra.mxu0 %v633
      %v1038 = vpop.f32.mrf.mxu0
      %v1039 = vadd.f32 %v320, %v1038
      %v1040 = vpop.f32.mrf.mxu0
      %v1041 = vadd.f32 %v320, %v1040
      %1042 = vmatmul.bf16.gmra.mxu0 %v634
      %v1043 = vpop.f32.mrf.mxu0
      %v1044 = vadd.f32 %v320, %v1043
      %v1045 = vpop.f32.mrf.mxu0
      %v1046 = vadd.f32 %v320, %v1045
      %1047 = vmatmul.bf16.gmra.mxu0 %v635
      %v1048 = vpop.f32.mrf.mxu0
      %v1049 = vadd.f32 %v320, %v1048
      %v1050 = vpop.f32.mrf.mxu0
      %v1051 = vadd.f32 %v320, %v1050
      %1052 = vmatmul.bf16.gmra.mxu0 %v636
      %v1053 = vpop.f32.mrf.mxu0
      %v1054 = vadd.f32 %v320, %v1053
      %v1055 = vpop.f32.mrf.mxu0
      %v1056 = vadd.f32 %v320, %v1055
      %1057 = vmatmul.bf16.gmra.mxu0 %v637
      %v1058 = vpop.f32.mrf.mxu0
      %v1059 = vadd.f32 %v320, %v1058
      %v1060 = vpop.f32.mrf.mxu0
      %v1061 = vadd.f32 %v320, %v1060
      %1062 = vmatmul.bf16.gmra.mxu0 %v638
      %v1063 = vpop.f32.mrf.mxu0
      %v1064 = vadd.f32 %v320, %v1063
      %v1065 = vpop.f32.mrf.mxu0
      %v1066 = vadd.f32 %v320, %v1065
      %1067 = vmatmul.bf16.gmra.mxu0 %v639
      %v1068 = vpop.f32.mrf.mxu0
      %v1069 = vadd.f32 %v320, %v1068
      %v1070 = vpop.f32.mrf.mxu0
      %v1071 = vadd.f32 %v320, %v1070
      %1072 = vmatmul.bf16.gmra.mxu0 %v640
      %v1073 = vpop.f32.mrf.mxu0
      %v1074 = vadd.f32 %v320, %v1073
      %v1075 = vpop.f32.mrf.mxu0
      %v1076 = vadd.f32 %v320, %v1075
      %1077 = vmatmul.bf16.gmra.mxu0 %v641
      %v1078 = vpop.f32.mrf.mxu0
      %v1079 = vadd.f32 %v320, %v1078
      %v1080 = vpop.f32.mrf.mxu0
      %v1081 = vadd.f32 %v320, %v1080
      %1082 = vdwg.mxu0
      %v1083 = vmax.f32 %v764, 0.0
      %v1084 = vmax.f32 %v766, 0.0
      %v1085 = vmax.f32 %v769, 0.0
      %v1086 = vmax.f32 %v771, 0.0
      %v1087 = vmax.f32 %v774, 0.0
      %v1088 = vmax.f32 %v776, 0.0
      %v1089 = vmax.f32 %v779, 0.0
      %v1090 = vmax.f32 %v781, 0.0
      %v1091 = vmax.f32 %v784, 0.0
      %v1092 = vmax.f32 %v786, 0.0
      %v1093 = vmax.f32 %v789, 0.0
      %v1094 = vmax.f32 %v791, 0.0
      %v1095 = vmax.f32 %v794, 0.0
      %v1096 = vmax.f32 %v796, 0.0
      %v1097 = vmax.f32 %v799, 0.0
      %v1098 = vmax.f32 %v801, 0.0
      %v1099 = vmax.f32 %v804, 0.0
      %v1100 = vmax.f32 %v806, 0.0
      %v1101 = vmax.f32 %v809, 0.0
      %v1102 = vmax.f32 %v811, 0.0
      %v1103 = vmax.f32 %v814, 0.0
      %v1104 = vmax.f32 %v816, 0.0
      %v1105 = vmax.f32 %v819, 0.0
      %v1106 = vmax.f32 %v821, 0.0
      %v1107 = vmax.f32 %v824, 0.0
      %v1108 = vmax.f32 %v826, 0.0
      %v1109 = vmax.f32 %v829, 0.0
      %v1110 = vmax.f32 %v831, 0.0
      %v1111 = vmax.f32 %v834, 0.0
      %v1112 = vmax.f32 %v836, 0.0
      %v1113 = vmax.f32 %v839, 0.0
      %v1114 = vmax.f32 %v841, 0.0
      %v1115 = vmax.f32 %v844, 0.0
      %v1116 = vmax.f32 %v846, 0.0
      %v1117 = vmax.f32 %v849, 0.0
      %v1118 = vmax.f32 %v851, 0.0
      %v1119 = vmax.f32 %v854, 0.0
      %v1120 = vmax.f32 %v856, 0.0
      %v1121 = vmax.f32 %v859, 0.0
      %v1122 = vmax.f32 %v861, 0.0
      %v1123 = vmax.f32 %v864, 0.0
      %v1124 = vmax.f32 %v866, 0.0
      %v1125 = vmax.f32 %v869, 0.0
      %v1126 = vmax.f32 %v871, 0.0
      %v1127 = vmax.f32 %v874, 0.0
      %v1128 = vmax.f32 %v876, 0.0
      %v1129 = vmax.f32 %v879, 0.0
      %v1130 = vmax.f32 %v881, 0.0
      %v1131 = vmax.f32 %v884, 0.0
      %v1132 = vmax.f32 %v886, 0.0
      %v1133 = vmax.f32 %v889, 0.0
      %v1134 = vmax.f32 %v891, 0.0
      %v1135 = vmax.f32 %v894, 0.0
      %v1136 = vmax.f32 %v896, 0.0
      %v1137 = vmax.f32 %v899, 0.0
      %v1138 = vmax.f32 %v901, 0.0
      %v1139 = vmax.f32 %v904, 0.0
      %v1140 = vmax.f32 %v906, 0.0
      %v1141 = vmax.f32 %v909, 0.0
      %v1142 = vmax.f32 %v911, 0.0
      %v1143 = vmax.f32 %v914, 0.0
      %v1144 = vmax.f32 %v916, 0.0
      %v1145 = vmax.f32 %v919, 0.0
      %v1146 = vmax.f32 %v921, 0.0
      %v1147 = vmax.f32 %v924, 0.0
      %v1148 = vmax.f32 %v926, 0.0
      %v1149 = vmax.f32 %v929, 0.0
      %v1150 = vmax.f32 %v931, 0.0
      %v1151 = vmax.f32 %v934, 0.0
      %v1152 = vmax.f32 %v936, 0.0
      %v1153 = vmax.f32 %v939, 0.0
      %v1154 = vmax.f32 %v941, 0.0
      %v1155 = vmax.f32 %v944, 0.0
      %v1156 = vmax.f32 %v946, 0.0
      %v1157 = vmax.f32 %v949, 0.0
      %v1158 = vmax.f32 %v951, 0.0
      %v1159 = vmax.f32 %v954, 0.0
      %v1160 = vmax.f32 %v956, 0.0
      %v1161 = vmax.f32 %v959, 0.0
      %v1162 = vmax.f32 %v961, 0.0
      %v1163 = vmax.f32 %v964, 0.0
      %v1164 = vmax.f32 %v966, 0.0
      %v1165 = vmax.f32 %v969, 0.0
      %v1166 = vmax.f32 %v971, 0.0
      %v1167 = vmax.f32 %v974, 0.0
      %v1168 = vmax.f32 %v976, 0.0
      %v1169 = vmax.f32 %v979, 0.0
      %v1170 = vmax.f32 %v981, 0.0
      %v1171 = vmax.f32 %v984, 0.0
      %v1172 = vmax.f32 %v986, 0.0
      %v1173 = vmax.f32 %v989, 0.0
      %v1174 = vmax.f32 %v991, 0.0
      %v1175 = vmax.f32 %v994, 0.0
      %v1176 = vmax.f32 %v996, 0.0
      %v1177 = vmax.f32 %v999, 0.0
      %v1178 = vmax.f32 %v1001, 0.0
      %v1179 = vmax.f32 %v1004, 0.0
      %v1180 = vmax.f32 %v1006, 0.0
      %v1181 = vmax.f32 %v1009, 0.0
      %v1182 = vmax.f32 %v1011, 0.0
      %v1183 = vmax.f32 %v1014, 0.0
      %v1184 = vmax.f32 %v1016, 0.0
      %v1185 = vmax.f32 %v1019, 0.0
      %v1186 = vmax.f32 %v1021, 0.0
      %v1187 = vmax.f32 %v1024, 0.0
      %v1188 = vmax.f32 %v1026, 0.0
      %v1189 = vmax.f32 %v1029, 0.0
      %v1190 = vmax.f32 %v1031, 0.0
      %v1191 = vmax.f32 %v1034, 0.0
      %v1192 = vmax.f32 %v1036, 0.0
      %v1193 = vmax.f32 %v1039, 0.0
      %v1194 = vmax.f32 %v1041, 0.0
      %v1195 = vmax.f32 %v1044, 0.0
      %v1196 = vmax.f32 %v1046, 0.0
      %v1197 = vmax.f32 %v1049, 0.0
      %v1198 = vmax.f32 %v1051, 0.0
      %v1199 = vmax.f32 %v1054, 0.0
      %v1200 = vmax.f32 %v1056, 0.0
      %v1201 = vmax.f32 %v1059, 0.0
      %v1202 = vmax.f32 %v1061, 0.0
      %v1203 = vmax.f32 %v1064, 0.0
      %v1204 = vmax.f32 %v1066, 0.0
      %v1205 = vmax.f32 %v1069, 0.0
      %v1206 = vmax.f32 %v1071, 0.0
      %v1207 = vmax.f32 %v1074, 0.0
      %v1208 = vmax.f32 %v1076, 0.0
      %v1209 = vmax.f32 %v1079, 0.0
      %v1210 = vmax.f32 %v1081, 0.0
      %v1211 = vpack.c.bf16 %v1083, %v1083
      %v1212 = vpack.c.bf16 %v1084, %v1084
      %v1213 = vpack.c.bf16 %v1085, %v1085
      %v1214 = vpack.c.bf16 %v1086, %v1086
      %v1215 = vpack.c.bf16 %v1087, %v1087
      %v1216 = vpack.c.bf16 %v1088, %v1088
      %v1217 = vpack.c.bf16 %v1089, %v1089
      %v1218 = vpack.c.bf16 %v1090, %v1090
      %v1219 = vpack.c.bf16 %v1091, %v1091
      %v1220 = vpack.c.bf16 %v1092, %v1092
      %v1221 = vpack.c.bf16 %v1093, %v1093
      %v1222 = vpack.c.bf16 %v1094, %v1094
      %v1223 = vpack.c.bf16 %v1095, %v1095
      %v1224 = vpack.c.bf16 %v1096, %v1096
      %v1225 = vpack.c.bf16 %v1097, %v1097
      %v1226 = vpack.c.bf16 %v1098, %v1098
      %v1227 = vpack.c.bf16 %v1099, %v1099
      %v1228 = vpack.c.bf16 %v1100, %v1100
      %v1229 = vpack.c.bf16 %v1101, %v1101
      %v1230 = vpack.c.bf16 %v1102, %v1102
      %v1231 = vpack.c.bf16 %v1103, %v1103
      %v1232 = vpack.c.bf16 %v1104, %v1104
      %v1233 = vpack.c.bf16 %v1105, %v1105
      %v1234 = vpack.c.bf16 %v1106, %v1106
      %v1235 = vpack.c.bf16 %v1107, %v1107
      %v1236 = vpack.c.bf16 %v1108, %v1108
      %v1237 = vpack.c.bf16 %v1109, %v1109
      %v1238 = vpack.c.bf16 %v1110, %v1110
      %v1239 = vpack.c.bf16 %v1111, %v1111
      %v1240 = vpack.c.bf16 %v1112, %v1112
      %v1241 = vpack.c.bf16 %v1113, %v1113
      %v1242 = vpack.c.bf16 %v1114, %v1114
      %v1243 = vpack.c.bf16 %v1115, %v1115
      %v1244 = vpack.c.bf16 %v1116, %v1116
      %v1245 = vpack.c.bf16 %v1117, %v1117
      %v1246 = vpack.c.bf16 %v1118, %v1118
      %v1247 = vpack.c.bf16 %v1119, %v1119
      %v1248 = vpack.c.bf16 %v1120, %v1120
      %v1249 = vpack.c.bf16 %v1121, %v1121
      %v1250 = vpack.c.bf16 %v1122, %v1122
      %v1251 = vpack.c.bf16 %v1123, %v1123
      %v1252 = vpack.c.bf16 %v1124, %v1124
      %v1253 = vpack.c.bf16 %v1125, %v1125
      %v1254 = vpack.c.bf16 %v1126, %v1126
      %v1255 = vpack.c.bf16 %v1127, %v1127
      %v1256 = vpack.c.bf16 %v1128, %v1128
      %v1257 = vpack.c.bf16 %v1129, %v1129
      %v1258 = vpack.c.bf16 %v1130, %v1130
      %v1259 = vpack.c.bf16 %v1131, %v1131
      %v1260 = vpack.c.bf16 %v1132, %v1132
      %v1261 = vpack.c.bf16 %v1133, %v1133
      %v1262 = vpack.c.bf16 %v1134, %v1134
      %v1263 = vpack.c.bf16 %v1135, %v1135
      %v1264 = vpack.c.bf16 %v1136, %v1136
      %v1265 = vpack.c.bf16 %v1137, %v1137
      %v1266 = vpack.c.bf16 %v1138, %v1138
      %v1267 = vpack.c.bf16 %v1139, %v1139
      %v1268 = vpack.c.bf16 %v1140, %v1140
      %v1269 = vpack.c.bf16 %v1141, %v1141
      %v1270 = vpack.c.bf16 %v1142, %v1142
      %v1271 = vpack.c.bf16 %v1143, %v1143
      %v1272 = vpack.c.bf16 %v1144, %v1144
      %v1273 = vpack.c.bf16 %v1145, %v1145
      %v1274 = vpack.c.bf16 %v1146, %v1146
      %v1275 = vpack.c.bf16 %v1147, %v1147
      %v1276 = vpack.c.bf16 %v1148, %v1148
      %v1277 = vpack.c.bf16 %v1149, %v1149
      %v1278 = vpack.c.bf16 %v1150, %v1150
      %v1279 = vpack.c.bf16 %v1151, %v1151
      %v1280 = vpack.c.bf16 %v1152, %v1152
      %v1281 = vpack.c.bf16 %v1153, %v1153
      %v1282 = vpack.c.bf16 %v1154, %v1154
      %v1283 = vpack.c.bf16 %v1155, %v1155
      %v1284 = vpack.c.bf16 %v1156, %v1156
      %v1285 = vpack.c.bf16 %v1157, %v1157
      %v1286 = vpack.c.bf16 %v1158, %v1158
      %v1287 = vpack.c.bf16 %v1159, %v1159
      %v1288 = vpack.c.bf16 %v1160, %v1160
      %v1289 = vpack.c.bf16 %v1161, %v1161
      %v1290 = vpack.c.bf16 %v1162, %v1162
      %v1291 = vpack.c.bf16 %v1163, %v1163
      %v1292 = vpack.c.bf16 %v1164, %v1164
      %v1293 = vpack.c.bf16 %v1165, %v1165
      %v1294 = vpack.c.bf16 %v1166, %v1166
      %v1295 = vpack.c.bf16 %v1167, %v1167
      %v1296 = vpack.c.bf16 %v1168, %v1168
      %v1297 = vpack.c.bf16 %v1169, %v1169
      %v1298 = vpack.c.bf16 %v1170, %v1170
      %v1299 = vpack.c.bf16 %v1171, %v1171
      %v1300 = vpack.c.bf16 %v1172, %v1172
      %v1301 = vpack.c.bf16 %v1173, %v1173
      %v1302 = vpack.c.bf16 %v1174, %v1174
      %v1303 = vpack.c.bf16 %v1175, %v1175
      %v1304 = vpack.c.bf16 %v1176, %v1176
      %v1305 = vpack.c.bf16 %v1177, %v1177
      %v1306 = vpack.c.bf16 %v1178, %v1178
      %v1307 = vpack.c.bf16 %v1179, %v1179
      %v1308 = vpack.c.bf16 %v1180, %v1180
      %v1309 = vpack.c.bf16 %v1181, %v1181
      %v1310 = vpack.c.bf16 %v1182, %v1182
      %v1311 = vpack.c.bf16 %v1183, %v1183
      %v1312 = vpack.c.bf16 %v1184, %v1184
      %v1313 = vpack.c.bf16 %v1185, %v1185
      %v1314 = vpack.c.bf16 %v1186, %v1186
      %v1315 = vpack.c.bf16 %v1187, %v1187
      %v1316 = vpack.c.bf16 %v1188, %v1188
      %v1317 = vpack.c.bf16 %v1189, %v1189
      %v1318 = vpack.c.bf16 %v1190, %v1190
      %v1319 = vpack.c.bf16 %v1191, %v1191
      %v1320 = vpack.c.bf16 %v1192, %v1192
      %v1321 = vpack.c.bf16 %v1193, %v1193
      %v1322 = vpack.c.bf16 %v1194, %v1194
      %v1323 = vpack.c.bf16 %v1195, %v1195
      %v1324 = vpack.c.bf16 %v1196, %v1196
      %v1325 = vpack.c.bf16 %v1197, %v1197
      %v1326 = vpack.c.bf16 %v1198, %v1198
      %v1327 = vpack.c.bf16 %v1199, %v1199
      %v1328 = vpack.c.bf16 %v1200, %v1200
      %v1329 = vpack.c.bf16 %v1201, %v1201
      %v1330 = vpack.c.bf16 %v1202, %v1202
      %v1331 = vpack.c.bf16 %v1203, %v1203
      %v1332 = vpack.c.bf16 %v1204, %v1204
      %v1333 = vpack.c.bf16 %v1205, %v1205
      %v1334 = vpack.c.bf16 %v1206, %v1206
      %v1335 = vpack.c.bf16 %v1207, %v1207
      %v1336 = vpack.c.bf16 %v1208, %v1208
      %v1337 = vpack.c.bf16 %v1209, %v1209
      %v1338 = vpack.c.bf16 %v1210, %v1210
      %1339 = vst [vmem:[%s172] sm:$0xf] %v1211
      %1340 = vst [vmem:[%s172 + $0x4] sm:$0xf] %v1212
      %1341 = vst [vmem:[%s172 + $0x8] sm:$0xf] %v1213
      %1342 = vst [vmem:[%s172 + $0xc] sm:$0xf] %v1214
      %1343 = vst [vmem:[%s172 + $0x10] sm:$0xf] %v1215
      %1344 = vst [vmem:[%s172 + $0x14] sm:$0xf] %v1216
      %1345 = vst [vmem:[%s172 + $0x18] sm:$0xf] %v1217
      %1346 = vst [vmem:[%s172 + $0x1c] sm:$0xf] %v1218
      %1347 = vst [vmem:[%s172 + $0x20] sm:$0xf] %v1219
      %1348 = vst [vmem:[%s172 + $0x24] sm:$0xf] %v1220
      %1349 = vst [vmem:[%s172 + $0x28] sm:$0xf] %v1221
      %1350 = vst [vmem:[%s172 + $0x2c] sm:$0xf] %v1222
      %1351 = vst [vmem:[%s172 + $0x30] sm:$0xf] %v1223
      %1352 = vst [vmem:[%s172 + $0x34] sm:$0xf] %v1224
      %1353 = vst [vmem:[%s172 + $0x38] sm:$0xf] %v1225
      %1354 = vst [vmem:[%s172 + $0x3c] sm:$0xf] %v1226
      %1355 = vst [vmem:[%s172 + $0x40] sm:$0xf] %v1227
      %1356 = vst [vmem:[%s172 + $0x44] sm:$0xf] %v1228
      %1357 = vst [vmem:[%s172 + $0x48] sm:$0xf] %v1229
      %1358 = vst [vmem:[%s172 + $0x4c] sm:$0xf] %v1230
      %1359 = vst [vmem:[%s172 + $0x50] sm:$0xf] %v1231
      %1360 = vst [vmem:[%s172 + $0x54] sm:$0xf] %v1232
      %1361 = vst [vmem:[%s172 + $0x58] sm:$0xf] %v1233
      %1362 = vst [vmem:[%s172 + $0x5c] sm:$0xf] %v1234
      %1363 = vst [vmem:[%s172 + $0x60] sm:$0xf] %v1235
      %1364 = vst [vmem:[%s172 + $0x64] sm:$0xf] %v1236
      %1365 = vst [vmem:[%s172 + $0x68] sm:$0xf] %v1237
      %1366 = vst [vmem:[%s172 + $0x6c] sm:$0xf] %v1238
      %1367 = vst [vmem:[%s172 + $0x70] sm:$0xf] %v1239
      %1368 = vst [vmem:[%s172 + $0x74] sm:$0xf] %v1240
      %1369 = vst [vmem:[%s172 + $0x78] sm:$0xf] %v1241
      %1370 = vst [vmem:[%s172 + $0x7c] sm:$0xf] %v1242
      %1371 = vst [vmem:[%s172 + $0x80] sm:$0xf] %v1243
      %1372 = vst [vmem:[%s172 + $0x84] sm:$0xf] %v1244
      %1373 = vst [vmem:[%s172 + $0x88] sm:$0xf] %v1245
      %1374 = vst [vmem:[%s172 + $0x8c] sm:$0xf] %v1246
      %1375 = vst [vmem:[%s172 + $0x90] sm:$0xf] %v1247
      %1376 = vst [vmem:[%s172 + $0x94] sm:$0xf] %v1248
      %1377 = vst [vmem:[%s172 + $0x98] sm:$0xf] %v1249
      %1378 = vst [vmem:[%s172 + $0x9c] sm:$0xf] %v1250
      %1379 = vst [vmem:[%s172 + $0xa0] sm:$0xf] %v1251
      %1380 = vst [vmem:[%s172 + $0xa4] sm:$0xf] %v1252
      %1381 = vst [vmem:[%s172 + $0xa8] sm:$0xf] %v1253
      %1382 = vst [vmem:[%s172 + $0xac] sm:$0xf] %v1254
      %1383 = vst [vmem:[%s172 + $0xb0] sm:$0xf] %v1255
      %1384 = vst [vmem:[%s172 + $0xb4] sm:$0xf] %v1256
      %1385 = vst [vmem:[%s172 + $0xb8] sm:$0xf] %v1257
      %1386 = vst [vmem:[%s172 + $0xbc] sm:$0xf] %v1258
      %1387 = vst [vmem:[%s172 + $0xc0] sm:$0xf] %v1259
      %1388 = vst [vmem:[%s172 + $0xc4] sm:$0xf] %v1260
      %1389 = vst [vmem:[%s172 + $0xc8] sm:$0xf] %v1261
      %1390 = vst [vmem:[%s172 + $0xcc] sm:$0xf] %v1262
      %1391 = vst [vmem:[%s172 + $0xd0] sm:$0xf] %v1263
      %1392 = vst [vmem:[%s172 + $0xd4] sm:$0xf] %v1264
      %1393 = vst [vmem:[%s172 + $0xd8] sm:$0xf] %v1265
      %1394 = vst [vmem:[%s172 + $0xdc] sm:$0xf] %v1266
      %1395 = vst [vmem:[%s172 + $0xe0] sm:$0xf] %v1267
      %1396 = vst [vmem:[%s172 + $0xe4] sm:$0xf] %v1268
      %1397 = vst [vmem:[%s172 + $0xe8] sm:$0xf] %v1269
      %1398 = vst [vmem:[%s172 + $0xec] sm:$0xf] %v1270
      %1399 = vst [vmem:[%s172 + $0xf0] sm:$0xf] %v1271
      %1400 = vst [vmem:[%s172 + $0xf4] sm:$0xf] %v1272
      %1401 = vst [vmem:[%s172 + $0xf8] sm:$0xf] %v1273
      %1402 = vst [vmem:[%s172 + $0xfc] sm:$0xf] %v1274
      %1403 = vst [vmem:[%s172 + $0x100] sm:$0xf] %v1275
      %1404 = vst [vmem:[%s172 + $0x104] sm:$0xf] %v1276
      %1405 = vst [vmem:[%s172 + $0x108] sm:$0xf] %v1277
      %1406 = vst [vmem:[%s172 + $0x10c] sm:$0xf] %v1278
      %1407 = vst [vmem:[%s172 + $0x110] sm:$0xf] %v1279
      %1408 = vst [vmem:[%s172 + $0x114] sm:$0xf] %v1280
      %1409 = vst [vmem:[%s172 + $0x118] sm:$0xf] %v1281
      %1410 = vst [vmem:[%s172 + $0x11c] sm:$0xf] %v1282
      %1411 = vst [vmem:[%s172 + $0x120] sm:$0xf] %v1283
      %1412 = vst [vmem:[%s172 + $0x124] sm:$0xf] %v1284
      %1413 = vst [vmem:[%s172 + $0x128] sm:$0xf] %v1285
      %1414 = vst [vmem:[%s172 + $0x12c] sm:$0xf] %v1286
      %1415 = vst [vmem:[%s172 + $0x130] sm:$0xf] %v1287
      %1416 = vst [vmem:[%s172 + $0x134] sm:$0xf] %v1288
      %1417 = vst [vmem:[%s172 + $0x138] sm:$0xf] %v1289
      %1418 = vst [vmem:[%s172 + $0x13c] sm:$0xf] %v1290
      %1419 = vst [vmem:[%s172 + $0x140] sm:$0xf] %v1291
      %1420 = vst [vmem:[%s172 + $0x144] sm:$0xf] %v1292
      %1421 = vst [vmem:[%s172 + $0x148] sm:$0xf] %v1293
      %1422 = vst [vmem:[%s172 + $0x14c] sm:$0xf] %v1294
      %1423 = vst [vmem:[%s172 + $0x150] sm:$0xf] %v1295
      %1424 = vst [vmem:[%s172 + $0x154] sm:$0xf] %v1296
      %1425 = vst [vmem:[%s172 + $0x158] sm:$0xf] %v1297
      %1426 = vst [vmem:[%s172 + $0x15c] sm:$0xf] %v1298
      %1427 = vst [vmem:[%s172 + $0x160] sm:$0xf] %v1299
      %1428 = vst [vmem:[%s172 + $0x164] sm:$0xf] %v1300
      %1429 = vst [vmem:[%s172 + $0x168] sm:$0xf] %v1301
      %1430 = vst [vmem:[%s172 + $0x16c] sm:$0xf] %v1302
      %1431 = vst [vmem:[%s172 + $0x170] sm:$0xf] %v1303
      %1432 = vst [vmem:[%s172 + $0x174] sm:$0xf] %v1304
      %1433 = vst [vmem:[%s172 + $0x178] sm:$0xf] %v1305
      %1434 = vst [vmem:[%s172 + $0x17c] sm:$0xf] %v1306
      %1435 = vst [vmem:[%s172 + $0x180] sm:$0xf] %v1307
      %1436 = vst [vmem:[%s172 + $0x184] sm:$0xf] %v1308
      %1437 = vst [vmem:[%s172 + $0x188] sm:$0xf] %v1309
      %1438 = vst [vmem:[%s172 + $0x18c] sm:$0xf] %v1310
      %1439 = vst [vmem:[%s172 + $0x190] sm:$0xf] %v1311
      %1440 = vst [vmem:[%s172 + $0x194] sm:$0xf] %v1312
      %1441 = vst [vmem:[%s172 + $0x198] sm:$0xf] %v1313
      %1442 = vst [vmem:[%s172 + $0x19c] sm:$0xf] %v1314
      %1443 = vst [vmem:[%s172 + $0x1a0] sm:$0xf] %v1315
      %1444 = vst [vmem:[%s172 + $0x1a4] sm:$0xf] %v1316
      %1445 = vst [vmem:[%s172 + $0x1a8] sm:$0xf] %v1317
      %1446 = vst [vmem:[%s172 + $0x1ac] sm:$0xf] %v1318
      %1447 = vst [vmem:[%s172 + $0x1b0] sm:$0xf] %v1319
      %1448 = vst [vmem:[%s172 + $0x1b4] sm:$0xf] %v1320
      %1449 = vst [vmem:[%s172 + $0x1b8] sm:$0xf] %v1321
      %1450 = vst [vmem:[%s172 + $0x1bc] sm:$0xf] %v1322
      %1451 = vst [vmem:[%s172 + $0x1c0] sm:$0xf] %v1323
      %1452 = vst [vmem:[%s172 + $0x1c4] sm:$0xf] %v1324
      %1453 = vst [vmem:[%s172 + $0x1c8] sm:$0xf] %v1325
      %1454 = vst [vmem:[%s172 + $0x1cc] sm:$0xf] %v1326
      %1455 = vst [vmem:[%s172 + $0x1d0] sm:$0xf] %v1327
      %1456 = vst [vmem:[%s172 + $0x1d4] sm:$0xf] %v1328
      %1457 = vst [vmem:[%s172 + $0x1d8] sm:$0xf] %v1329
      %1458 = vst [vmem:[%s172 + $0x1dc] sm:$0xf] %v1330
      %1459 = vst [vmem:[%s172 + $0x1e0] sm:$0xf] %v1331
      %1460 = vst [vmem:[%s172 + $0x1e4] sm:$0xf] %v1332
      %1461 = vst [vmem:[%s172 + $0x1e8] sm:$0xf] %v1333
      %1462 = vst [vmem:[%s172 + $0x1ec] sm:$0xf] %v1334
      %1463 = vst [vmem:[%s172 + $0x1f0] sm:$0xf] %v1335
      %1464 = vst [vmem:[%s172 + $0x1f4] sm:$0xf] %v1336
      %1465 = vst [vmem:[%s172 + $0x1f8] sm:$0xf] %v1337
      %1466 = vst [vmem:[%s172 + $0x1fc] sm:$0xf] %v1338
      %s1467 = smul.u32 128, %s14
      %p1468 = scmp.lt.s32.totalorder %s1467, 255
      %s1469 = scalar_select %p1468, %s1467, 255
      %s1470 = smul.addr %s1469, 4
      %s1471 = scalar_lea.vmem %s3, %s1470
      // Predicated region
      $region33: #{hand_gesture_cnn_forward.4} parent=31 // pred_check
        %p1472 = pneg %p100
      $region34: #{hand_gesture_cnn_forward.4} parent=31 // pred_check_branch
        %1474 = sbr.rel (%p1472) target = $region36
      $region35: #{hand_gesture_cnn_forward.4} parent=31 // pred_region
        %s1475 = smul.u32 128, %s14
      $region36: #{hand_gesture_cnn_forward.4} parent=31 // pred_fallthru
        _
    $region32: #{hand_gesture_cnn_forward.4} parent=5 // pred_fallthru
      _
    %p1476 = scmp.le.s32.totalorder 2, %s9
    // Predicated region
    $region37: #{hand_gesture_cnn_forward.4} parent=5 // pred_check
      %p1477 = pneg %p1476
    $region38: #{hand_gesture_cnn_forward.4} parent=5 // pred_check_branch
      %1479 = sbr.rel (%p1477) target = $region40
    $region39: #{hand_gesture_cnn_forward.4} parent=5 // pred_region
      %s1480 = ssub.s32 %s9, 2
      // Predicated region
      $region41: #{hand_gesture_cnn_forward.4} parent=39 // pred_check
        %p1481 = pneg %p106
      $region42: #{hand_gesture_cnn_forward.4} parent=39 // pred_check_branch
        %1483 = sbr.rel (%p1481) target = $region44
      $region43: #{hand_gesture_cnn_forward.4} parent=39 // pred_region
        %s1484 = smul.u32 128, %s15
        %p1485 = scmp.lt.s32.totalorder %s1484, 255
        %s1486 = scalar_select %p1485, %s1484, 255
        %s1487 = smul.addr %s1486, 4
        %s1488 = scalar_lea.vmem %s3, %s1487
      $region44: #{hand_gesture_cnn_forward.4} parent=39 // pred_fallthru
        _
    $region40: #{hand_gesture_cnn_forward.4} parent=5 // pred_fallthru
      _
  $region6: #{hand_gesture_cnn_forward.4} parent=0 // loop_footer
    %s13 = sadd.s32 1, %s9
  $region7: #{hand_gesture_cnn_forward.4} parent=0 // loop_footer_branch
    %8 = sbr.rel target = $region3
  $region8: #{hand_gesture_cnn_forward.4} parent=0 // loop_exit
    _

// kernel: hand_gesture_cnn_forward.5
$region0: #{hand_gesture_cnn_forward.5}
  #allocation0 [shape = 'u32[]', space=smem, size = 0x4, offset = 0x4, fixed_abs, tag = 'smem constant byte address 0x4 - core index']
  #allocation1 [shape = 'u32[72,128]{1,0:T(1,128)}', space=vmem, size = 0x9000, scoped, tag = 'internal scratch']
  %s0 = inlined_call_operand.vmem [shape: bf16[512,128], index: 0, kind: input, shape index: {}]
  %s1 = inlined_call_operand.vmem [shape: bf16[128,128], index: 1, kind: input, shape index: {}]
  %s2 = inlined_call_operand.vmem [shape: f32[1,128], index: 2, kind: input, shape index: {}]
  %s3 = inlined_call_operand.vmem [shape: bf16[512,128], index: 3, kind: output, shape index: {}]
  %s4 = sld [smem:[#allocation0]]
  $region45: #{hand_gesture_cnn_forward.5} parent=0
    _
  %s6 = ssub.s32 1, %s4
  %s7 = scalar_select 0, %s6, %s4
  loop: start=0, step=1, limit=4
  $region2: #{hand_gesture_cnn_forward.5} parent=0 // loop_pre_header
    _
  $region3: #{hand_gesture_cnn_forward.5} parent=0 // loop_header
    %s9 = sphi 0, %s13
    %p10 = scmp.ge.s32.totalorder %s9, 4
    %s19 = sphi 0, %s21
    %s22 = sphi 0, %s19
    %s23 = sphi 0, %s22
    %s39 = sphi 0, %s23
    %s43 = sphi 0, %s43
    %s45 = sphi 0, %s43
    %s46 = sphi 0, %s45
    %s60 = sphi 0, %s46
    %s64 = sphi 0, %s64
    %s66 = sphi 0, %s64
    %s67 = sphi 0, %s66
    %s81 = sphi 0, %s67
    %s87 = sphi 0, %s89
    %s90 = sphi 0, %s87
    %s91 = sphi 0, %s90
    %s107 = sphi 0, %s91
  $region4: #{hand_gesture_cnn_forward.5} parent=0 // loop_header_branch
    %12 = sbr.rel (%p10) target = $region8
  $region5: #{hand_gesture_cnn_forward.5} parent=0 // loop_body
    %s14 = ssub.s32 %s9, 1
    %s15 = ssub.s32 %s9, 2
    %s16 = sadd.s32 %s9, 1
    %s17 = ssub.s32 %s9, %s16
    %p18 = scmp.eq.s32.totalorder %s17, 0
    %s20 = sadd.s32 %s19, 1
    %s21 = scalar_select %p18, %s19, %s20
    %p24 = pneg %p18
    %p25 = scmp.eq.s32.totalorder %s9, 1
    %p26 = por %p24, %p25
    %p27 = scmp.ne.s32.totalorder %s19, %s22
    %p28 = scmp.eq.s32.totalorder %s9, 0
    %p29 = por %p27, %p28
    %p30 = scmp.ne.s32.totalorder %s19, %s22
    %p31 = scmp.eq.s32.totalorder %s14, 1
    %p32 = por %p30, %p31
    %p33 = scmp.ne.s32.totalorder %s22, %s23
    %p34 = scmp.eq.s32.totalorder %s14, 0
    %p35 = por %p33, %p34
    %p36 = scmp.ne.s32.totalorder %s22, %s23
    %p37 = scmp.eq.s32.totalorder %s15, 1
    %p38 = por %p36, %p37
    %p40 = scmp.ne.s32.totalorder %s23, %s39
    %p41 = scmp.eq.s32.totalorder %s15, 0
    %p42 = por %p40, %p41
    %s44 = sadd.s32 %s43, 1
    %p47 = scmp.eq.s32.totalorder %s9, 1
    %p48 = scmp.ne.s32.totalorder %s43, %s45
    %p49 = scmp.eq.s32.totalorder %s9, 0
    %p50 = por %p48, %p49
    %p51 = scmp.ne.s32.totalorder %s43, %s45
    %p52 = scmp.eq.s32.totalorder %s14, 1
    %p53 = por %p51, %p52
    %p54 = scmp.ne.s32.totalorder %s45, %s46
    %p55 = scmp.eq.s32.totalorder %s14, 0
    %p56 = por %p54, %p55
    %p57 = scmp.ne.s32.totalorder %s45, %s46
    %p58 = scmp.eq.s32.totalorder %s15, 1
    %p59 = por %p57, %p58
    %p61 = scmp.ne.s32.totalorder %s46, %s60
    %p62 = scmp.eq.s32.totalorder %s15, 0
    %p63 = por %p61, %p62
    %s65 = sadd.s32 %s64, 1
    %p68 = scmp.eq.s32.totalorder %s9, 1
    %p69 = scmp.ne.s32.totalorder %s64, %s66
    %p70 = scmp.eq.s32.totalorder %s9, 0
    %p71 = por %p69, %p70
    %p72 = scmp.ne.s32.totalorder %s64, %s66
    %p73 = scmp.eq.s32.totalorder %s14, 1
    %p74 = por %p72, %p73
    %p75 = scmp.ne.s32.totalorder %s66, %s67
    %p76 = scmp.eq.s32.totalorder %s14, 0
    %p77 = por %p75, %p76
    %p78 = scmp.ne.s32.totalorder %s66, %s67
    %p79 = scmp.eq.s32.totalorder %s15, 1
    %p80 = por %p78, %p79
    %p82 = scmp.ne.s32.totalorder %s67, %s81
    %p83 = scmp.eq.s32.totalorder %s15, 0
    %p84 = por %p82, %p83
    %s85 = ssub.s32 %s9, %s16
    %p86 = scmp.eq.s32.totalorder %s85, 0
    %s88 = sadd.s32 %s87, 1
    %s89 = scalar_select %p86, %s87, %s88
    %p92 = pneg %p86
    %p93 = scmp.eq.s32.totalorder %s9, 1
    %p94 = por %p92, %p93
    %p95 = scmp.ne.s32.totalorder %s87, %s90
    %p96 = scmp.eq.s32.totalorder %s9, 0
    %p97 = por %p95, %p96
    %p98 = scmp.ne.s32.totalorder %s87, %s90
    %p99 = scmp.eq.s32.totalorder %s14, 1
    %p100 = por %p98, %p99
    %p101 = scmp.ne.s32.totalorder %s90, %s91
    %p102 = scmp.eq.s32.totalorder %s14, 0
    %p103 = por %p101, %p102
    %p104 = scmp.ne.s32.totalorder %s90, %s91
    %p105 = scmp.eq.s32.totalorder %s15, 1
    %p106 = por %p104, %p105
    %p108 = scmp.ne.s32.totalorder %s91, %s107
    %p109 = scmp.eq.s32.totalorder %s15, 0
    %p110 = por %p108, %p109
    %p111 = scmp.le.s32.totalorder 1, %s9
    %p112 = scmp.lt.s32.totalorder %s9, 3
    %p113 = pnand %p111, %p112
    %p114 = pneg %p113
    // Predicated region
    $region9: #{hand_gesture_cnn_forward.5} parent=5 // pred_check
      _
    $region10: #{hand_gesture_cnn_forward.5} parent=5 // pred_check_branch
      %116 = sbr.rel (%p113) target = $region12
    $region11: #{hand_gesture_cnn_forward.5} parent=5 // pred_region
      %s117 = ssub.s32 %s9, 1
      // Predicated region
      $region13: #{hand_gesture_cnn_forward.5} parent=11 // pred_check
        %p118 = pneg %p56
      $region14: #{hand_gesture_cnn_forward.5} parent=11 // pred_check_branch
        %120 = sbr.rel (%p118) target = $region16
      $region15: #{hand_gesture_cnn_forward.5} parent=11 // pred_region
        _
      $region16: #{hand_gesture_cnn_forward.5} parent=11 // pred_fallthru
        _
      // Predicated region
      $region17: #{hand_gesture_cnn_forward.5} parent=11 // pred_check
        %p121 = pneg %p77
      $region18: #{hand_gesture_cnn_forward.5} parent=11 // pred_check_branch
        %123 = sbr.rel (%p121) target = $region20
      $region19: #{hand_gesture_cnn_forward.5} parent=11 // pred_region
        _
      $region20: #{hand_gesture_cnn_forward.5} parent=11 // pred_fallthru
        _
    $region12: #{hand_gesture_cnn_forward.5} parent=5 // pred_fallthru
      _
    %p124 = scmp.lt.s32.totalorder %s9, 2
    // Predicated region
    $region21: #{hand_gesture_cnn_forward.5} parent=5 // pred_check
      %p125 = pneg %p124
    $region22: #{hand_gesture_cnn_forward.5} parent=5 // pred_check_branch
      %127 = sbr.rel (%p125) target = $region24
    $region23: #{hand_gesture_cnn_forward.5} parent=5 // pred_region
      // Predicated region
      $region25: #{hand_gesture_cnn_forward.5} parent=23 // pred_check
        %p128 = pneg %p29
      $region26: #{hand_gesture_cnn_forward.5} parent=23 // pred_check_branch
        %130 = sbr.rel (%p128) target = $region28
      $region27: #{hand_gesture_cnn_forward.5} parent=23 // pred_region
        %s131 = smul.u32 32, %s9
        %p132 = scmp.lt.s32.totalorder %s131, 63
        %s133 = scalar_select %p132, %s131, 63
        %s134 = smul.addr %s133, 4
        %s135 = scalar_lea.vmem %s0, %s134
        %s136 = smul.u32 32, %s9
      $region28: #{hand_gesture_cnn_forward.5} parent=23 // pred_fallthru
        _
    $region24: #{hand_gesture_cnn_forward.5} parent=5 // pred_fallthru
      _
    %p137 = scmp.le.s32.totalorder 1, %s9
    %p138 = scmp.lt.s32.totalorder %s9, 3
    %p139 = pnand %p137, %p138
    %p140 = pneg %p139
    // Predicated region
    $region29: #{hand_gesture_cnn_forward.5} parent=5 // pred_check
      _
    $region30: #{hand_gesture_cnn_forward.5} parent=5 // pred_check_branch
      %142 = sbr.rel (%p139) target = $region32
    $region31: #{hand_gesture_cnn_forward.5} parent=5 // pred_region
      %s143 = ssub.s32 %s9, 1
      %s144 = smul.u32 32, %s14
      %p145 = scmp.lt.s32.totalorder %s144, 63
      %s146 = scalar_select %p145, %s144, 63
      %s147 = smul.addr %s146, 4
      %s148 = scalar_lea.vmem %s0, %s147
      %p149 = pneg %p35
      %p150 = pneg %p32
      %p151 = pneg %p56
      %p152 = pneg %p53
      %p153 = pneg %p77
      %p154 = pneg %p74
      %p155 = pneg %p103
      %p156 = pneg %p100
      %s157 = smul.u32 32, %s14
      %p158 = scmp.lt.s32.totalorder %s157, 63
      %s159 = scalar_select %p158, %s157, 63
      %s160 = smul.addr %s159, 4
      %s161 = scalar_lea.vmem %s3, %s160
      %s162 = smul.u32 32, %s14
      %p163 = scmp.lt.s32.totalorder %s162, 63
      %s164 = scalar_select %p163, %s162, 63
      %s165 = smul.addr %s164, 4
      %s166 = scalar_lea.vmem %s0, %s165
      %s167 = smul.u32 32, %s14
      %s168 = smul.u32 32, %s14
      %p169 = scmp.lt.s32.totalorder %s168, 63
      %s170 = scalar_select %p169, %s168, 63
      %s171 = smul.addr %s170, 4
      %s172 = scalar_lea.vmem %s3, %s171
      %s173 = smul.u32 32, %s14
      %v174 = vld [vmem:[%s166] sm:$0xf]
      %v175 = vld [vmem:[%s166 + $0x4] sm:$0xf]
      %v176 = vld [vmem:[%s166 + $0x8] sm:$0xf]
      %v177 = vld [vmem:[%s166 + $0xc] sm:$0xf]
      %v178 = vld [vmem:[%s166 + $0x10] sm:$0xf]
      %v179 = vld [vmem:[%s166 + $0x14] sm:$0xf]
      %v180 = vld [vmem:[%s166 + $0x18] sm:$0xf]
      %v181 = vld [vmem:[%s166 + $0x1c] sm:$0xf]
      %v182 = vld [vmem:[%s166 + $0x20] sm:$0xf]
      %v183 = vld [vmem:[%s166 + $0x24] sm:$0xf]
      %v184 = vld [vmem:[%s166 + $0x28] sm:$0xf]
      %v185 = vld [vmem:[%s166 + $0x2c] sm:$0xf]
      %v186 = vld [vmem:[%s166 + $0x30] sm:$0xf]
      %v187 = vld [vmem:[%s166 + $0x34] sm:$0xf]
      %v188 = vld [vmem:[%s166 + $0x38] sm:$0xf]
      %v189 = vld [vmem:[%s166 + $0x3c] sm:$0xf]
      %v190 = vld [vmem:[%s166 + $0x40] sm:$0xf]
      %v191 = vld [vmem:[%s166 + $0x44] sm:$0xf]
      %v192 = vld [vmem:[%s166 + $0x48] sm:$0xf]
      %v193 = vld [vmem:[%s166 + $0x4c] sm:$0xf]
      %v194 = vld [vmem:[%s166 + $0x50] sm:$0xf]
      %v195 = vld [vmem:[%s166 + $0x54] sm:$0xf]
      %v196 = vld [vmem:[%s166 + $0x58] sm:$0xf]
      %v197 = vld [vmem:[%s166 + $0x5c] sm:$0xf]
      %v198 = vld [vmem:[%s166 + $0x60] sm:$0xf]
      %v199 = vld [vmem:[%s166 + $0x64] sm:$0xf]
      %v200 = vld [vmem:[%s166 + $0x68] sm:$0xf]
      %v201 = vld [vmem:[%s166 + $0x6c] sm:$0xf]
      %v202 = vld [vmem:[%s166 + $0x70] sm:$0xf]
      %v203 = vld [vmem:[%s166 + $0x74] sm:$0xf]
      %v204 = vld [vmem:[%s166 + $0x78] sm:$0xf]
      %v205 = vld [vmem:[%s166 + $0x7c] sm:$0xf]
      %v206 = vld [vmem:[%s1] sm:$0xf]
      %v207 = vld [vmem:[%s1 + $0x4] sm:$0xf]
      %v208 = vld [vmem:[%s1 + $0x8] sm:$0xf]
      %v209 = vld [vmem:[%s1 + $0xc] sm:$0xf]
      %v210 = vld [vmem:[%s1 + $0x10] sm:$0xf]
      %v211 = vld [vmem:[%s1 + $0x14] sm:$0xf]
      %v212 = vld [vmem:[%s1 + $0x18] sm:$0xf]
      %v213 = vld [vmem:[%s1 + $0x1c] sm:$0xf]
      %v214 = vld [vmem:[%s1 + $0x20] sm:$0xf]
      %v215 = vld [vmem:[%s1 + $0x24] sm:$0xf]
      %v216 = vld [vmem:[%s1 + $0x28] sm:$0xf]
      %v217 = vld [vmem:[%s1 + $0x2c] sm:$0xf]
      %v218 = vld [vmem:[%s1 + $0x30] sm:$0xf]
      %v219 = vld [vmem:[%s1 + $0x34] sm:$0xf]
      %v220 = vld [vmem:[%s1 + $0x38] sm:$0xf]
      %v221 = vld [vmem:[%s1 + $0x3c] sm:$0xf]
      %v222 = vld [vmem:[%s2] sm:$0x1]
      %v224 = vperm.slane %v222, 0
      %v258 = vunpack.c.l.b16 %v174
      %v259 = vunpack.c.l.b16 %v175
      %v260 = vunpack.c.l.b16 %v176
      %v261 = vunpack.c.l.b16 %v177
      %v262 = vunpack.c.l.b16 %v178
      %v263 = vunpack.c.l.b16 %v179
      %v264 = vunpack.c.l.b16 %v180
      %v265 = vunpack.c.l.b16 %v181
      %v266 = vunpack.c.l.b16 %v182
      %v267 = vunpack.c.l.b16 %v183
      %v268 = vunpack.c.l.b16 %v184
      %v269 = vunpack.c.l.b16 %v185
      %v270 = vunpack.c.l.b16 %v186
      %v271 = vunpack.c.l.b16 %v187
      %v272 = vunpack.c.l.b16 %v188
      %v273 = vunpack.c.l.b16 %v189
      %v274 = vunpack.c.l.b16 %v190
      %v275 = vunpack.c.l.b16 %v191
      %v276 = vunpack.c.l.b16 %v192
      %v277 = vunpack.c.l.b16 %v193
      %v278 = vunpack.c.l.b16 %v194
      %v279 = vunpack.c.l.b16 %v195
      %v280 = vunpack.c.l.b16 %v196
      %v281 = vunpack.c.l.b16 %v197
      %v282 = vunpack.c.l.b16 %v198
      %v283 = vunpack.c.l.b16 %v199
      %v284 = vunpack.c.l.b16 %v200
      %v285 = vunpack.c.l.b16 %v201
      %v286 = vunpack.c.l.b16 %v202
      %v287 = vunpack.c.l.b16 %v203
      %v288 = vunpack.c.l.b16 %v204
      %v289 = vunpack.c.l.b16 %v205
      %v290 = vpack.c.b16 %v259, %v258
      %v291 = vpack.c.b16 %v261, %v260
      %v292 = vpack.c.b16 %v263, %v262
      %v293 = vpack.c.b16 %v265, %v264
      %v294 = vpack.c.b16 %v267, %v266
      %v295 = vpack.c.b16 %v269, %v268
      %v296 = vpack.c.b16 %v271, %v270
      %v297 = vpack.c.b16 %v273, %v272
      %v298 = vpack.c.b16 %v275, %v274
      %v299 = vpack.c.b16 %v277, %v276
      %v300 = vpack.c.b16 %v279, %v278
      %v301 = vpack.c.b16 %v281, %v280
      %v302 = vpack.c.b16 %v283, %v282
      %v303 = vpack.c.b16 %v285, %v284
      %v304 = vpack.c.b16 %v287, %v286
      %v305 = vpack.c.b16 %v289, %v288
      %v338 = vunpack.c.l.b16 %v206
      %v339 = vunpack.c.l.b16 %v207
      %v340 = vunpack.c.l.b16 %v208
      %v341 = vunpack.c.l.b16 %v209
      %v342 = vunpack.c.l.b16 %v210
      %v343 = vunpack.c.l.b16 %v211
      %v344 = vunpack.c.l.b16 %v212
      %v345 = vunpack.c.l.b16 %v213
      %v346 = vunpack.c.l.b16 %v214
      %v347 = vunpack.c.l.b16 %v215
      %v348 = vunpack.c.l.b16 %v216
      %v349 = vunpack.c.l.b16 %v217
      %v350 = vunpack.c.l.b16 %v218
      %v351 = vunpack.c.l.b16 %v219
      %v352 = vunpack.c.l.b16 %v220
      %v353 = vunpack.c.l.b16 %v221
      %v354 = vpack.c.b16 %v339, %v338
      %v355 = vpack.c.b16 %v341, %v340
      %v356 = vpack.c.b16 %v343, %v342
      %v357 = vpack.c.b16 %v345, %v344
      %v358 = vpack.c.b16 %v347, %v346
      %v359 = vpack.c.b16 %v349, %v348
      %v360 = vpack.c.b16 %v351, %v350
      %v361 = vpack.c.b16 %v353, %v352
      %370 = vmatpush.bf16.msra.mxu0 %v361
      %371 = vmatpush.bf16.msra.mxu0 %v360
      %372 = vmatpush.bf16.msra.mxu0 %v359
      %373 = vmatpush.bf16.msra.mxu0 %v358
      %374 = vmatpush.bf16.msra.mxu0 %v357
      %375 = vmatpush.bf16.msra.mxu0 %v356
      %376 = vmatpush.bf16.msra.mxu0 %v355
      %377 = vmatpush.bf16.msra.mxu0 %v354
      %378 = vmatmul.bf16.gmra.mxu0 %v290
      %v379 = vpop.f32.mrf.mxu0
      %v380 = vadd.f32 %v224, %v379
      %v381 = vpop.f32.mrf.mxu0
      %v382 = vadd.f32 %v224, %v381
      %383 = vmatmul.bf16.gmra.mxu0 %v291
      %v384 = vpop.f32.mrf.mxu0
      %v385 = vadd.f32 %v224, %v384
      %v386 = vpop.f32.mrf.mxu0
      %v387 = vadd.f32 %v224, %v386
      %388 = vmatmul.bf16.gmra.mxu0 %v292
      %v389 = vpop.f32.mrf.mxu0
      %v390 = vadd.f32 %v224, %v389
      %v391 = vpop.f32.mrf.mxu0
      %v392 = vadd.f32 %v224, %v391
      %393 = vmatmul.bf16.gmra.mxu0 %v293
      %v394 = vpop.f32.mrf.mxu0
      %v395 = vadd.f32 %v224, %v394
      %v396 = vpop.f32.mrf.mxu0
      %v397 = vadd.f32 %v224, %v396
      %398 = vmatmul.bf16.gmra.mxu0 %v294
      %v399 = vpop.f32.mrf.mxu0
      %v400 = vadd.f32 %v224, %v399
      %v401 = vpop.f32.mrf.mxu0
      %v402 = vadd.f32 %v224, %v401
      %403 = vmatmul.bf16.gmra.mxu0 %v295
      %v404 = vpop.f32.mrf.mxu0
      %v405 = vadd.f32 %v224, %v404
      %v406 = vpop.f32.mrf.mxu0
      %v407 = vadd.f32 %v224, %v406
      %408 = vmatmul.bf16.gmra.mxu0 %v296
      %v409 = vpop.f32.mrf.mxu0
      %v410 = vadd.f32 %v224, %v409
      %v411 = vpop.f32.mrf.mxu0
      %v412 = vadd.f32 %v224, %v411
      %413 = vmatmul.bf16.gmra.mxu0 %v297
      %v414 = vpop.f32.mrf.mxu0
      %v415 = vadd.f32 %v224, %v414
      %v416 = vpop.f32.mrf.mxu0
      %v417 = vadd.f32 %v224, %v416
      %418 = vmatmul.bf16.gmra.mxu0 %v298
      %v419 = vpop.f32.mrf.mxu0
      %v420 = vadd.f32 %v224, %v419
      %v421 = vpop.f32.mrf.mxu0
      %v422 = vadd.f32 %v224, %v421
      %423 = vmatmul.bf16.gmra.mxu0 %v299
      %v424 = vpop.f32.mrf.mxu0
      %v425 = vadd.f32 %v224, %v424
      %v426 = vpop.f32.mrf.mxu0
      %v427 = vadd.f32 %v224, %v426
      %428 = vmatmul.bf16.gmra.mxu0 %v300
      %v429 = vpop.f32.mrf.mxu0
      %v430 = vadd.f32 %v224, %v429
      %v431 = vpop.f32.mrf.mxu0
      %v432 = vadd.f32 %v224, %v431
      %433 = vmatmul.bf16.gmra.mxu0 %v301
      %v434 = vpop.f32.mrf.mxu0
      %v435 = vadd.f32 %v224, %v434
      %v436 = vpop.f32.mrf.mxu0
      %v437 = vadd.f32 %v224, %v436
      %438 = vmatmul.bf16.gmra.mxu0 %v302
      %v439 = vpop.f32.mrf.mxu0
      %v440 = vadd.f32 %v224, %v439
      %v441 = vpop.f32.mrf.mxu0
      %v442 = vadd.f32 %v224, %v441
      %443 = vmatmul.bf16.gmra.mxu0 %v303
      %v444 = vpop.f32.mrf.mxu0
      %v445 = vadd.f32 %v224, %v444
      %v446 = vpop.f32.mrf.mxu0
      %v447 = vadd.f32 %v224, %v446
      %448 = vmatmul.bf16.gmra.mxu0 %v304
      %v449 = vpop.f32.mrf.mxu0
      %v450 = vadd.f32 %v224, %v449
      %v451 = vpop.f32.mrf.mxu0
      %v452 = vadd.f32 %v224, %v451
      %453 = vmatmul.bf16.gmra.mxu0 %v305
      %v454 = vpop.f32.mrf.mxu0
      %v455 = vadd.f32 %v224, %v454
      %v456 = vpop.f32.mrf.mxu0
      %v457 = vadd.f32 %v224, %v456
      %458 = vdwg.mxu0
      %v459 = vmax.f32 %v380, 0.0
      %v460 = vmax.f32 %v382, 0.0
      %v461 = vmax.f32 %v385, 0.0
      %v462 = vmax.f32 %v387, 0.0
      %v463 = vmax.f32 %v390, 0.0
      %v464 = vmax.f32 %v392, 0.0
      %v465 = vmax.f32 %v395, 0.0
      %v466 = vmax.f32 %v397, 0.0
      %v467 = vmax.f32 %v400, 0.0
      %v468 = vmax.f32 %v402, 0.0
      %v469 = vmax.f32 %v405, 0.0
      %v470 = vmax.f32 %v407, 0.0
      %v471 = vmax.f32 %v410, 0.0
      %v472 = vmax.f32 %v412, 0.0
      %v473 = vmax.f32 %v415, 0.0
      %v474 = vmax.f32 %v417, 0.0
      %v475 = vmax.f32 %v420, 0.0
      %v476 = vmax.f32 %v422, 0.0
      %v477 = vmax.f32 %v425, 0.0
      %v478 = vmax.f32 %v427, 0.0
      %v479 = vmax.f32 %v430, 0.0
      %v480 = vmax.f32 %v432, 0.0
      %v481 = vmax.f32 %v435, 0.0
      %v482 = vmax.f32 %v437, 0.0
      %v483 = vmax.f32 %v440, 0.0
      %v484 = vmax.f32 %v442, 0.0
      %v485 = vmax.f32 %v445, 0.0
      %v486 = vmax.f32 %v447, 0.0
      %v487 = vmax.f32 %v450, 0.0
      %v488 = vmax.f32 %v452, 0.0
      %v489 = vmax.f32 %v455, 0.0
      %v490 = vmax.f32 %v457, 0.0
      %v491 = vpack.c.bf16 %v459, %v459
      %v492 = vpack.c.bf16 %v460, %v460
      %v493 = vpack.c.bf16 %v461, %v461
      %v494 = vpack.c.bf16 %v462, %v462
      %v495 = vpack.c.bf16 %v463, %v463
      %v496 = vpack.c.bf16 %v464, %v464
      %v497 = vpack.c.bf16 %v465, %v465
      %v498 = vpack.c.bf16 %v466, %v466
      %v499 = vpack.c.bf16 %v467, %v467
      %v500 = vpack.c.bf16 %v468, %v468
      %v501 = vpack.c.bf16 %v469, %v469
      %v502 = vpack.c.bf16 %v470, %v470
      %v503 = vpack.c.bf16 %v471, %v471
      %v504 = vpack.c.bf16 %v472, %v472
      %v505 = vpack.c.bf16 %v473, %v473
      %v506 = vpack.c.bf16 %v474, %v474
      %v507 = vpack.c.bf16 %v475, %v475
      %v508 = vpack.c.bf16 %v476, %v476
      %v509 = vpack.c.bf16 %v477, %v477
      %v510 = vpack.c.bf16 %v478, %v478
      %v511 = vpack.c.bf16 %v479, %v479
      %v512 = vpack.c.bf16 %v480, %v480
      %v513 = vpack.c.bf16 %v481, %v481
      %v514 = vpack.c.bf16 %v482, %v482
      %v515 = vpack.c.bf16 %v483, %v483
      %v516 = vpack.c.bf16 %v484, %v484
      %v517 = vpack.c.bf16 %v485, %v485
      %v518 = vpack.c.bf16 %v486, %v486
      %v519 = vpack.c.bf16 %v487, %v487
      %v520 = vpack.c.bf16 %v488, %v488
      %v521 = vpack.c.bf16 %v489, %v489
      %v522 = vpack.c.bf16 %v490, %v490
      %523 = vst [vmem:[%s172] sm:$0xf] %v491
      %524 = vst [vmem:[%s172 + $0x4] sm:$0xf] %v492
      %525 = vst [vmem:[%s172 + $0x8] sm:$0xf] %v493
      %526 = vst [vmem:[%s172 + $0xc] sm:$0xf] %v494
      %527 = vst [vmem:[%s172 + $0x10] sm:$0xf] %v495
      %528 = vst [vmem:[%s172 + $0x14] sm:$0xf] %v496
      %529 = vst [vmem:[%s172 + $0x18] sm:$0xf] %v497
      %530 = vst [vmem:[%s172 + $0x1c] sm:$0xf] %v498
      %531 = vst [vmem:[%s172 + $0x20] sm:$0xf] %v499
      %532 = vst [vmem:[%s172 + $0x24] sm:$0xf] %v500
      %533 = vst [vmem:[%s172 + $0x28] sm:$0xf] %v501
      %534 = vst [vmem:[%s172 + $0x2c] sm:$0xf] %v502
      %535 = vst [vmem:[%s172 + $0x30] sm:$0xf] %v503
      %536 = vst [vmem:[%s172 + $0x34] sm:$0xf] %v504
      %537 = vst [vmem:[%s172 + $0x38] sm:$0xf] %v505
      %538 = vst [vmem:[%s172 + $0x3c] sm:$0xf] %v506
      %539 = vst [vmem:[%s172 + $0x40] sm:$0xf] %v507
      %540 = vst [vmem:[%s172 + $0x44] sm:$0xf] %v508
      %541 = vst [vmem:[%s172 + $0x48] sm:$0xf] %v509
      %542 = vst [vmem:[%s172 + $0x4c] sm:$0xf] %v510
      %543 = vst [vmem:[%s172 + $0x50] sm:$0xf] %v511
      %544 = vst [vmem:[%s172 + $0x54] sm:$0xf] %v512
      %545 = vst [vmem:[%s172 + $0x58] sm:$0xf] %v513
      %546 = vst [vmem:[%s172 + $0x5c] sm:$0xf] %v514
      %547 = vst [vmem:[%s172 + $0x60] sm:$0xf] %v515
      %548 = vst [vmem:[%s172 + $0x64] sm:$0xf] %v516
      %549 = vst [vmem:[%s172 + $0x68] sm:$0xf] %v517
      %550 = vst [vmem:[%s172 + $0x6c] sm:$0xf] %v518
      %551 = vst [vmem:[%s172 + $0x70] sm:$0xf] %v519
      %552 = vst [vmem:[%s172 + $0x74] sm:$0xf] %v520
      %553 = vst [vmem:[%s172 + $0x78] sm:$0xf] %v521
      %554 = vst [vmem:[%s172 + $0x7c] sm:$0xf] %v522
      %s555 = smul.u32 32, %s14
      %p556 = scmp.lt.s32.totalorder %s555, 63
      %s557 = scalar_select %p556, %s555, 63
      %s558 = smul.addr %s557, 4
      %s559 = scalar_lea.vmem %s3, %s558
      // Predicated region
      $region33: #{hand_gesture_cnn_forward.5} parent=31 // pred_check
        %p560 = pneg %p100
      $region34: #{hand_gesture_cnn_forward.5} parent=31 // pred_check_branch
        %562 = sbr.rel (%p560) target = $region36
      $region35: #{hand_gesture_cnn_forward.5} parent=31 // pred_region
        %s563 = smul.u32 32, %s14
      $region36: #{hand_gesture_cnn_forward.5} parent=31 // pred_fallthru
        _
    $region32: #{hand_gesture_cnn_forward.5} parent=5 // pred_fallthru
      _
    %p564 = scmp.le.s32.totalorder 2, %s9
    // Predicated region
    $region37: #{hand_gesture_cnn_forward.5} parent=5 // pred_check
      %p565 = pneg %p564
    $region38: #{hand_gesture_cnn_forward.5} parent=5 // pred_check_branch
      %567 = sbr.rel (%p565) target = $region40
    $region39: #{hand_gesture_cnn_forward.5} parent=5 // pred_region
      %s568 = ssub.s32 %s9, 2
      // Predicated region
      $region41: #{hand_gesture_cnn_forward.5} parent=39 // pred_check
        %p569 = pneg %p106
      $region42: #{hand_gesture_cnn_forward.5} parent=39 // pred_check_branch
        %571 = sbr.rel (%p569) target = $region44
      $region43: #{hand_gesture_cnn_forward.5} parent=39 // pred_region
        %s572 = smul.u32 32, %s15
        %p573 = scmp.lt.s32.totalorder %s572, 63
        %s574 = scalar_select %p573, %s572, 63
        %s575 = smul.addr %s574, 4
        %s576 = scalar_lea.vmem %s3, %s575
      $region44: #{hand_gesture_cnn_forward.5} parent=39 // pred_fallthru
        _
    $region40: #{hand_gesture_cnn_forward.5} parent=5 // pred_fallthru
      _
  $region6: #{hand_gesture_cnn_forward.5} parent=0 // loop_footer
    %s13 = sadd.s32 1, %s9
  $region7: #{hand_gesture_cnn_forward.5} parent=0 // loop_footer_branch
    %8 = sbr.rel target = $region3
  $region8: #{hand_gesture_cnn_forward.5} parent=0 // loop_exit
    _

// kernel: hand_gesture_cnn_forward.6
$region0: #{hand_gesture_cnn_forward.6}
  #allocation0 [shape = 'u32[]', space=smem, size = 0x4, offset = 0x4, fixed_abs, tag = 'smem constant byte address 0x4 - core index']
  #allocation1 [shape = 'u32[72,128]{1,0:T(1,128)}', space=vmem, size = 0x9000, scoped, tag = 'internal scratch']
  %s0 = inlined_call_operand.vmem [shape: bf16[128,128], index: 0, kind: input, shape index: {}]
  %s1 = inlined_call_operand.vmem [shape: bf16[128,128], index: 1, kind: input, shape index: {}]
  %s2 = inlined_call_operand.vmem [shape: f32[1,128], index: 2, kind: input, shape index: {}]
  %s3 = inlined_call_operand.vmem [shape: bf16[128,128], index: 3, kind: output, shape index: {}]
  %s4 = sld [smem:[#allocation0]]
  $region22: #{hand_gesture_cnn_forward.6} parent=0
    _
  %s6 = ssub.s32 1, %s4
  %s7 = scalar_select 0, %s6, %s4
  // Predicated region
  $region2: #{hand_gesture_cnn_forward.6} parent=0 // pred_check
    _
  $region3: #{hand_gesture_cnn_forward.6} parent=0 // pred_check_branch
    %9 = sbr.rel (0) target = $region5
  $region4: #{hand_gesture_cnn_forward.6} parent=0 // pred_region
    _
  $region5: #{hand_gesture_cnn_forward.6} parent=0 // pred_fallthru
    _
  // Predicated region
  $region6: #{hand_gesture_cnn_forward.6} parent=0 // pred_check
    _
  $region7: #{hand_gesture_cnn_forward.6} parent=0 // pred_check_branch
    %11 = sbr.rel (0) target = $region9
  $region8: #{hand_gesture_cnn_forward.6} parent=0 // pred_region
    _
  $region9: #{hand_gesture_cnn_forward.6} parent=0 // pred_fallthru
    _
  // Predicated region
  $region10: #{hand_gesture_cnn_forward.6} parent=0 // pred_check
    _
  $region11: #{hand_gesture_cnn_forward.6} parent=0 // pred_check_branch
    %13 = sbr.rel (0) target = $region13
  $region12: #{hand_gesture_cnn_forward.6} parent=0 // pred_region
    _
  $region13: #{hand_gesture_cnn_forward.6} parent=0 // pred_fallthru
    _
  %v14 = vld [vmem:[%s0] sm:$0xf]
  %v15 = vld [vmem:[%s0 + $0x4] sm:$0xf]
  %v16 = vld [vmem:[%s0 + $0x8] sm:$0xf]
  %v17 = vld [vmem:[%s0 + $0xc] sm:$0xf]
  %v18 = vld [vmem:[%s0 + $0x10] sm:$0xf]
  %v19 = vld [vmem:[%s0 + $0x14] sm:$0xf]
  %v20 = vld [vmem:[%s0 + $0x18] sm:$0xf]
  %v21 = vld [vmem:[%s0 + $0x1c] sm:$0xf]
  %v22 = vld [vmem:[%s0 + $0x20] sm:$0xf]
  %v23 = vld [vmem:[%s0 + $0x24] sm:$0xf]
  %v24 = vld [vmem:[%s0 + $0x28] sm:$0xf]
  %v25 = vld [vmem:[%s0 + $0x2c] sm:$0xf]
  %v26 = vld [vmem:[%s0 + $0x30] sm:$0xf]
  %v27 = vld [vmem:[%s0 + $0x34] sm:$0xf]
  %v28 = vld [vmem:[%s0 + $0x38] sm:$0xf]
  %v29 = vld [vmem:[%s0 + $0x3c] sm:$0xf]
  %v30 = vld [vmem:[%s1] sm:$0xf]
  %v31 = vld [vmem:[%s1 + $0x4] sm:$0xf]
  %v32 = vld [vmem:[%s1 + $0x8] sm:$0xf]
  %v33 = vld [vmem:[%s1 + $0xc] sm:$0xf]
  %v34 = vld [vmem:[%s1 + $0x10] sm:$0xf]
  %v35 = vld [vmem:[%s1 + $0x14] sm:$0xf]
  %v36 = vld [vmem:[%s1 + $0x18] sm:$0xf]
  %v37 = vld [vmem:[%s1 + $0x1c] sm:$0xf]
  %v38 = vld [vmem:[%s1 + $0x20] sm:$0xf]
  %v39 = vld [vmem:[%s1 + $0x24] sm:$0xf]
  %v40 = vld [vmem:[%s1 + $0x28] sm:$0xf]
  %v41 = vld [vmem:[%s1 + $0x2c] sm:$0xf]
  %v42 = vld [vmem:[%s1 + $0x30] sm:$0xf]
  %v43 = vld [vmem:[%s1 + $0x34] sm:$0xf]
  %v44 = vld [vmem:[%s1 + $0x38] sm:$0xf]
  %v45 = vld [vmem:[%s1 + $0x3c] sm:$0xf]
  %v46 = vld [vmem:[%s2] sm:$0x1]
  %v48 = vperm.slane %v46, 0
  %v66 = vunpack.c.l.b16 %v14
  %v67 = vunpack.c.l.b16 %v15
  %v68 = vunpack.c.l.b16 %v16
  %v69 = vunpack.c.l.b16 %v17
  %v70 = vunpack.c.l.b16 %v18
  %v71 = vunpack.c.l.b16 %v19
  %v72 = vunpack.c.l.b16 %v20
  %v73 = vunpack.c.l.b16 %v21
  %v74 = vunpack.c.l.b16 %v22
  %v75 = vunpack.c.l.b16 %v23
  %v76 = vunpack.c.l.b16 %v24
  %v77 = vunpack.c.l.b16 %v25
  %v78 = vunpack.c.l.b16 %v26
  %v79 = vunpack.c.l.b16 %v27
  %v80 = vunpack.c.l.b16 %v28
  %v81 = vunpack.c.l.b16 %v29
  %v82 = vpack.c.b16 %v67, %v66
  %v83 = vpack.c.b16 %v69, %v68
  %v84 = vpack.c.b16 %v71, %v70
  %v85 = vpack.c.b16 %v73, %v72
  %v86 = vpack.c.b16 %v75, %v74
  %v87 = vpack.c.b16 %v77, %v76
  %v88 = vpack.c.b16 %v79, %v78
  %v89 = vpack.c.b16 %v81, %v80
  %v114 = vunpack.c.l.b16 %v30
  %v115 = vunpack.c.l.b16 %v31
  %v116 = vunpack.c.l.b16 %v32
  %v117 = vunpack.c.l.b16 %v33
  %v118 = vunpack.c.l.b16 %v34
  %v119 = vunpack.c.l.b16 %v35
  %v120 = vunpack.c.l.b16 %v36
  %v121 = vunpack.c.l.b16 %v37
  %v122 = vunpack.c.l.b16 %v38
  %v123 = vunpack.c.l.b16 %v39
  %v124 = vunpack.c.l.b16 %v40
  %v125 = vunpack.c.l.b16 %v41
  %v126 = vunpack.c.l.b16 %v42
  %v127 = vunpack.c.l.b16 %v43
  %v128 = vunpack.c.l.b16 %v44
  %v129 = vunpack.c.l.b16 %v45
  %v130 = vpack.c.b16 %v115, %v114
  %v131 = vpack.c.b16 %v117, %v116
  %v132 = vpack.c.b16 %v119, %v118
  %v133 = vpack.c.b16 %v121, %v120
  %v134 = vpack.c.b16 %v123, %v122
  %v135 = vpack.c.b16 %v125, %v124
  %v136 = vpack.c.b16 %v127, %v126
  %v137 = vpack.c.b16 %v129, %v128
  %146 = vmatpush.bf16.msra.mxu0 %v137
  %147 = vmatpush.bf16.msra.mxu0 %v136
  %148 = vmatpush.bf16.msra.mxu0 %v135
  %149 = vmatpush.bf16.msra.mxu0 %v134
  %150 = vmatpush.bf16.msra.mxu0 %v133
  %151 = vmatpush.bf16.msra.mxu0 %v132
  %152 = vmatpush.bf16.msra.mxu0 %v131
  %153 = vmatpush.bf16.msra.mxu0 %v130
  %154 = vmatmul.bf16.gmra.mxu0 %v82
  %v155 = vpop.f32.mrf.mxu0
  %v156 = vadd.f32 %v48, %v155
  %v157 = vpop.f32.mrf.mxu0
  %v158 = vadd.f32 %v48, %v157
  %159 = vmatmul.bf16.gmra.mxu0 %v83
  %v160 = vpop.f32.mrf.mxu0
  %v161 = vadd.f32 %v48, %v160
  %v162 = vpop.f32.mrf.mxu0
  %v163 = vadd.f32 %v48, %v162
  %164 = vmatmul.bf16.gmra.mxu0 %v84
  %v165 = vpop.f32.mrf.mxu0
  %v166 = vadd.f32 %v48, %v165
  %v167 = vpop.f32.mrf.mxu0
  %v168 = vadd.f32 %v48, %v167
  %169 = vmatmul.bf16.gmra.mxu0 %v85
  %v170 = vpop.f32.mrf.mxu0
  %v171 = vadd.f32 %v48, %v170
  %v172 = vpop.f32.mrf.mxu0
  %v173 = vadd.f32 %v48, %v172
  %174 = vmatmul.bf16.gmra.mxu0 %v86
  %v175 = vpop.f32.mrf.mxu0
  %v176 = vadd.f32 %v48, %v175
  %v177 = vpop.f32.mrf.mxu0
  %v178 = vadd.f32 %v48, %v177
  %179 = vmatmul.bf16.gmra.mxu0 %v87
  %v180 = vpop.f32.mrf.mxu0
  %v181 = vadd.f32 %v48, %v180
  %v182 = vpop.f32.mrf.mxu0
  %v183 = vadd.f32 %v48, %v182
  %184 = vmatmul.bf16.gmra.mxu0 %v88
  %v185 = vpop.f32.mrf.mxu0
  %v186 = vadd.f32 %v48, %v185
  %v187 = vpop.f32.mrf.mxu0
  %v188 = vadd.f32 %v48, %v187
  %189 = vmatmul.bf16.gmra.mxu0 %v89
  %v190 = vpop.f32.mrf.mxu0
  %v191 = vadd.f32 %v48, %v190
  %v192 = vpop.f32.mrf.mxu0
  %v193 = vadd.f32 %v48, %v192
  %194 = vdwg.mxu0
  %v195 = vmax.f32 %v156, 0.0
  %v196 = vmax.f32 %v158, 0.0
  %v197 = vmax.f32 %v161, 0.0
  %v198 = vmax.f32 %v163, 0.0
  %v199 = vmax.f32 %v166, 0.0
  %v200 = vmax.f32 %v168, 0.0
  %v201 = vmax.f32 %v171, 0.0
  %v202 = vmax.f32 %v173, 0.0
  %v203 = vmax.f32 %v176, 0.0
  %v204 = vmax.f32 %v178, 0.0
  %v205 = vmax.f32 %v181, 0.0
  %v206 = vmax.f32 %v183, 0.0
  %v207 = vmax.f32 %v186, 0.0
  %v208 = vmax.f32 %v188, 0.0
  %v209 = vmax.f32 %v191, 0.0
  %v210 = vmax.f32 %v193, 0.0
  %v211 = vpack.c.bf16 %v195, %v195
  %v212 = vpack.c.bf16 %v196, %v196
  %v213 = vpack.c.bf16 %v197, %v197
  %v214 = vpack.c.bf16 %v198, %v198
  %v215 = vpack.c.bf16 %v199, %v199
  %v216 = vpack.c.bf16 %v200, %v200
  %v217 = vpack.c.bf16 %v201, %v201
  %v218 = vpack.c.bf16 %v202, %v202
  %v219 = vpack.c.bf16 %v203, %v203
  %v220 = vpack.c.bf16 %v204, %v204
  %v221 = vpack.c.bf16 %v205, %v205
  %v222 = vpack.c.bf16 %v206, %v206
  %v223 = vpack.c.bf16 %v207, %v207
  %v224 = vpack.c.bf16 %v208, %v208
  %v225 = vpack.c.bf16 %v209, %v209
  %v226 = vpack.c.bf16 %v210, %v210
  %227 = vst [vmem:[%s3] sm:$0xf] %v211
  %228 = vst [vmem:[%s3 + $0x4] sm:$0xf] %v212
  %229 = vst [vmem:[%s3 + $0x8] sm:$0xf] %v213
  %230 = vst [vmem:[%s3 + $0xc] sm:$0xf] %v214
  %231 = vst [vmem:[%s3 + $0x10] sm:$0xf] %v215
  %232 = vst [vmem:[%s3 + $0x14] sm:$0xf] %v216
  %233 = vst [vmem:[%s3 + $0x18] sm:$0xf] %v217
  %234 = vst [vmem:[%s3 + $0x1c] sm:$0xf] %v218
  %235 = vst [vmem:[%s3 + $0x20] sm:$0xf] %v219
  %236 = vst [vmem:[%s3 + $0x24] sm:$0xf] %v220
  %237 = vst [vmem:[%s3 + $0x28] sm:$0xf] %v221
  %238 = vst [vmem:[%s3 + $0x2c] sm:$0xf] %v222
  %239 = vst [vmem:[%s3 + $0x30] sm:$0xf] %v223
  %240 = vst [vmem:[%s3 + $0x34] sm:$0xf] %v224
  %241 = vst [vmem:[%s3 + $0x38] sm:$0xf] %v225
  %242 = vst [vmem:[%s3 + $0x3c] sm:$0xf] %v226
  // Predicated region
  $region14: #{hand_gesture_cnn_forward.6} parent=0 // pred_check
    _
  $region15: #{hand_gesture_cnn_forward.6} parent=0 // pred_check_branch
    %244 = sbr.rel (0) target = $region17
  $region16: #{hand_gesture_cnn_forward.6} parent=0 // pred_region
    _
  $region17: #{hand_gesture_cnn_forward.6} parent=0 // pred_fallthru
    _
  // Predicated region
  $region18: #{hand_gesture_cnn_forward.6} parent=0 // pred_check
    _
  $region19: #{hand_gesture_cnn_forward.6} parent=0 // pred_check_branch
    %246 = sbr.rel (0) target = $region21
  $region20: #{hand_gesture_cnn_forward.6} parent=0 // pred_region
    _
  $region21: #{hand_gesture_cnn_forward.6} parent=0 // pred_fallthru
    _

// kernel: hand_gesture_cnn_forward.7
$region0: #{hand_gesture_cnn_forward.7}
  #allocation0 [shape = 'u32[]', space=smem, size = 0x4, offset = 0x4, fixed_abs, tag = 'smem constant byte address 0x4 - core index']
  #allocation1 [shape = 'u32[72,128]{1,0:T(1,128)}', space=vmem, size = 0x9000, scoped, tag = 'internal scratch']
  %s0 = inlined_call_operand.vmem [shape: bf16[16,2,256], index: 0, kind: input, shape index: {}]
  %s1 = inlined_call_operand.vmem [shape: bf16[256,128], index: 1, kind: input, shape index: {}]
  %s2 = inlined_call_operand.vmem [shape: f32[1,128], index: 2, kind: input, shape index: {}]
  %s3 = inlined_call_operand.vmem [shape: bf16[16,128,128], index: 3, kind: input, shape index: {}]
  %s4 = inlined_call_operand.vmem [shape: f32[1,128], index: 4, kind: input, shape index: {}]
  %s5 = inlined_call_operand.vmem [shape: bf16[128,128], index: 5, kind: input, shape index: {}]
  %s6 = inlined_call_operand.vmem [shape: f32[1,128], index: 6, kind: input, shape index: {}]
  %s7 = inlined_call_operand.vmem [shape: bf16[128,256], index: 7, kind: input, shape index: {}]
  %s8 = inlined_call_operand.vmem [shape: f32[1,256], index: 8, kind: input, shape index: {}]
  %s9 = inlined_call_operand.vmem [shape: bf16[256,256], index: 9, kind: input, shape index: {}]
  %s10 = inlined_call_operand.vmem [shape: f32[1,256], index: 10, kind: input, shape index: {}]
  %s11 = inlined_call_operand.vmem [shape: bf16[256,128], index: 11, kind: input, shape index: {}]
  %s12 = inlined_call_operand.vmem [shape: f32[1,128], index: 12, kind: input, shape index: {}]
  %s13 = inlined_call_operand.vmem [shape: bf16[128,128], index: 13, kind: input, shape index: {}]
  %s14 = inlined_call_operand.vmem [shape: f32[1,128], index: 14, kind: input, shape index: {}]
  %s15 = inlined_call_operand.hbm [shape: f32[2,128], index: 15, kind: output, shape index: {}]
  %s16 = sld [smem:[#allocation0]]
  $region70: #{hand_gesture_cnn_forward.7} parent=0
    _
  %s18 = ssub.s32 1, %s16
  %s19 = scalar_select 0, %s18, %s16
  $region1: #{hand_gesture_cnn_forward.7} parent=0
    #allocation2 [shape = 'u8[1024]{0}', space=vmem, size = 0x400, scoped, tag = 'output window, operand 0, single buffered']
    #allocation3 [shape = 's32[1]{0}', space=sflag, size = 0x4, scoped, tag = 'scoped memory for hand_gesture_cnn_forward.7']
    %20 = vsyncpa [#allocation3], 0
    // Predicated region
    $region2: #{hand_gesture_cnn_forward.7} parent=1 // pred_check
      _
    $region3: #{hand_gesture_cnn_forward.7} parent=1 // pred_check_branch
      %22 = sbr.rel (0) target = $region5
    $region4: #{hand_gesture_cnn_forward.7} parent=1 // pred_region
      _
    $region5: #{hand_gesture_cnn_forward.7} parent=1 // pred_fallthru
      _
    // Predicated region
    $region6: #{hand_gesture_cnn_forward.7} parent=1 // pred_check
      _
    $region7: #{hand_gesture_cnn_forward.7} parent=1 // pred_check_branch
      %24 = sbr.rel (0) target = $region9
    $region8: #{hand_gesture_cnn_forward.7} parent=1 // pred_region
      _
    $region9: #{hand_gesture_cnn_forward.7} parent=1 // pred_fallthru
      _
    // Predicated region
    $region10: #{hand_gesture_cnn_forward.7} parent=1 // pred_check
      _
    $region11: #{hand_gesture_cnn_forward.7} parent=1 // pred_check_branch
      %26 = sbr.rel (0) target = $region13
    $region12: #{hand_gesture_cnn_forward.7} parent=1 // pred_region
      _
    $region13: #{hand_gesture_cnn_forward.7} parent=1 // pred_fallthru
      _
    // Predicated region
    $region14: #{hand_gesture_cnn_forward.7} parent=1 // pred_check
      _
    $region15: #{hand_gesture_cnn_forward.7} parent=1 // pred_check_branch
      %28 = sbr.rel (0) target = $region17
    $region16: #{hand_gesture_cnn_forward.7} parent=1 // pred_region
      _
    $region17: #{hand_gesture_cnn_forward.7} parent=1 // pred_fallthru
      _
    // Predicated region
    $region18: #{hand_gesture_cnn_forward.7} parent=1 // pred_check
      _
    $region19: #{hand_gesture_cnn_forward.7} parent=1 // pred_check_branch
      %30 = sbr.rel (0) target = $region21
    $region20: #{hand_gesture_cnn_forward.7} parent=1 // pred_region
      _
    $region21: #{hand_gesture_cnn_forward.7} parent=1 // pred_fallthru
      _
    // Predicated region
    $region22: #{hand_gesture_cnn_forward.7} parent=1 // pred_check
      _
    $region23: #{hand_gesture_cnn_forward.7} parent=1 // pred_check_branch
      %32 = sbr.rel (0) target = $region25
    $region24: #{hand_gesture_cnn_forward.7} parent=1 // pred_region
      _
    $region25: #{hand_gesture_cnn_forward.7} parent=1 // pred_fallthru
      _
    // Predicated region
    $region26: #{hand_gesture_cnn_forward.7} parent=1 // pred_check
      _
    $region27: #{hand_gesture_cnn_forward.7} parent=1 // pred_check_branch
      %34 = sbr.rel (0) target = $region29
    $region28: #{hand_gesture_cnn_forward.7} parent=1 // pred_region
      _
    $region29: #{hand_gesture_cnn_forward.7} parent=1 // pred_fallthru
      _
    // Predicated region
    $region30: #{hand_gesture_cnn_forward.7} parent=1 // pred_check
      _
    $region31: #{hand_gesture_cnn_forward.7} parent=1 // pred_check_branch
      %36 = sbr.rel (0) target = $region33
    $region32: #{hand_gesture_cnn_forward.7} parent=1 // pred_region
      _
    $region33: #{hand_gesture_cnn_forward.7} parent=1 // pred_fallthru
      _
    // Predicated region
    $region34: #{hand_gesture_cnn_forward.7} parent=1 // pred_check
      _
    $region35: #{hand_gesture_cnn_forward.7} parent=1 // pred_check_branch
      %38 = sbr.rel (0) target = $region37
    $region36: #{hand_gesture_cnn_forward.7} parent=1 // pred_region
      _
    $region37: #{hand_gesture_cnn_forward.7} parent=1 // pred_fallthru
      _
    // Predicated region
    $region38: #{hand_gesture_cnn_forward.7} parent=1 // pred_check
      _
    $region39: #{hand_gesture_cnn_forward.7} parent=1 // pred_check_branch
      %40 = sbr.rel (0) target = $region41
    $region40: #{hand_gesture_cnn_forward.7} parent=1 // pred_region
      _
    $region41: #{hand_gesture_cnn_forward.7} parent=1 // pred_fallthru
      _
    // Predicated region
    $region42: #{hand_gesture_cnn_forward.7} parent=1 // pred_check
      _
    $region43: #{hand_gesture_cnn_forward.7} parent=1 // pred_check_branch
      %42 = sbr.rel (0) target = $region45
    $region44: #{hand_gesture_cnn_forward.7} parent=1 // pred_region
      _
    $region45: #{hand_gesture_cnn_forward.7} parent=1 // pred_fallthru
      _
    // Predicated region
    $region46: #{hand_gesture_cnn_forward.7} parent=1 // pred_check
      _
    $region47: #{hand_gesture_cnn_forward.7} parent=1 // pred_check_branch
      %44 = sbr.rel (0) target = $region49
    $region48: #{hand_gesture_cnn_forward.7} parent=1 // pred_region
      _
    $region49: #{hand_gesture_cnn_forward.7} parent=1 // pred_fallthru
      _
    // Predicated region
    $region50: #{hand_gesture_cnn_forward.7} parent=1 // pred_check
      _
    $region51: #{hand_gesture_cnn_forward.7} parent=1 // pred_check_branch
      %46 = sbr.rel (0) target = $region53
    $region52: #{hand_gesture_cnn_forward.7} parent=1 // pred_region
      _
    $region53: #{hand_gesture_cnn_forward.7} parent=1 // pred_fallthru
      _
    // Predicated region
    $region54: #{hand_gesture_cnn_forward.7} parent=1 // pred_check
      _
    $region55: #{hand_gesture_cnn_forward.7} parent=1 // pred_check_branch
      %48 = sbr.rel (0) target = $region57
    $region56: #{hand_gesture_cnn_forward.7} parent=1 // pred_region
      _
    $region57: #{hand_gesture_cnn_forward.7} parent=1 // pred_fallthru
      _
    // Predicated region
    $region58: #{hand_gesture_cnn_forward.7} parent=1 // pred_check
      _
    $region59: #{hand_gesture_cnn_forward.7} parent=1 // pred_check_branch
      %50 = sbr.rel (0) target = $region61
    $region60: #{hand_gesture_cnn_forward.7} parent=1 // pred_region
      _
    $region61: #{hand_gesture_cnn_forward.7} parent=1 // pred_fallthru
      _
    %v51 = vld [vmem:[%s0] sm:$0x3]
    %v52 = vld [vmem:[%s1] sm:$0xf]
    %v53 = vld [vmem:[%s1 + $0x4] sm:$0xf]
    %v54 = vld [vmem:[%s1 + $0x8] sm:$0xf]
    %v55 = vld [vmem:[%s1 + $0xc] sm:$0xf]
    %v56 = vld [vmem:[%s1 + $0x10] sm:$0xf]
    %v57 = vld [vmem:[%s1 + $0x14] sm:$0xf]
    %v58 = vld [vmem:[%s1 + $0x18] sm:$0xf]
    %v59 = vld [vmem:[%s1 + $0x1c] sm:$0xf]
    %v60 = vld [vmem:[%s1 + $0x20] sm:$0xf]
    %v61 = vld [vmem:[%s1 + $0x24] sm:$0xf]
    %v62 = vld [vmem:[%s1 + $0x28] sm:$0xf]
    %v63 = vld [vmem:[%s1 + $0x2c] sm:$0xf]
    %v64 = vld [vmem:[%s1 + $0x30] sm:$0xf]
    %v65 = vld [vmem:[%s1 + $0x34] sm:$0xf]
    %v66 = vld [vmem:[%s1 + $0x38] sm:$0xf]
    %v67 = vld [vmem:[%s1 + $0x3c] sm:$0xf]
    %v68 = vld [vmem:[%s1 + $0x40] sm:$0xf]
    %v69 = vld [vmem:[%s1 + $0x44] sm:$0xf]
    %v70 = vld [vmem:[%s1 + $0x48] sm:$0xf]
    %v71 = vld [vmem:[%s1 + $0x4c] sm:$0xf]
    %v72 = vld [vmem:[%s1 + $0x50] sm:$0xf]
    %v73 = vld [vmem:[%s1 + $0x54] sm:$0xf]
    %v74 = vld [vmem:[%s1 + $0x58] sm:$0xf]
    %v75 = vld [vmem:[%s1 + $0x5c] sm:$0xf]
    %v76 = vld [vmem:[%s1 + $0x60] sm:$0xf]
    %v77 = vld [vmem:[%s1 + $0x64] sm:$0xf]
    %v78 = vld [vmem:[%s1 + $0x68] sm:$0xf]
    %v79 = vld [vmem:[%s1 + $0x6c] sm:$0xf]
    %v80 = vld [vmem:[%s1 + $0x70] sm:$0xf]
    %v81 = vld [vmem:[%s1 + $0x74] sm:$0xf]
    %v82 = vld [vmem:[%s1 + $0x78] sm:$0xf]
    %v83 = vld [vmem:[%s1 + $0x7c] sm:$0xf]
    %v84 = vld [vmem:[%s2] sm:$0x1]
    %v86 = vperm.slane %v84, 0
    %89 = vst [vmem:[#allocation1] ss:$9 sm:$0xff] %v51
    %v90 = vld [vmem:[#allocation1] sm:$0xff]
    %v91 = vld [vmem:[#allocation1 + $0x9] sm:$0xff]
    %v126 = vunpack.c.l.b16 %v52
    %v127 = vunpack.c.l.b16 %v53
    %v128 = vunpack.c.l.b16 %v54
    %v129 = vunpack.c.l.b16 %v55
    %v130 = vunpack.c.l.b16 %v56
    %v131 = vunpack.c.l.b16 %v57
    %v132 = vunpack.c.l.b16 %v58
    %v133 = vunpack.c.l.b16 %v59
    %v134 = vunpack.c.l.b16 %v60
    %v135 = vunpack.c.l.b16 %v61
    %v136 = vunpack.c.l.b16 %v62
    %v137 = vunpack.c.l.b16 %v63
    %v138 = vunpack.c.l.b16 %v64
    %v139 = vunpack.c.l.b16 %v65
    %v140 = vunpack.c.l.b16 %v66
    %v141 = vunpack.c.l.b16 %v67
    %v142 = vunpack.c.l.b16 %v68
    %v143 = vunpack.c.l.b16 %v69
    %v144 = vunpack.c.l.b16 %v70
    %v145 = vunpack.c.l.b16 %v71
    %v146 = vunpack.c.l.b16 %v72
    %v147 = vunpack.c.l.b16 %v73
    %v148 = vunpack.c.l.b16 %v74
    %v149 = vunpack.c.l.b16 %v75
    %v150 = vunpack.c.l.b16 %v76
    %v151 = vunpack.c.l.b16 %v77
    %v152 = vunpack.c.l.b16 %v78
    %v153 = vunpack.c.l.b16 %v79
    %v154 = vunpack.c.l.b16 %v80
    %v155 = vunpack.c.l.b16 %v81
    %v156 = vunpack.c.l.b16 %v82
    %v157 = vunpack.c.l.b16 %v83
    %v158 = vpack.c.b16 %v127, %v126
    %v159 = vpack.c.b16 %v129, %v128
    %v160 = vpack.c.b16 %v131, %v130
    %v161 = vpack.c.b16 %v133, %v132
    %v162 = vpack.c.b16 %v135, %v134
    %v163 = vpack.c.b16 %v137, %v136
    %v164 = vpack.c.b16 %v139, %v138
    %v165 = vpack.c.b16 %v141, %v140
    %v166 = vpack.c.b16 %v143, %v142
    %v167 = vpack.c.b16 %v145, %v144
    %v168 = vpack.c.b16 %v147, %v146
    %v169 = vpack.c.b16 %v149, %v148
    %v170 = vpack.c.b16 %v151, %v150
    %v171 = vpack.c.b16 %v153, %v152
    %v172 = vpack.c.b16 %v155, %v154
    %v173 = vpack.c.b16 %v157, %v156
    %190 = vmatpush.bf16.msra.mxu0 %v165
    %191 = vmatpush.bf16.msra.mxu0 %v164
    %192 = vmatpush.bf16.msra.mxu0 %v163
    %193 = vmatpush.bf16.msra.mxu0 %v162
    %194 = vmatpush.bf16.msra.mxu0 %v161
    %195 = vmatpush.bf16.msra.mxu0 %v160
    %196 = vmatpush.bf16.msra.mxu0 %v159
    %197 = vmatpush.bf16.msra.mxu0 %v158
    %198 = vmatmul.bf16.gmra.mxu0 %v90
    %v199 = vpop.f32.mrf.mxu0
    %v200 = vadd.f32 %v86, %v199
    %v201 = vpop.f32.mrf.mxu0
    %202 = vdwg.mxu0
    %203 = vmatpush.bf16.msra.mxu0 %v173
    %204 = vmatpush.bf16.msra.mxu0 %v172
    %205 = vmatpush.bf16.msra.mxu0 %v171
    %206 = vmatpush.bf16.msra.mxu0 %v170
    %207 = vmatpush.bf16.msra.mxu0 %v169
    %208 = vmatpush.bf16.msra.mxu0 %v168
    %209 = vmatpush.bf16.msra.mxu0 %v167
    %210 = vmatpush.bf16.msra.mxu0 %v166
    %211 = vmatmul.bf16.gmra.mxu0 %v91
    %v212 = vpop.f32.mrf.mxu0
    %v213 = vadd.f32 %v200, %v212
    %v214 = vpop.f32.mrf.mxu0
    %215 = vdwg.mxu0
    %v216 = vmax.f32 %v213, 0.0
    %v217 = vpack.c.bf16 %v216, %v216
    %v218 = vld [vmem:[%s3] sm:$0xf]
    %v219 = vld [vmem:[%s3 + $0x4] sm:$0xf]
    %v220 = vld [vmem:[%s3 + $0x8] sm:$0xf]
    %v221 = vld [vmem:[%s3 + $0xc] sm:$0xf]
    %v222 = vld [vmem:[%s3 + $0x10] sm:$0xf]
    %v223 = vld [vmem:[%s3 + $0x14] sm:$0xf]
    %v224 = vld [vmem:[%s3 + $0x18] sm:$0xf]
    %v225 = vld [vmem:[%s3 + $0x1c] sm:$0xf]
    %v226 = vld [vmem:[%s3 + $0x20] sm:$0xf]
    %v227 = vld [vmem:[%s3 + $0x24] sm:$0xf]
    %v228 = vld [vmem:[%s3 + $0x28] sm:$0xf]
    %v229 = vld [vmem:[%s3 + $0x2c] sm:$0xf]
    %v230 = vld [vmem:[%s3 + $0x30] sm:$0xf]
    %v231 = vld [vmem:[%s3 + $0x34] sm:$0xf]
    %v232 = vld [vmem:[%s3 + $0x38] sm:$0xf]
    %v233 = vld [vmem:[%s3 + $0x3c] sm:$0xf]
    %s234 = scalar_lea.vmem %s0, 2
    %v235 = vld [vmem:[%s234] sm:$0x3]
    %237 = vst [vmem:[#allocation1] ss:$9 sm:$0xff] %v235
    %v238 = vld [vmem:[#allocation1] sm:$0xff]
    %v239 = vld [vmem:[#allocation1 + $0x9] sm:$0xff]
    %242 = vmatpush.bf16.msra.mxu0 %v165
    %243 = vmatpush.bf16.msra.mxu0 %v164
    %244 = vmatpush.bf16.msra.mxu0 %v163
    %245 = vmatpush.bf16.msra.mxu0 %v162
    %246 = vmatpush.bf16.msra.mxu0 %v161
    %247 = vmatpush.bf16.msra.mxu0 %v160
    %248 = vmatpush.bf16.msra.mxu0 %v159
    %249 = vmatpush.bf16.msra.mxu0 %v158
    %250 = vmatmul.bf16.gmra.mxu0 %v238
    %v251 = vpop.f32.mrf.mxu0
    %v252 = vadd.f32 %v86, %v251
    %v253 = vpop.f32.mrf.mxu0
    %254 = vdwg.mxu0
    %255 = vmatpush.bf16.msra.mxu0 %v173
    %256 = vmatpush.bf16.msra.mxu0 %v172
    %257 = vmatpush.bf16.msra.mxu0 %v171
    %258 = vmatpush.bf16.msra.mxu0 %v170
    %259 = vmatpush.bf16.msra.mxu0 %v169
    %260 = vmatpush.bf16.msra.mxu0 %v168
    %261 = vmatpush.bf16.msra.mxu0 %v167
    %262 = vmatpush.bf16.msra.mxu0 %v166
    %263 = vmatmul.bf16.gmra.mxu0 %v239
    %v264 = vpop.f32.mrf.mxu0
    %v265 = vadd.f32 %v252, %v264
    %v266 = vpop.f32.mrf.mxu0
    %267 = vdwg.mxu0
    %v268 = vmax.f32 %v265, 0.0
    %v269 = vpack.c.bf16 %v268, %v268
    %s270 = scalar_lea.vmem %s3, 64
    %v271 = vld [vmem:[%s270] sm:$0xf]
    %v272 = vld [vmem:[%s270 + $0x4] sm:$0xf]
    %v273 = vld [vmem:[%s270 + $0x8] sm:$0xf]
    %v274 = vld [vmem:[%s270 + $0xc] sm:$0xf]
    %v275 = vld [vmem:[%s270 + $0x10] sm:$0xf]
    %v276 = vld [vmem:[%s270 + $0x14] sm:$0xf]
    %v277 = vld [vmem:[%s270 + $0x18] sm:$0xf]
    %v278 = vld [vmem:[%s270 + $0x1c] sm:$0xf]
    %v279 = vld [vmem:[%s270 + $0x20] sm:$0xf]
    %v280 = vld [vmem:[%s270 + $0x24] sm:$0xf]
    %v281 = vld [vmem:[%s270 + $0x28] sm:$0xf]
    %v282 = vld [vmem:[%s270 + $0x2c] sm:$0xf]
    %v283 = vld [vmem:[%s270 + $0x30] sm:$0xf]
    %v284 = vld [vmem:[%s270 + $0x34] sm:$0xf]
    %v285 = vld [vmem:[%s270 + $0x38] sm:$0xf]
    %v286 = vld [vmem:[%s270 + $0x3c] sm:$0xf]
    %v303 = vunpack.c.l.b16 %v271
    %v304 = vunpack.c.l.b16 %v272
    %v305 = vunpack.c.l.b16 %v273
    %v306 = vunpack.c.l.b16 %v274
    %v307 = vunpack.c.l.b16 %v275
    %v308 = vunpack.c.l.b16 %v276
    %v309 = vunpack.c.l.b16 %v277
    %v310 = vunpack.c.l.b16 %v278
    %v311 = vunpack.c.l.b16 %v279
    %v312 = vunpack.c.l.b16 %v280
    %v313 = vunpack.c.l.b16 %v281
    %v314 = vunpack.c.l.b16 %v282
    %v315 = vunpack.c.l.b16 %v283
    %v316 = vunpack.c.l.b16 %v284
    %v317 = vunpack.c.l.b16 %v285
    %v318 = vunpack.c.l.b16 %v286
    %v319 = vpack.c.b16 %v304, %v303
    %v320 = vpack.c.b16 %v306, %v305
    %v321 = vpack.c.b16 %v308, %v307
    %v322 = vpack.c.b16 %v310, %v309
    %v323 = vpack.c.b16 %v312, %v311
    %v324 = vpack.c.b16 %v314, %v313
    %v325 = vpack.c.b16 %v316, %v315
    %v326 = vpack.c.b16 %v318, %v317
    %335 = vmatpush.bf16.msra.mxu0 %v326
    %336 = vmatpush.bf16.msra.mxu0 %v325
    %337 = vmatpush.bf16.msra.mxu0 %v324
    %338 = vmatpush.bf16.msra.mxu0 %v323
    %339 = vmatpush.bf16.msra.mxu0 %v322
    %340 = vmatpush.bf16.msra.mxu0 %v321
    %341 = vmatpush.bf16.msra.mxu0 %v320
    %342 = vmatpush.bf16.msra.mxu0 %v319
    %343 = vmatmul.bf16.gmra.mxu0 %v269
    %v344 = vpop.f32.mrf.mxu0
    %v345 = vadd.f32 0.0, %v344
    %v346 = vpop.f32.mrf.mxu0
    %347 = vdwg.mxu0
    %v364 = vunpack.c.l.b16 %v218
    %v365 = vunpack.c.l.b16 %v219
    %v366 = vunpack.c.l.b16 %v220
    %v367 = vunpack.c.l.b16 %v221
    %v368 = vunpack.c.l.b16 %v222
    %v369 = vunpack.c.l.b16 %v223
    %v370 = vunpack.c.l.b16 %v224
    %v371 = vunpack.c.l.b16 %v225
    %v372 = vunpack.c.l.b16 %v226
    %v373 = vunpack.c.l.b16 %v227
    %v374 = vunpack.c.l.b16 %v228
    %v375 = vunpack.c.l.b16 %v229
    %v376 = vunpack.c.l.b16 %v230
    %v377 = vunpack.c.l.b16 %v231
    %v378 = vunpack.c.l.b16 %v232
    %v379 = vunpack.c.l.b16 %v233
    %v380 = vpack.c.b16 %v365, %v364
    %v381 = vpack.c.b16 %v367, %v366
    %v382 = vpack.c.b16 %v369, %v368
    %v383 = vpack.c.b16 %v371, %v370
    %v384 = vpack.c.b16 %v373, %v372
    %v385 = vpack.c.b16 %v375, %v374
    %v386 = vpack.c.b16 %v377, %v376
    %v387 = vpack.c.b16 %v379, %v378
    %396 = vmatpush.bf16.msra.mxu0 %v387
    %397 = vmatpush.bf16.msra.mxu0 %v386
    %398 = vmatpush.bf16.msra.mxu0 %v385
    %399 = vmatpush.bf16.msra.mxu0 %v384
    %400 = vmatpush.bf16.msra.mxu0 %v383
    %401 = vmatpush.bf16.msra.mxu0 %v382
    %402 = vmatpush.bf16.msra.mxu0 %v381
    %403 = vmatpush.bf16.msra.mxu0 %v380
    %404 = vmatmul.bf16.gmra.mxu0 %v217
    %v405 = vpop.f32.mrf.mxu0
    %v406 = vadd.f32 %v345, %v405
    %v407 = vpop.f32.mrf.mxu0
    %408 = vdwg.mxu0
    %s409 = scalar_lea.vmem %s0, 4
    %v410 = vld [vmem:[%s409] sm:$0x3]
    %412 = vst [vmem:[#allocation1] ss:$9 sm:$0xff] %v410
    %v413 = vld [vmem:[#allocation1] sm:$0xff]
    %v414 = vld [vmem:[#allocation1 + $0x9] sm:$0xff]
    %417 = vmatpush.bf16.msra.mxu0 %v165
    %418 = vmatpush.bf16.msra.mxu0 %v164
    %419 = vmatpush.bf16.msra.mxu0 %v163
    %420 = vmatpush.bf16.msra.mxu0 %v162
    %421 = vmatpush.bf16.msra.mxu0 %v161
    %422 = vmatpush.bf16.msra.mxu0 %v160
    %423 = vmatpush.bf16.msra.mxu0 %v159
    %424 = vmatpush.bf16.msra.mxu0 %v158
    %425 = vmatmul.bf16.gmra.mxu0 %v413
    %v426 = vpop.f32.mrf.mxu0
    %v427 = vadd.f32 %v86, %v426
    %v428 = vpop.f32.mrf.mxu0
    %429 = vdwg.mxu0
    %430 = vmatpush.bf16.msra.mxu0 %v173
    %431 = vmatpush.bf16.msra.mxu0 %v172
    %432 = vmatpush.bf16.msra.mxu0 %v171
    %433 = vmatpush.bf16.msra.mxu0 %v170
    %434 = vmatpush.bf16.msra.mxu0 %v169
    %435 = vmatpush.bf16.msra.mxu0 %v168
    %436 = vmatpush.bf16.msra.mxu0 %v167
    %437 = vmatpush.bf16.msra.mxu0 %v166
    %438 = vmatmul.bf16.gmra.mxu0 %v414
    %v439 = vpop.f32.mrf.mxu0
    %v440 = vadd.f32 %v427, %v439
    %v441 = vpop.f32.mrf.mxu0
    %442 = vdwg.mxu0
    %v443 = vmax.f32 %v440, 0.0
    %v444 = vpack.c.bf16 %v443, %v443
    %s445 = scalar_lea.vmem %s3, 128
    %v446 = vld [vmem:[%s445] sm:$0xf]
    %v447 = vld [vmem:[%s445 + $0x4] sm:$0xf]
    %v448 = vld [vmem:[%s445 + $0x8] sm:$0xf]
    %v449 = vld [vmem:[%s445 + $0xc] sm:$0xf]
    %v450 = vld [vmem:[%s445 + $0x10] sm:$0xf]
    %v451 = vld [vmem:[%s445 + $0x14] sm:$0xf]
    %v452 = vld [vmem:[%s445 + $0x18] sm:$0xf]
    %v453 = vld [vmem:[%s445 + $0x1c] sm:$0xf]
    %v454 = vld [vmem:[%s445 + $0x20] sm:$0xf]
    %v455 = vld [vmem:[%s445 + $0x24] sm:$0xf]
    %v456 = vld [vmem:[%s445 + $0x28] sm:$0xf]
    %v457 = vld [vmem:[%s445 + $0x2c] sm:$0xf]
    %v458 = vld [vmem:[%s445 + $0x30] sm:$0xf]
    %v459 = vld [vmem:[%s445 + $0x34] sm:$0xf]
    %v460 = vld [vmem:[%s445 + $0x38] sm:$0xf]
    %v461 = vld [vmem:[%s445 + $0x3c] sm:$0xf]
    %v478 = vunpack.c.l.b16 %v446
    %v479 = vunpack.c.l.b16 %v447
    %v480 = vunpack.c.l.b16 %v448
    %v481 = vunpack.c.l.b16 %v449
    %v482 = vunpack.c.l.b16 %v450
    %v483 = vunpack.c.l.b16 %v451
    %v484 = vunpack.c.l.b16 %v452
    %v485 = vunpack.c.l.b16 %v453
    %v486 = vunpack.c.l.b16 %v454
    %v487 = vunpack.c.l.b16 %v455
    %v488 = vunpack.c.l.b16 %v456
    %v489 = vunpack.c.l.b16 %v457
    %v490 = vunpack.c.l.b16 %v458
    %v491 = vunpack.c.l.b16 %v459
    %v492 = vunpack.c.l.b16 %v460
    %v493 = vunpack.c.l.b16 %v461
    %v494 = vpack.c.b16 %v479, %v478
    %v495 = vpack.c.b16 %v481, %v480
    %v496 = vpack.c.b16 %v483, %v482
    %v497 = vpack.c.b16 %v485, %v484
    %v498 = vpack.c.b16 %v487, %v486
    %v499 = vpack.c.b16 %v489, %v488
    %v500 = vpack.c.b16 %v491, %v490
    %v501 = vpack.c.b16 %v493, %v492
    %510 = vmatpush.bf16.msra.mxu0 %v501
    %511 = vmatpush.bf16.msra.mxu0 %v500
    %512 = vmatpush.bf16.msra.mxu0 %v499
    %513 = vmatpush.bf16.msra.mxu0 %v498
    %514 = vmatpush.bf16.msra.mxu0 %v497
    %515 = vmatpush.bf16.msra.mxu0 %v496
    %516 = vmatpush.bf16.msra.mxu0 %v495
    %517 = vmatpush.bf16.msra.mxu0 %v494
    %518 = vmatmul.bf16.gmra.mxu0 %v444
    %v519 = vpop.f32.mrf.mxu0
    %v520 = vadd.f32 0.0, %v519
    %v521 = vpop.f32.mrf.mxu0
    %522 = vdwg.mxu0
    %v523 = vadd.f32 %v406, %v520
    %s524 = scalar_lea.vmem %s0, 6
    %v525 = vld [vmem:[%s524] sm:$0x3]
    %527 = vst [vmem:[#allocation1] ss:$9 sm:$0xff] %v525
    %v528 = vld [vmem:[#allocation1] sm:$0xff]
    %v529 = vld [vmem:[#allocation1 + $0x9] sm:$0xff]
    %532 = vmatpush.bf16.msra.mxu0 %v165
    %533 = vmatpush.bf16.msra.mxu0 %v164
    %534 = vmatpush.bf16.msra.mxu0 %v163
    %535 = vmatpush.bf16.msra.mxu0 %v162
    %536 = vmatpush.bf16.msra.mxu0 %v161
    %537 = vmatpush.bf16.msra.mxu0 %v160
    %538 = vmatpush.bf16.msra.mxu0 %v159
    %539 = vmatpush.bf16.msra.mxu0 %v158
    %540 = vmatmul.bf16.gmra.mxu0 %v528
    %v541 = vpop.f32.mrf.mxu0
    %v542 = vadd.f32 %v86, %v541
    %v543 = vpop.f32.mrf.mxu0
    %544 = vdwg.mxu0
    %545 = vmatpush.bf16.msra.mxu0 %v173
    %546 = vmatpush.bf16.msra.mxu0 %v172
    %547 = vmatpush.bf16.msra.mxu0 %v171
    %548 = vmatpush.bf16.msra.mxu0 %v170
    %549 = vmatpush.bf16.msra.mxu0 %v169
    %550 = vmatpush.bf16.msra.mxu0 %v168
    %551 = vmatpush.bf16.msra.mxu0 %v167
    %552 = vmatpush.bf16.msra.mxu0 %v166
    %553 = vmatmul.bf16.gmra.mxu0 %v529
    %v554 = vpop.f32.mrf.mxu0
    %v555 = vadd.f32 %v542, %v554
    %v556 = vpop.f32.mrf.mxu0
    %557 = vdwg.mxu0
    %v558 = vmax.f32 %v555, 0.0
    %v559 = vpack.c.bf16 %v558, %v558
    %s560 = scalar_lea.vmem %s3, 192
    %v561 = vld [vmem:[%s560] sm:$0xf]
    %v562 = vld [vmem:[%s560 + $0x4] sm:$0xf]
    %v563 = vld [vmem:[%s560 + $0x8] sm:$0xf]
    %v564 = vld [vmem:[%s560 + $0xc] sm:$0xf]
    %v565 = vld [vmem:[%s560 + $0x10] sm:$0xf]
    %v566 = vld [vmem:[%s560 + $0x14] sm:$0xf]
    %v567 = vld [vmem:[%s560 + $0x18] sm:$0xf]
    %v568 = vld [vmem:[%s560 + $0x1c] sm:$0xf]
    %v569 = vld [vmem:[%s560 + $0x20] sm:$0xf]
    %v570 = vld [vmem:[%s560 + $0x24] sm:$0xf]
    %v571 = vld [vmem:[%s560 + $0x28] sm:$0xf]
    %v572 = vld [vmem:[%s560 + $0x2c] sm:$0xf]
    %v573 = vld [vmem:[%s560 + $0x30] sm:$0xf]
    %v574 = vld [vmem:[%s560 + $0x34] sm:$0xf]
    %v575 = vld [vmem:[%s560 + $0x38] sm:$0xf]
    %v576 = vld [vmem:[%s560 + $0x3c] sm:$0xf]
    %v593 = vunpack.c.l.b16 %v561
    %v594 = vunpack.c.l.b16 %v562
    %v595 = vunpack.c.l.b16 %v563
    %v596 = vunpack.c.l.b16 %v564
    %v597 = vunpack.c.l.b16 %v565
    %v598 = vunpack.c.l.b16 %v566
    %v599 = vunpack.c.l.b16 %v567
    %v600 = vunpack.c.l.b16 %v568
    %v601 = vunpack.c.l.b16 %v569
    %v602 = vunpack.c.l.b16 %v570
    %v603 = vunpack.c.l.b16 %v571
    %v604 = vunpack.c.l.b16 %v572
    %v605 = vunpack.c.l.b16 %v573
    %v606 = vunpack.c.l.b16 %v574
    %v607 = vunpack.c.l.b16 %v575
    %v608 = vunpack.c.l.b16 %v576
    %v609 = vpack.c.b16 %v594, %v593
    %v610 = vpack.c.b16 %v596, %v595
    %v611 = vpack.c.b16 %v598, %v597
    %v612 = vpack.c.b16 %v600, %v599
    %v613 = vpack.c.b16 %v602, %v601
    %v614 = vpack.c.b16 %v604, %v603
    %v615 = vpack.c.b16 %v606, %v605
    %v616 = vpack.c.b16 %v608, %v607
    %625 = vmatpush.bf16.msra.mxu0 %v616
    %626 = vmatpush.bf16.msra.mxu0 %v615
    %627 = vmatpush.bf16.msra.mxu0 %v614
    %628 = vmatpush.bf16.msra.mxu0 %v613
    %629 = vmatpush.bf16.msra.mxu0 %v612
    %630 = vmatpush.bf16.msra.mxu0 %v611
    %631 = vmatpush.bf16.msra.mxu0 %v610
    %632 = vmatpush.bf16.msra.mxu0 %v609
    %633 = vmatmul.bf16.gmra.mxu0 %v559
    %v634 = vpop.f32.mrf.mxu0
    %v635 = vadd.f32 0.0, %v634
    %v636 = vpop.f32.mrf.mxu0
    %637 = vdwg.mxu0
    %v638 = vadd.f32 %v523, %v635
    %s639 = scalar_lea.vmem %s0, 8
    %v640 = vld [vmem:[%s639] sm:$0x3]
    %642 = vst [vmem:[#allocation1] ss:$9 sm:$0xff] %v640
    %v643 = vld [vmem:[#allocation1] sm:$0xff]
    %v644 = vld [vmem:[#allocation1 + $0x9] sm:$0xff]
    %647 = vmatpush.bf16.msra.mxu0 %v165
    %648 = vmatpush.bf16.msra.mxu0 %v164
    %649 = vmatpush.bf16.msra.mxu0 %v163
    %650 = vmatpush.bf16.msra.mxu0 %v162
    %651 = vmatpush.bf16.msra.mxu0 %v161
    %652 = vmatpush.bf16.msra.mxu0 %v160
    %653 = vmatpush.bf16.msra.mxu0 %v159
    %654 = vmatpush.bf16.msra.mxu0 %v158
    %655 = vmatmul.bf16.gmra.mxu0 %v643
    %v656 = vpop.f32.mrf.mxu0
    %v657 = vadd.f32 %v86, %v656
    %v658 = vpop.f32.mrf.mxu0
    %659 = vdwg.mxu0
    %660 = vmatpush.bf16.msra.mxu0 %v173
    %661 = vmatpush.bf16.msra.mxu0 %v172
    %662 = vmatpush.bf16.msra.mxu0 %v171
    %663 = vmatpush.bf16.msra.mxu0 %v170
    %664 = vmatpush.bf16.msra.mxu0 %v169
    %665 = vmatpush.bf16.msra.mxu0 %v168
    %666 = vmatpush.bf16.msra.mxu0 %v167
    %667 = vmatpush.bf16.msra.mxu0 %v166
    %668 = vmatmul.bf16.gmra.mxu0 %v644
    %v669 = vpop.f32.mrf.mxu0
    %v670 = vadd.f32 %v657, %v669
    %v671 = vpop.f32.mrf.mxu0
    %672 = vdwg.mxu0
    %v673 = vmax.f32 %v670, 0.0
    %v674 = vpack.c.bf16 %v673, %v673
    %s675 = scalar_lea.vmem %s3, 256
    %v676 = vld [vmem:[%s675] sm:$0xf]
    %v677 = vld [vmem:[%s675 + $0x4] sm:$0xf]
    %v678 = vld [vmem:[%s675 + $0x8] sm:$0xf]
    %v679 = vld [vmem:[%s675 + $0xc] sm:$0xf]
    %v680 = vld [vmem:[%s675 + $0x10] sm:$0xf]
    %v681 = vld [vmem:[%s675 + $0x14] sm:$0xf]
    %v682 = vld [vmem:[%s675 + $0x18] sm:$0xf]
    %v683 = vld [vmem:[%s675 + $0x1c] sm:$0xf]
    %v684 = vld [vmem:[%s675 + $0x20] sm:$0xf]
    %v685 = vld [vmem:[%s675 + $0x24] sm:$0xf]
    %v686 = vld [vmem:[%s675 + $0x28] sm:$0xf]
    %v687 = vld [vmem:[%s675 + $0x2c] sm:$0xf]
    %v688 = vld [vmem:[%s675 + $0x30] sm:$0xf]
    %v689 = vld [vmem:[%s675 + $0x34] sm:$0xf]
    %v690 = vld [vmem:[%s675 + $0x38] sm:$0xf]
    %v691 = vld [vmem:[%s675 + $0x3c] sm:$0xf]
    %v708 = vunpack.c.l.b16 %v676
    %v709 = vunpack.c.l.b16 %v677
    %v710 = vunpack.c.l.b16 %v678
    %v711 = vunpack.c.l.b16 %v679
    %v712 = vunpack.c.l.b16 %v680
    %v713 = vunpack.c.l.b16 %v681
    %v714 = vunpack.c.l.b16 %v682
    %v715 = vunpack.c.l.b16 %v683
    %v716 = vunpack.c.l.b16 %v684
    %v717 = vunpack.c.l.b16 %v685
    %v718 = vunpack.c.l.b16 %v686
    %v719 = vunpack.c.l.b16 %v687
    %v720 = vunpack.c.l.b16 %v688
    %v721 = vunpack.c.l.b16 %v689
    %v722 = vunpack.c.l.b16 %v690
    %v723 = vunpack.c.l.b16 %v691
    %v724 = vpack.c.b16 %v709, %v708
    %v725 = vpack.c.b16 %v711, %v710
    %v726 = vpack.c.b16 %v713, %v712
    %v727 = vpack.c.b16 %v715, %v714
    %v728 = vpack.c.b16 %v717, %v716
    %v729 = vpack.c.b16 %v719, %v718
    %v730 = vpack.c.b16 %v721, %v720
    %v731 = vpack.c.b16 %v723, %v722
    %740 = vmatpush.bf16.msra.mxu0 %v731
    %741 = vmatpush.bf16.msra.mxu0 %v730
    %742 = vmatpush.bf16.msra.mxu0 %v729
    %743 = vmatpush.bf16.msra.mxu0 %v728
    %744 = vmatpush.bf16.msra.mxu0 %v727
    %745 = vmatpush.bf16.msra.mxu0 %v726
    %746 = vmatpush.bf16.msra.mxu0 %v725
    %747 = vmatpush.bf16.msra.mxu0 %v724
    %748 = vmatmul.bf16.gmra.mxu0 %v674
    %v749 = vpop.f32.mrf.mxu0
    %v750 = vadd.f32 0.0, %v749
    %v751 = vpop.f32.mrf.mxu0
    %752 = vdwg.mxu0
    %v753 = vadd.f32 %v638, %v750
    %s754 = scalar_lea.vmem %s0, 10
    %v755 = vld [vmem:[%s754] sm:$0x3]
    %757 = vst [vmem:[#allocation1] ss:$9 sm:$0xff] %v755
    %v758 = vld [vmem:[#allocation1] sm:$0xff]
    %v759 = vld [vmem:[#allocation1 + $0x9] sm:$0xff]
    %762 = vmatpush.bf16.msra.mxu0 %v165
    %763 = vmatpush.bf16.msra.mxu0 %v164
    %764 = vmatpush.bf16.msra.mxu0 %v163
    %765 = vmatpush.bf16.msra.mxu0 %v162
    %766 = vmatpush.bf16.msra.mxu0 %v161
    %767 = vmatpush.bf16.msra.mxu0 %v160
    %768 = vmatpush.bf16.msra.mxu0 %v159
    %769 = vmatpush.bf16.msra.mxu0 %v158
    %770 = vmatmul.bf16.gmra.mxu0 %v758
    %v771 = vpop.f32.mrf.mxu0
    %v772 = vadd.f32 %v86, %v771
    %v773 = vpop.f32.mrf.mxu0
    %774 = vdwg.mxu0
    %775 = vmatpush.bf16.msra.mxu0 %v173
    %776 = vmatpush.bf16.msra.mxu0 %v172
    %777 = vmatpush.bf16.msra.mxu0 %v171
    %778 = vmatpush.bf16.msra.mxu0 %v170
    %779 = vmatpush.bf16.msra.mxu0 %v169
    %780 = vmatpush.bf16.msra.mxu0 %v168
    %781 = vmatpush.bf16.msra.mxu0 %v167
    %782 = vmatpush.bf16.msra.mxu0 %v166
    %783 = vmatmul.bf16.gmra.mxu0 %v759
    %v784 = vpop.f32.mrf.mxu0
    %v785 = vadd.f32 %v772, %v784
    %v786 = vpop.f32.mrf.mxu0
    %787 = vdwg.mxu0
    %v788 = vmax.f32 %v785, 0.0
    %v789 = vpack.c.bf16 %v788, %v788
    %s790 = scalar_lea.vmem %s3, 320
    %v791 = vld [vmem:[%s790] sm:$0xf]
    %v792 = vld [vmem:[%s790 + $0x4] sm:$0xf]
    %v793 = vld [vmem:[%s790 + $0x8] sm:$0xf]
    %v794 = vld [vmem:[%s790 + $0xc] sm:$0xf]
    %v795 = vld [vmem:[%s790 + $0x10] sm:$0xf]
    %v796 = vld [vmem:[%s790 + $0x14] sm:$0xf]
    %v797 = vld [vmem:[%s790 + $0x18] sm:$0xf]
    %v798 = vld [vmem:[%s790 + $0x1c] sm:$0xf]
    %v799 = vld [vmem:[%s790 + $0x20] sm:$0xf]
    %v800 = vld [vmem:[%s790 + $0x24] sm:$0xf]
    %v801 = vld [vmem:[%s790 + $0x28] sm:$0xf]
    %v802 = vld [vmem:[%s790 + $0x2c] sm:$0xf]
    %v803 = vld [vmem:[%s790 + $0x30] sm:$0xf]
    %v804 = vld [vmem:[%s790 + $0x34] sm:$0xf]
    %v805 = vld [vmem:[%s790 + $0x38] sm:$0xf]
    %v806 = vld [vmem:[%s790 + $0x3c] sm:$0xf]
    %v823 = vunpack.c.l.b16 %v791
    %v824 = vunpack.c.l.b16 %v792
    %v825 = vunpack.c.l.b16 %v793
    %v826 = vunpack.c.l.b16 %v794
    %v827 = vunpack.c.l.b16 %v795
    %v828 = vunpack.c.l.b16 %v796
    %v829 = vunpack.c.l.b16 %v797
    %v830 = vunpack.c.l.b16 %v798
    %v831 = vunpack.c.l.b16 %v799
    %v832 = vunpack.c.l.b16 %v800
    %v833 = vunpack.c.l.b16 %v801
    %v834 = vunpack.c.l.b16 %v802
    %v835 = vunpack.c.l.b16 %v803
    %v836 = vunpack.c.l.b16 %v804
    %v837 = vunpack.c.l.b16 %v805
    %v838 = vunpack.c.l.b16 %v806
    %v839 = vpack.c.b16 %v824, %v823
    %v840 = vpack.c.b16 %v826, %v825
    %v841 = vpack.c.b16 %v828, %v827
    %v842 = vpack.c.b16 %v830, %v829
    %v843 = vpack.c.b16 %v832, %v831
    %v844 = vpack.c.b16 %v834, %v833
    %v845 = vpack.c.b16 %v836, %v835
    %v846 = vpack.c.b16 %v838, %v837
    %855 = vmatpush.bf16.msra.mxu0 %v846
    %856 = vmatpush.bf16.msra.mxu0 %v845
    %857 = vmatpush.bf16.msra.mxu0 %v844
    %858 = vmatpush.bf16.msra.mxu0 %v843
    %859 = vmatpush.bf16.msra.mxu0 %v842
    %860 = vmatpush.bf16.msra.mxu0 %v841
    %861 = vmatpush.bf16.msra.mxu0 %v840
    %862 = vmatpush.bf16.msra.mxu0 %v839
    %863 = vmatmul.bf16.gmra.mxu0 %v789
    %v864 = vpop.f32.mrf.mxu0
    %v865 = vadd.f32 0.0, %v864
    %v866 = vpop.f32.mrf.mxu0
    %867 = vdwg.mxu0
    %v868 = vadd.f32 %v753, %v865
    %s869 = scalar_lea.vmem %s0, 12
    %v870 = vld [vmem:[%s869] sm:$0x3]
    %872 = vst [vmem:[#allocation1] ss:$9 sm:$0xff] %v870
    %v873 = vld [vmem:[#allocation1] sm:$0xff]
    %v874 = vld [vmem:[#allocation1 + $0x9] sm:$0xff]
    %877 = vmatpush.bf16.msra.mxu0 %v165
    %878 = vmatpush.bf16.msra.mxu0 %v164
    %879 = vmatpush.bf16.msra.mxu0 %v163
    %880 = vmatpush.bf16.msra.mxu0 %v162
    %881 = vmatpush.bf16.msra.mxu0 %v161
    %882 = vmatpush.bf16.msra.mxu0 %v160
    %883 = vmatpush.bf16.msra.mxu0 %v159
    %884 = vmatpush.bf16.msra.mxu0 %v158
    %885 = vmatmul.bf16.gmra.mxu0 %v873
    %v886 = vpop.f32.mrf.mxu0
    %v887 = vadd.f32 %v86, %v886
    %v888 = vpop.f32.mrf.mxu0
    %889 = vdwg.mxu0
    %890 = vmatpush.bf16.msra.mxu0 %v173
    %891 = vmatpush.bf16.msra.mxu0 %v172
    %892 = vmatpush.bf16.msra.mxu0 %v171
    %893 = vmatpush.bf16.msra.mxu0 %v170
    %894 = vmatpush.bf16.msra.mxu0 %v169
    %895 = vmatpush.bf16.msra.mxu0 %v168
    %896 = vmatpush.bf16.msra.mxu0 %v167
    %897 = vmatpush.bf16.msra.mxu0 %v166
    %898 = vmatmul.bf16.gmra.mxu0 %v874
    %v899 = vpop.f32.mrf.mxu0
    %v900 = vadd.f32 %v887, %v899
    %v901 = vpop.f32.mrf.mxu0
    %902 = vdwg.mxu0
    %v903 = vmax.f32 %v900, 0.0
    %v904 = vpack.c.bf16 %v903, %v903
    %s905 = scalar_lea.vmem %s3, 384
    %v906 = vld [vmem:[%s905] sm:$0xf]
    %v907 = vld [vmem:[%s905 + $0x4] sm:$0xf]
    %v908 = vld [vmem:[%s905 + $0x8] sm:$0xf]
    %v909 = vld [vmem:[%s905 + $0xc] sm:$0xf]
    %v910 = vld [vmem:[%s905 + $0x10] sm:$0xf]
    %v911 = vld [vmem:[%s905 + $0x14] sm:$0xf]
    %v912 = vld [vmem:[%s905 + $0x18] sm:$0xf]
    %v913 = vld [vmem:[%s905 + $0x1c] sm:$0xf]
    %v914 = vld [vmem:[%s905 + $0x20] sm:$0xf]
    %v915 = vld [vmem:[%s905 + $0x24] sm:$0xf]
    %v916 = vld [vmem:[%s905 + $0x28] sm:$0xf]
    %v917 = vld [vmem:[%s905 + $0x2c] sm:$0xf]
    %v918 = vld [vmem:[%s905 + $0x30] sm:$0xf]
    %v919 = vld [vmem:[%s905 + $0x34] sm:$0xf]
    %v920 = vld [vmem:[%s905 + $0x38] sm:$0xf]
    %v921 = vld [vmem:[%s905 + $0x3c] sm:$0xf]
    %v938 = vunpack.c.l.b16 %v906
    %v939 = vunpack.c.l.b16 %v907
    %v940 = vunpack.c.l.b16 %v908
    %v941 = vunpack.c.l.b16 %v909
    %v942 = vunpack.c.l.b16 %v910
    %v943 = vunpack.c.l.b16 %v911
    %v944 = vunpack.c.l.b16 %v912
    %v945 = vunpack.c.l.b16 %v913
    %v946 = vunpack.c.l.b16 %v914
    %v947 = vunpack.c.l.b16 %v915
    %v948 = vunpack.c.l.b16 %v916
    %v949 = vunpack.c.l.b16 %v917
    %v950 = vunpack.c.l.b16 %v918
    %v951 = vunpack.c.l.b16 %v919
    %v952 = vunpack.c.l.b16 %v920
    %v953 = vunpack.c.l.b16 %v921
    %v954 = vpack.c.b16 %v939, %v938
    %v955 = vpack.c.b16 %v941, %v940
    %v956 = vpack.c.b16 %v943, %v942
    %v957 = vpack.c.b16 %v945, %v944
    %v958 = vpack.c.b16 %v947, %v946
    %v959 = vpack.c.b16 %v949, %v948
    %v960 = vpack.c.b16 %v951, %v950
    %v961 = vpack.c.b16 %v953, %v952
    %970 = vmatpush.bf16.msra.mxu0 %v961
    %971 = vmatpush.bf16.msra.mxu0 %v960
    %972 = vmatpush.bf16.msra.mxu0 %v959
    %973 = vmatpush.bf16.msra.mxu0 %v958
    %974 = vmatpush.bf16.msra.mxu0 %v957
    %975 = vmatpush.bf16.msra.mxu0 %v956
    %976 = vmatpush.bf16.msra.mxu0 %v955
    %977 = vmatpush.bf16.msra.mxu0 %v954
    %978 = vmatmul.bf16.gmra.mxu0 %v904
    %v979 = vpop.f32.mrf.mxu0
    %v980 = vadd.f32 0.0, %v979
    %v981 = vpop.f32.mrf.mxu0
    %982 = vdwg.mxu0
    %v983 = vadd.f32 %v868, %v980
    %s984 = scalar_lea.vmem %s0, 14
    %v985 = vld [vmem:[%s984] sm:$0x3]
    %987 = vst [vmem:[#allocation1] ss:$9 sm:$0xff] %v985
    %v988 = vld [vmem:[#allocation1] sm:$0xff]
    %v989 = vld [vmem:[#allocation1 + $0x9] sm:$0xff]
    %992 = vmatpush.bf16.msra.mxu0 %v165
    %993 = vmatpush.bf16.msra.mxu0 %v164
    %994 = vmatpush.bf16.msra.mxu0 %v163
    %995 = vmatpush.bf16.msra.mxu0 %v162
    %996 = vmatpush.bf16.msra.mxu0 %v161
    %997 = vmatpush.bf16.msra.mxu0 %v160
    %998 = vmatpush.bf16.msra.mxu0 %v159
    %999 = vmatpush.bf16.msra.mxu0 %v158
    %1000 = vmatmul.bf16.gmra.mxu0 %v988
    %v1001 = vpop.f32.mrf.mxu0
    %v1002 = vadd.f32 %v86, %v1001
    %v1003 = vpop.f32.mrf.mxu0
    %1004 = vdwg.mxu0
    %1005 = vmatpush.bf16.msra.mxu0 %v173
    %1006 = vmatpush.bf16.msra.mxu0 %v172
    %1007 = vmatpush.bf16.msra.mxu0 %v171
    %1008 = vmatpush.bf16.msra.mxu0 %v170
    %1009 = vmatpush.bf16.msra.mxu0 %v169
    %1010 = vmatpush.bf16.msra.mxu0 %v168
    %1011 = vmatpush.bf16.msra.mxu0 %v167
    %1012 = vmatpush.bf16.msra.mxu0 %v166
    %1013 = vmatmul.bf16.gmra.mxu0 %v989
    %v1014 = vpop.f32.mrf.mxu0
    %v1015 = vadd.f32 %v1002, %v1014
    %v1016 = vpop.f32.mrf.mxu0
    %1017 = vdwg.mxu0
    %v1018 = vmax.f32 %v1015, 0.0
    %v1019 = vpack.c.bf16 %v1018, %v1018
    %s1020 = scalar_lea.vmem %s3, 448
    %v1021 = vld [vmem:[%s1020] sm:$0xf]
    %v1022 = vld [vmem:[%s1020 + $0x4] sm:$0xf]
    %v1023 = vld [vmem:[%s1020 + $0x8] sm:$0xf]
    %v1024 = vld [vmem:[%s1020 + $0xc] sm:$0xf]
    %v1025 = vld [vmem:[%s1020 + $0x10] sm:$0xf]
    %v1026 = vld [vmem:[%s1020 + $0x14] sm:$0xf]
    %v1027 = vld [vmem:[%s1020 + $0x18] sm:$0xf]
    %v1028 = vld [vmem:[%s1020 + $0x1c] sm:$0xf]
    %v1029 = vld [vmem:[%s1020 + $0x20] sm:$0xf]
    %v1030 = vld [vmem:[%s1020 + $0x24] sm:$0xf]
    %v1031 = vld [vmem:[%s1020 + $0x28] sm:$0xf]
    %v1032 = vld [vmem:[%s1020 + $0x2c] sm:$0xf]
    %v1033 = vld [vmem:[%s1020 + $0x30] sm:$0xf]
    %v1034 = vld [vmem:[%s1020 + $0x34] sm:$0xf]
    %v1035 = vld [vmem:[%s1020 + $0x38] sm:$0xf]
    %v1036 = vld [vmem:[%s1020 + $0x3c] sm:$0xf]
    %v1053 = vunpack.c.l.b16 %v1021
    %v1054 = vunpack.c.l.b16 %v1022
    %v1055 = vunpack.c.l.b16 %v1023
    %v1056 = vunpack.c.l.b16 %v1024
    %v1057 = vunpack.c.l.b16 %v1025
    %v1058 = vunpack.c.l.b16 %v1026
    %v1059 = vunpack.c.l.b16 %v1027
    %v1060 = vunpack.c.l.b16 %v1028
    %v1061 = vunpack.c.l.b16 %v1029
    %v1062 = vunpack.c.l.b16 %v1030
    %v1063 = vunpack.c.l.b16 %v1031
    %v1064 = vunpack.c.l.b16 %v1032
    %v1065 = vunpack.c.l.b16 %v1033
    %v1066 = vunpack.c.l.b16 %v1034
    %v1067 = vunpack.c.l.b16 %v1035
    %v1068 = vunpack.c.l.b16 %v1036
    %v1069 = vpack.c.b16 %v1054, %v1053
    %v1070 = vpack.c.b16 %v1056, %v1055
    %v1071 = vpack.c.b16 %v1058, %v1057
    %v1072 = vpack.c.b16 %v1060, %v1059
    %v1073 = vpack.c.b16 %v1062, %v1061
    %v1074 = vpack.c.b16 %v1064, %v1063
    %v1075 = vpack.c.b16 %v1066, %v1065
    %v1076 = vpack.c.b16 %v1068, %v1067
    %1085 = vmatpush.bf16.msra.mxu0 %v1076
    %1086 = vmatpush.bf16.msra.mxu0 %v1075
    %1087 = vmatpush.bf16.msra.mxu0 %v1074
    %1088 = vmatpush.bf16.msra.mxu0 %v1073
    %1089 = vmatpush.bf16.msra.mxu0 %v1072
    %1090 = vmatpush.bf16.msra.mxu0 %v1071
    %1091 = vmatpush.bf16.msra.mxu0 %v1070
    %1092 = vmatpush.bf16.msra.mxu0 %v1069
    %1093 = vmatmul.bf16.gmra.mxu0 %v1019
    %v1094 = vpop.f32.mrf.mxu0
    %v1095 = vadd.f32 0.0, %v1094
    %v1096 = vpop.f32.mrf.mxu0
    %1097 = vdwg.mxu0
    %v1098 = vadd.f32 %v983, %v1095
    %s1099 = scalar_lea.vmem %s0, 16
    %v1100 = vld [vmem:[%s1099] sm:$0x3]
    %1102 = vst [vmem:[#allocation1] ss:$9 sm:$0xff] %v1100
    %v1103 = vld [vmem:[#allocation1] sm:$0xff]
    %v1104 = vld [vmem:[#allocation1 + $0x9] sm:$0xff]
    %1107 = vmatpush.bf16.msra.mxu0 %v165
    %1108 = vmatpush.bf16.msra.mxu0 %v164
    %1109 = vmatpush.bf16.msra.mxu0 %v163
    %1110 = vmatpush.bf16.msra.mxu0 %v162
    %1111 = vmatpush.bf16.msra.mxu0 %v161
    %1112 = vmatpush.bf16.msra.mxu0 %v160
    %1113 = vmatpush.bf16.msra.mxu0 %v159
    %1114 = vmatpush.bf16.msra.mxu0 %v158
    %1115 = vmatmul.bf16.gmra.mxu0 %v1103
    %v1116 = vpop.f32.mrf.mxu0
    %v1117 = vadd.f32 %v86, %v1116
    %v1118 = vpop.f32.mrf.mxu0
    %1119 = vdwg.mxu0
    %1120 = vmatpush.bf16.msra.mxu0 %v173
    %1121 = vmatpush.bf16.msra.mxu0 %v172
    %1122 = vmatpush.bf16.msra.mxu0 %v171
    %1123 = vmatpush.bf16.msra.mxu0 %v170
    %1124 = vmatpush.bf16.msra.mxu0 %v169
    %1125 = vmatpush.bf16.msra.mxu0 %v168
    %1126 = vmatpush.bf16.msra.mxu0 %v167
    %1127 = vmatpush.bf16.msra.mxu0 %v166
    %1128 = vmatmul.bf16.gmra.mxu0 %v1104
    %v1129 = vpop.f32.mrf.mxu0
    %v1130 = vadd.f32 %v1117, %v1129
    %v1131 = vpop.f32.mrf.mxu0
    %1132 = vdwg.mxu0
    %v1133 = vmax.f32 %v1130, 0.0
    %v1134 = vpack.c.bf16 %v1133, %v1133
    %s1135 = scalar_lea.vmem %s3, 512
    %v1136 = vld [vmem:[%s1135] sm:$0xf]
    %v1137 = vld [vmem:[%s1135 + $0x4] sm:$0xf]
    %v1138 = vld [vmem:[%s1135 + $0x8] sm:$0xf]
    %v1139 = vld [vmem:[%s1135 + $0xc] sm:$0xf]
    %v1140 = vld [vmem:[%s1135 + $0x10] sm:$0xf]
    %v1141 = vld [vmem:[%s1135 + $0x14] sm:$0xf]
    %v1142 = vld [vmem:[%s1135 + $0x18] sm:$0xf]
    %v1143 = vld [vmem:[%s1135 + $0x1c] sm:$0xf]
    %v1144 = vld [vmem:[%s1135 + $0x20] sm:$0xf]
    %v1145 = vld [vmem:[%s1135 + $0x24] sm:$0xf]
    %v1146 = vld [vmem:[%s1135 + $0x28] sm:$0xf]
    %v1147 = vld [vmem:[%s1135 + $0x2c] sm:$0xf]
    %v1148 = vld [vmem:[%s1135 + $0x30] sm:$0xf]
    %v1149 = vld [vmem:[%s1135 + $0x34] sm:$0xf]
    %v1150 = vld [vmem:[%s1135 + $0x38] sm:$0xf]
    %v1151 = vld [vmem:[%s1135 + $0x3c] sm:$0xf]
    %v1168 = vunpack.c.l.b16 %v1136
    %v1169 = vunpack.c.l.b16 %v1137
    %v1170 = vunpack.c.l.b16 %v1138
    %v1171 = vunpack.c.l.b16 %v1139
    %v1172 = vunpack.c.l.b16 %v1140
    %v1173 = vunpack.c.l.b16 %v1141
    %v1174 = vunpack.c.l.b16 %v1142
    %v1175 = vunpack.c.l.b16 %v1143
    %v1176 = vunpack.c.l.b16 %v1144
    %v1177 = vunpack.c.l.b16 %v1145
    %v1178 = vunpack.c.l.b16 %v1146
    %v1179 = vunpack.c.l.b16 %v1147
    %v1180 = vunpack.c.l.b16 %v1148
    %v1181 = vunpack.c.l.b16 %v1149
    %v1182 = vunpack.c.l.b16 %v1150
    %v1183 = vunpack.c.l.b16 %v1151
    %v1184 = vpack.c.b16 %v1169, %v1168
    %v1185 = vpack.c.b16 %v1171, %v1170
    %v1186 = vpack.c.b16 %v1173, %v1172
    %v1187 = vpack.c.b16 %v1175, %v1174
    %v1188 = vpack.c.b16 %v1177, %v1176
    %v1189 = vpack.c.b16 %v1179, %v1178
    %v1190 = vpack.c.b16 %v1181, %v1180
    %v1191 = vpack.c.b16 %v1183, %v1182
    %1200 = vmatpush.bf16.msra.mxu0 %v1191
    %1201 = vmatpush.bf16.msra.mxu0 %v1190
    %1202 = vmatpush.bf16.msra.mxu0 %v1189
    %1203 = vmatpush.bf16.msra.mxu0 %v1188
    %1204 = vmatpush.bf16.msra.mxu0 %v1187
    %1205 = vmatpush.bf16.msra.mxu0 %v1186
    %1206 = vmatpush.bf16.msra.mxu0 %v1185
    %1207 = vmatpush.bf16.msra.mxu0 %v1184
    %1208 = vmatmul.bf16.gmra.mxu0 %v1134
    %v1209 = vpop.f32.mrf.mxu0
    %v1210 = vadd.f32 0.0, %v1209
    %v1211 = vpop.f32.mrf.mxu0
    %1212 = vdwg.mxu0
    %v1213 = vadd.f32 %v1098, %v1210
    %s1214 = scalar_lea.vmem %s0, 18
    %v1215 = vld [vmem:[%s1214] sm:$0x3]
    %1217 = vst [vmem:[#allocation1] ss:$9 sm:$0xff] %v1215
    %v1218 = vld [vmem:[#allocation1] sm:$0xff]
    %v1219 = vld [vmem:[#allocation1 + $0x9] sm:$0xff]
    %1222 = vmatpush.bf16.msra.mxu0 %v165
    %1223 = vmatpush.bf16.msra.mxu0 %v164
    %1224 = vmatpush.bf16.msra.mxu0 %v163
    %1225 = vmatpush.bf16.msra.mxu0 %v162
    %1226 = vmatpush.bf16.msra.mxu0 %v161
    %1227 = vmatpush.bf16.msra.mxu0 %v160
    %1228 = vmatpush.bf16.msra.mxu0 %v159
    %1229 = vmatpush.bf16.msra.mxu0 %v158
    %1230 = vmatmul.bf16.gmra.mxu0 %v1218
    %v1231 = vpop.f32.mrf.mxu0
    %v1232 = vadd.f32 %v86, %v1231
    %v1233 = vpop.f32.mrf.mxu0
    %1234 = vdwg.mxu0
    %1235 = vmatpush.bf16.msra.mxu0 %v173
    %1236 = vmatpush.bf16.msra.mxu0 %v172
    %1237 = vmatpush.bf16.msra.mxu0 %v171
    %1238 = vmatpush.bf16.msra.mxu0 %v170
    %1239 = vmatpush.bf16.msra.mxu0 %v169
    %1240 = vmatpush.bf16.msra.mxu0 %v168
    %1241 = vmatpush.bf16.msra.mxu0 %v167
    %1242 = vmatpush.bf16.msra.mxu0 %v166
    %1243 = vmatmul.bf16.gmra.mxu0 %v1219
    %v1244 = vpop.f32.mrf.mxu0
    %v1245 = vadd.f32 %v1232, %v1244
    %v1246 = vpop.f32.mrf.mxu0
    %1247 = vdwg.mxu0
    %v1248 = vmax.f32 %v1245, 0.0
    %v1249 = vpack.c.bf16 %v1248, %v1248
    %s1250 = scalar_lea.vmem %s3, 576
    %v1251 = vld [vmem:[%s1250] sm:$0xf]
    %v1252 = vld [vmem:[%s1250 + $0x4] sm:$0xf]
    %v1253 = vld [vmem:[%s1250 + $0x8] sm:$0xf]
    %v1254 = vld [vmem:[%s1250 + $0xc] sm:$0xf]
    %v1255 = vld [vmem:[%s1250 + $0x10] sm:$0xf]
    %v1256 = vld [vmem:[%s1250 + $0x14] sm:$0xf]
    %v1257 = vld [vmem:[%s1250 + $0x18] sm:$0xf]
    %v1258 = vld [vmem:[%s1250 + $0x1c] sm:$0xf]
    %v1259 = vld [vmem:[%s1250 + $0x20] sm:$0xf]
    %v1260 = vld [vmem:[%s1250 + $0x24] sm:$0xf]
    %v1261 = vld [vmem:[%s1250 + $0x28] sm:$0xf]
    %v1262 = vld [vmem:[%s1250 + $0x2c] sm:$0xf]
    %v1263 = vld [vmem:[%s1250 + $0x30] sm:$0xf]
    %v1264 = vld [vmem:[%s1250 + $0x34] sm:$0xf]
    %v1265 = vld [vmem:[%s1250 + $0x38] sm:$0xf]
    %v1266 = vld [vmem:[%s1250 + $0x3c] sm:$0xf]
    %v1283 = vunpack.c.l.b16 %v1251
    %v1284 = vunpack.c.l.b16 %v1252
    %v1285 = vunpack.c.l.b16 %v1253
    %v1286 = vunpack.c.l.b16 %v1254
    %v1287 = vunpack.c.l.b16 %v1255
    %v1288 = vunpack.c.l.b16 %v1256
    %v1289 = vunpack.c.l.b16 %v1257
    %v1290 = vunpack.c.l.b16 %v1258
    %v1291 = vunpack.c.l.b16 %v1259
    %v1292 = vunpack.c.l.b16 %v1260
    %v1293 = vunpack.c.l.b16 %v1261
    %v1294 = vunpack.c.l.b16 %v1262
    %v1295 = vunpack.c.l.b16 %v1263
    %v1296 = vunpack.c.l.b16 %v1264
    %v1297 = vunpack.c.l.b16 %v1265
    %v1298 = vunpack.c.l.b16 %v1266
    %v1299 = vpack.c.b16 %v1284, %v1283
    %v1300 = vpack.c.b16 %v1286, %v1285
    %v1301 = vpack.c.b16 %v1288, %v1287
    %v1302 = vpack.c.b16 %v1290, %v1289
    %v1303 = vpack.c.b16 %v1292, %v1291
    %v1304 = vpack.c.b16 %v1294, %v1293
    %v1305 = vpack.c.b16 %v1296, %v1295
    %v1306 = vpack.c.b16 %v1298, %v1297
    %1315 = vmatpush.bf16.msra.mxu0 %v1306
    %1316 = vmatpush.bf16.msra.mxu0 %v1305
    %1317 = vmatpush.bf16.msra.mxu0 %v1304
    %1318 = vmatpush.bf16.msra.mxu0 %v1303
    %1319 = vmatpush.bf16.msra.mxu0 %v1302
    %1320 = vmatpush.bf16.msra.mxu0 %v1301
    %1321 = vmatpush.bf16.msra.mxu0 %v1300
    %1322 = vmatpush.bf16.msra.mxu0 %v1299
    %1323 = vmatmul.bf16.gmra.mxu0 %v1249
    %v1324 = vpop.f32.mrf.mxu0
    %v1325 = vadd.f32 0.0, %v1324
    %v1326 = vpop.f32.mrf.mxu0
    %1327 = vdwg.mxu0
    %v1328 = vadd.f32 %v1213, %v1325
    %s1329 = scalar_lea.vmem %s0, 20
    %v1330 = vld [vmem:[%s1329] sm:$0x3]
    %1332 = vst [vmem:[#allocation1] ss:$9 sm:$0xff] %v1330
    %v1333 = vld [vmem:[#allocation1] sm:$0xff]
    %v1334 = vld [vmem:[#allocation1 + $0x9] sm:$0xff]
    %1337 = vmatpush.bf16.msra.mxu0 %v165
    %1338 = vmatpush.bf16.msra.mxu0 %v164
    %1339 = vmatpush.bf16.msra.mxu0 %v163
    %1340 = vmatpush.bf16.msra.mxu0 %v162
    %1341 = vmatpush.bf16.msra.mxu0 %v161
    %1342 = vmatpush.bf16.msra.mxu0 %v160
    %1343 = vmatpush.bf16.msra.mxu0 %v159
    %1344 = vmatpush.bf16.msra.mxu0 %v158
    %1345 = vmatmul.bf16.gmra.mxu0 %v1333
    %v1346 = vpop.f32.mrf.mxu0
    %v1347 = vadd.f32 %v86, %v1346
    %v1348 = vpop.f32.mrf.mxu0
    %1349 = vdwg.mxu0
    %1350 = vmatpush.bf16.msra.mxu0 %v173
    %1351 = vmatpush.bf16.msra.mxu0 %v172
    %1352 = vmatpush.bf16.msra.mxu0 %v171
    %1353 = vmatpush.bf16.msra.mxu0 %v170
    %1354 = vmatpush.bf16.msra.mxu0 %v169
    %1355 = vmatpush.bf16.msra.mxu0 %v168
    %1356 = vmatpush.bf16.msra.mxu0 %v167
    %1357 = vmatpush.bf16.msra.mxu0 %v166
    %1358 = vmatmul.bf16.gmra.mxu0 %v1334
    %v1359 = vpop.f32.mrf.mxu0
    %v1360 = vadd.f32 %v1347, %v1359
    %v1361 = vpop.f32.mrf.mxu0
    %1362 = vdwg.mxu0
    %v1363 = vmax.f32 %v1360, 0.0
    %v1364 = vpack.c.bf16 %v1363, %v1363
    %s1365 = scalar_lea.vmem %s3, 640
    %v1366 = vld [vmem:[%s1365] sm:$0xf]
    %v1367 = vld [vmem:[%s1365 + $0x4] sm:$0xf]
    %v1368 = vld [vmem:[%s1365 + $0x8] sm:$0xf]
    %v1369 = vld [vmem:[%s1365 + $0xc] sm:$0xf]
    %v1370 = vld [vmem:[%s1365 + $0x10] sm:$0xf]
    %v1371 = vld [vmem:[%s1365 + $0x14] sm:$0xf]
    %v1372 = vld [vmem:[%s1365 + $0x18] sm:$0xf]
    %v1373 = vld [vmem:[%s1365 + $0x1c] sm:$0xf]
    %v1374 = vld [vmem:[%s1365 + $0x20] sm:$0xf]
    %v1375 = vld [vmem:[%s1365 + $0x24] sm:$0xf]
    %v1376 = vld [vmem:[%s1365 + $0x28] sm:$0xf]
    %v1377 = vld [vmem:[%s1365 + $0x2c] sm:$0xf]
    %v1378 = vld [vmem:[%s1365 + $0x30] sm:$0xf]
    %v1379 = vld [vmem:[%s1365 + $0x34] sm:$0xf]
    %v1380 = vld [vmem:[%s1365 + $0x38] sm:$0xf]
    %v1381 = vld [vmem:[%s1365 + $0x3c] sm:$0xf]
    %v1398 = vunpack.c.l.b16 %v1366
    %v1399 = vunpack.c.l.b16 %v1367
    %v1400 = vunpack.c.l.b16 %v1368
    %v1401 = vunpack.c.l.b16 %v1369
    %v1402 = vunpack.c.l.b16 %v1370
    %v1403 = vunpack.c.l.b16 %v1371
    %v1404 = vunpack.c.l.b16 %v1372
    %v1405 = vunpack.c.l.b16 %v1373
    %v1406 = vunpack.c.l.b16 %v1374
    %v1407 = vunpack.c.l.b16 %v1375
    %v1408 = vunpack.c.l.b16 %v1376
    %v1409 = vunpack.c.l.b16 %v1377
    %v1410 = vunpack.c.l.b16 %v1378
    %v1411 = vunpack.c.l.b16 %v1379
    %v1412 = vunpack.c.l.b16 %v1380
    %v1413 = vunpack.c.l.b16 %v1381
    %v1414 = vpack.c.b16 %v1399, %v1398
    %v1415 = vpack.c.b16 %v1401, %v1400
    %v1416 = vpack.c.b16 %v1403, %v1402
    %v1417 = vpack.c.b16 %v1405, %v1404
    %v1418 = vpack.c.b16 %v1407, %v1406
    %v1419 = vpack.c.b16 %v1409, %v1408
    %v1420 = vpack.c.b16 %v1411, %v1410
    %v1421 = vpack.c.b16 %v1413, %v1412
    %1430 = vmatpush.bf16.msra.mxu0 %v1421
    %1431 = vmatpush.bf16.msra.mxu0 %v1420
    %1432 = vmatpush.bf16.msra.mxu0 %v1419
    %1433 = vmatpush.bf16.msra.mxu0 %v1418
    %1434 = vmatpush.bf16.msra.mxu0 %v1417
    %1435 = vmatpush.bf16.msra.mxu0 %v1416
    %1436 = vmatpush.bf16.msra.mxu0 %v1415
    %1437 = vmatpush.bf16.msra.mxu0 %v1414
    %1438 = vmatmul.bf16.gmra.mxu0 %v1364
    %v1439 = vpop.f32.mrf.mxu0
    %v1440 = vadd.f32 0.0, %v1439
    %v1441 = vpop.f32.mrf.mxu0
    %1442 = vdwg.mxu0
    %v1443 = vadd.f32 %v1328, %v1440
    %s1444 = scalar_lea.vmem %s0, 22
    %v1445 = vld [vmem:[%s1444] sm:$0x3]
    %1447 = vst [vmem:[#allocation1] ss:$9 sm:$0xff] %v1445
    %v1448 = vld [vmem:[#allocation1] sm:$0xff]
    %v1449 = vld [vmem:[#allocation1 + $0x9] sm:$0xff]
    %1452 = vmatpush.bf16.msra.mxu0 %v165
    %1453 = vmatpush.bf16.msra.mxu0 %v164
    %1454 = vmatpush.bf16.msra.mxu0 %v163
    %1455 = vmatpush.bf16.msra.mxu0 %v162
    %1456 = vmatpush.bf16.msra.mxu0 %v161
    %1457 = vmatpush.bf16.msra.mxu0 %v160
    %1458 = vmatpush.bf16.msra.mxu0 %v159
    %1459 = vmatpush.bf16.msra.mxu0 %v158
    %1460 = vmatmul.bf16.gmra.mxu0 %v1448
    %v1461 = vpop.f32.mrf.mxu0
    %v1462 = vadd.f32 %v86, %v1461
    %v1463 = vpop.f32.mrf.mxu0
    %1464 = vdwg.mxu0
    %1465 = vmatpush.bf16.msra.mxu0 %v173
    %1466 = vmatpush.bf16.msra.mxu0 %v172
    %1467 = vmatpush.bf16.msra.mxu0 %v171
    %1468 = vmatpush.bf16.msra.mxu0 %v170
    %1469 = vmatpush.bf16.msra.mxu0 %v169
    %1470 = vmatpush.bf16.msra.mxu0 %v168
    %1471 = vmatpush.bf16.msra.mxu0 %v167
    %1472 = vmatpush.bf16.msra.mxu0 %v166
    %1473 = vmatmul.bf16.gmra.mxu0 %v1449
    %v1474 = vpop.f32.mrf.mxu0
    %v1475 = vadd.f32 %v1462, %v1474
    %v1476 = vpop.f32.mrf.mxu0
    %1477 = vdwg.mxu0
    %v1478 = vmax.f32 %v1475, 0.0
    %v1479 = vpack.c.bf16 %v1478, %v1478
    %s1480 = scalar_lea.vmem %s3, 704
    %v1481 = vld [vmem:[%s1480] sm:$0xf]
    %v1482 = vld [vmem:[%s1480 + $0x4] sm:$0xf]
    %v1483 = vld [vmem:[%s1480 + $0x8] sm:$0xf]
    %v1484 = vld [vmem:[%s1480 + $0xc] sm:$0xf]
    %v1485 = vld [vmem:[%s1480 + $0x10] sm:$0xf]
    %v1486 = vld [vmem:[%s1480 + $0x14] sm:$0xf]
    %v1487 = vld [vmem:[%s1480 + $0x18] sm:$0xf]
    %v1488 = vld [vmem:[%s1480 + $0x1c] sm:$0xf]
    %v1489 = vld [vmem:[%s1480 + $0x20] sm:$0xf]
    %v1490 = vld [vmem:[%s1480 + $0x24] sm:$0xf]
    %v1491 = vld [vmem:[%s1480 + $0x28] sm:$0xf]
    %v1492 = vld [vmem:[%s1480 + $0x2c] sm:$0xf]
    %v1493 = vld [vmem:[%s1480 + $0x30] sm:$0xf]
    %v1494 = vld [vmem:[%s1480 + $0x34] sm:$0xf]
    %v1495 = vld [vmem:[%s1480 + $0x38] sm:$0xf]
    %v1496 = vld [vmem:[%s1480 + $0x3c] sm:$0xf]
    %v1513 = vunpack.c.l.b16 %v1481
    %v1514 = vunpack.c.l.b16 %v1482
    %v1515 = vunpack.c.l.b16 %v1483
    %v1516 = vunpack.c.l.b16 %v1484
    %v1517 = vunpack.c.l.b16 %v1485
    %v1518 = vunpack.c.l.b16 %v1486
    %v1519 = vunpack.c.l.b16 %v1487
    %v1520 = vunpack.c.l.b16 %v1488
    %v1521 = vunpack.c.l.b16 %v1489
    %v1522 = vunpack.c.l.b16 %v1490
    %v1523 = vunpack.c.l.b16 %v1491
    %v1524 = vunpack.c.l.b16 %v1492
    %v1525 = vunpack.c.l.b16 %v1493
    %v1526 = vunpack.c.l.b16 %v1494
    %v1527 = vunpack.c.l.b16 %v1495
    %v1528 = vunpack.c.l.b16 %v1496
    %v1529 = vpack.c.b16 %v1514, %v1513
    %v1530 = vpack.c.b16 %v1516, %v1515
    %v1531 = vpack.c.b16 %v1518, %v1517
    %v1532 = vpack.c.b16 %v1520, %v1519
    %v1533 = vpack.c.b16 %v1522, %v1521
    %v1534 = vpack.c.b16 %v1524, %v1523
    %v1535 = vpack.c.b16 %v1526, %v1525
    %v1536 = vpack.c.b16 %v1528, %v1527
    %1545 = vmatpush.bf16.msra.mxu0 %v1536
    %1546 = vmatpush.bf16.msra.mxu0 %v1535
    %1547 = vmatpush.bf16.msra.mxu0 %v1534
    %1548 = vmatpush.bf16.msra.mxu0 %v1533
    %1549 = vmatpush.bf16.msra.mxu0 %v1532
    %1550 = vmatpush.bf16.msra.mxu0 %v1531
    %1551 = vmatpush.bf16.msra.mxu0 %v1530
    %1552 = vmatpush.bf16.msra.mxu0 %v1529
    %1553 = vmatmul.bf16.gmra.mxu0 %v1479
    %v1554 = vpop.f32.mrf.mxu0
    %v1555 = vadd.f32 0.0, %v1554
    %v1556 = vpop.f32.mrf.mxu0
    %1557 = vdwg.mxu0
    %v1558 = vadd.f32 %v1443, %v1555
    %s1559 = scalar_lea.vmem %s0, 24
    %v1560 = vld [vmem:[%s1559] sm:$0x3]
    %1562 = vst [vmem:[#allocation1] ss:$9 sm:$0xff] %v1560
    %v1563 = vld [vmem:[#allocation1] sm:$0xff]
    %v1564 = vld [vmem:[#allocation1 + $0x9] sm:$0xff]
    %1567 = vmatpush.bf16.msra.mxu0 %v165
    %1568 = vmatpush.bf16.msra.mxu0 %v164
    %1569 = vmatpush.bf16.msra.mxu0 %v163
    %1570 = vmatpush.bf16.msra.mxu0 %v162
    %1571 = vmatpush.bf16.msra.mxu0 %v161
    %1572 = vmatpush.bf16.msra.mxu0 %v160
    %1573 = vmatpush.bf16.msra.mxu0 %v159
    %1574 = vmatpush.bf16.msra.mxu0 %v158
    %1575 = vmatmul.bf16.gmra.mxu0 %v1563
    %v1576 = vpop.f32.mrf.mxu0
    %v1577 = vadd.f32 %v86, %v1576
    %v1578 = vpop.f32.mrf.mxu0
    %1579 = vdwg.mxu0
    %1580 = vmatpush.bf16.msra.mxu0 %v173
    %1581 = vmatpush.bf16.msra.mxu0 %v172
    %1582 = vmatpush.bf16.msra.mxu0 %v171
    %1583 = vmatpush.bf16.msra.mxu0 %v170
    %1584 = vmatpush.bf16.msra.mxu0 %v169
    %1585 = vmatpush.bf16.msra.mxu0 %v168
    %1586 = vmatpush.bf16.msra.mxu0 %v167
    %1587 = vmatpush.bf16.msra.mxu0 %v166
    %1588 = vmatmul.bf16.gmra.mxu0 %v1564
    %v1589 = vpop.f32.mrf.mxu0
    %v1590 = vadd.f32 %v1577, %v1589
    %v1591 = vpop.f32.mrf.mxu0
    %1592 = vdwg.mxu0
    %v1593 = vmax.f32 %v1590, 0.0
    %v1594 = vpack.c.bf16 %v1593, %v1593
    %s1595 = scalar_lea.vmem %s3, 768
    %v1596 = vld [vmem:[%s1595] sm:$0xf]
    %v1597 = vld [vmem:[%s1595 + $0x4] sm:$0xf]
    %v1598 = vld [vmem:[%s1595 + $0x8] sm:$0xf]
    %v1599 = vld [vmem:[%s1595 + $0xc] sm:$0xf]
    %v1600 = vld [vmem:[%s1595 + $0x10] sm:$0xf]
    %v1601 = vld [vmem:[%s1595 + $0x14] sm:$0xf]
    %v1602 = vld [vmem:[%s1595 + $0x18] sm:$0xf]
    %v1603 = vld [vmem:[%s1595 + $0x1c] sm:$0xf]
    %v1604 = vld [vmem:[%s1595 + $0x20] sm:$0xf]
    %v1605 = vld [vmem:[%s1595 + $0x24] sm:$0xf]
    %v1606 = vld [vmem:[%s1595 + $0x28] sm:$0xf]
    %v1607 = vld [vmem:[%s1595 + $0x2c] sm:$0xf]
    %v1608 = vld [vmem:[%s1595 + $0x30] sm:$0xf]
    %v1609 = vld [vmem:[%s1595 + $0x34] sm:$0xf]
    %v1610 = vld [vmem:[%s1595 + $0x38] sm:$0xf]
    %v1611 = vld [vmem:[%s1595 + $0x3c] sm:$0xf]
    %v1628 = vunpack.c.l.b16 %v1596
    %v1629 = vunpack.c.l.b16 %v1597
    %v1630 = vunpack.c.l.b16 %v1598
    %v1631 = vunpack.c.l.b16 %v1599
    %v1632 = vunpack.c.l.b16 %v1600
    %v1633 = vunpack.c.l.b16 %v1601
    %v1634 = vunpack.c.l.b16 %v1602
    %v1635 = vunpack.c.l.b16 %v1603
    %v1636 = vunpack.c.l.b16 %v1604
    %v1637 = vunpack.c.l.b16 %v1605
    %v1638 = vunpack.c.l.b16 %v1606
    %v1639 = vunpack.c.l.b16 %v1607
    %v1640 = vunpack.c.l.b16 %v1608
    %v1641 = vunpack.c.l.b16 %v1609
    %v1642 = vunpack.c.l.b16 %v1610
    %v1643 = vunpack.c.l.b16 %v1611
    %v1644 = vpack.c.b16 %v1629, %v1628
    %v1645 = vpack.c.b16 %v1631, %v1630
    %v1646 = vpack.c.b16 %v1633, %v1632
    %v1647 = vpack.c.b16 %v1635, %v1634
    %v1648 = vpack.c.b16 %v1637, %v1636
    %v1649 = vpack.c.b16 %v1639, %v1638
    %v1650 = vpack.c.b16 %v1641, %v1640
    %v1651 = vpack.c.b16 %v1643, %v1642
    %1660 = vmatpush.bf16.msra.mxu0 %v1651
    %1661 = vmatpush.bf16.msra.mxu0 %v1650
    %1662 = vmatpush.bf16.msra.mxu0 %v1649
    %1663 = vmatpush.bf16.msra.mxu0 %v1648
    %1664 = vmatpush.bf16.msra.mxu0 %v1647
    %1665 = vmatpush.bf16.msra.mxu0 %v1646
    %1666 = vmatpush.bf16.msra.mxu0 %v1645
    %1667 = vmatpush.bf16.msra.mxu0 %v1644
    %1668 = vmatmul.bf16.gmra.mxu0 %v1594
    %v1669 = vpop.f32.mrf.mxu0
    %v1670 = vadd.f32 0.0, %v1669
    %v1671 = vpop.f32.mrf.mxu0
    %1672 = vdwg.mxu0
    %v1673 = vadd.f32 %v1558, %v1670
    %s1674 = scalar_lea.vmem %s0, 26
    %v1675 = vld [vmem:[%s1674] sm:$0x3]
    %1677 = vst [vmem:[#allocation1] ss:$9 sm:$0xff] %v1675
    %v1678 = vld [vmem:[#allocation1] sm:$0xff]
    %v1679 = vld [vmem:[#allocation1 + $0x9] sm:$0xff]
    %1682 = vmatpush.bf16.msra.mxu0 %v165
    %1683 = vmatpush.bf16.msra.mxu0 %v164
    %1684 = vmatpush.bf16.msra.mxu0 %v163
    %1685 = vmatpush.bf16.msra.mxu0 %v162
    %1686 = vmatpush.bf16.msra.mxu0 %v161
    %1687 = vmatpush.bf16.msra.mxu0 %v160
    %1688 = vmatpush.bf16.msra.mxu0 %v159
    %1689 = vmatpush.bf16.msra.mxu0 %v158
    %1690 = vmatmul.bf16.gmra.mxu0 %v1678
    %v1691 = vpop.f32.mrf.mxu0
    %v1692 = vadd.f32 %v86, %v1691
    %v1693 = vpop.f32.mrf.mxu0
    %1694 = vdwg.mxu0
    %1695 = vmatpush.bf16.msra.mxu0 %v173
    %1696 = vmatpush.bf16.msra.mxu0 %v172
    %1697 = vmatpush.bf16.msra.mxu0 %v171
    %1698 = vmatpush.bf16.msra.mxu0 %v170
    %1699 = vmatpush.bf16.msra.mxu0 %v169
    %1700 = vmatpush.bf16.msra.mxu0 %v168
    %1701 = vmatpush.bf16.msra.mxu0 %v167
    %1702 = vmatpush.bf16.msra.mxu0 %v166
    %1703 = vmatmul.bf16.gmra.mxu0 %v1679
    %v1704 = vpop.f32.mrf.mxu0
    %v1705 = vadd.f32 %v1692, %v1704
    %v1706 = vpop.f32.mrf.mxu0
    %1707 = vdwg.mxu0
    %v1708 = vmax.f32 %v1705, 0.0
    %v1709 = vpack.c.bf16 %v1708, %v1708
    %s1710 = scalar_lea.vmem %s3, 832
    %v1711 = vld [vmem:[%s1710] sm:$0xf]
    %v1712 = vld [vmem:[%s1710 + $0x4] sm:$0xf]
    %v1713 = vld [vmem:[%s1710 + $0x8] sm:$0xf]
    %v1714 = vld [vmem:[%s1710 + $0xc] sm:$0xf]
    %v1715 = vld [vmem:[%s1710 + $0x10] sm:$0xf]
    %v1716 = vld [vmem:[%s1710 + $0x14] sm:$0xf]
    %v1717 = vld [vmem:[%s1710 + $0x18] sm:$0xf]
    %v1718 = vld [vmem:[%s1710 + $0x1c] sm:$0xf]
    %v1719 = vld [vmem:[%s1710 + $0x20] sm:$0xf]
    %v1720 = vld [vmem:[%s1710 + $0x24] sm:$0xf]
    %v1721 = vld [vmem:[%s1710 + $0x28] sm:$0xf]
    %v1722 = vld [vmem:[%s1710 + $0x2c] sm:$0xf]
    %v1723 = vld [vmem:[%s1710 + $0x30] sm:$0xf]
    %v1724 = vld [vmem:[%s1710 + $0x34] sm:$0xf]
    %v1725 = vld [vmem:[%s1710 + $0x38] sm:$0xf]
    %v1726 = vld [vmem:[%s1710 + $0x3c] sm:$0xf]
    %v1743 = vunpack.c.l.b16 %v1711
    %v1744 = vunpack.c.l.b16 %v1712
    %v1745 = vunpack.c.l.b16 %v1713
    %v1746 = vunpack.c.l.b16 %v1714
    %v1747 = vunpack.c.l.b16 %v1715
    %v1748 = vunpack.c.l.b16 %v1716
    %v1749 = vunpack.c.l.b16 %v1717
    %v1750 = vunpack.c.l.b16 %v1718
    %v1751 = vunpack.c.l.b16 %v1719
    %v1752 = vunpack.c.l.b16 %v1720
    %v1753 = vunpack.c.l.b16 %v1721
    %v1754 = vunpack.c.l.b16 %v1722
    %v1755 = vunpack.c.l.b16 %v1723
    %v1756 = vunpack.c.l.b16 %v1724
    %v1757 = vunpack.c.l.b16 %v1725
    %v1758 = vunpack.c.l.b16 %v1726
    %v1759 = vpack.c.b16 %v1744, %v1743
    %v1760 = vpack.c.b16 %v1746, %v1745
    %v1761 = vpack.c.b16 %v1748, %v1747
    %v1762 = vpack.c.b16 %v1750, %v1749
    %v1763 = vpack.c.b16 %v1752, %v1751
    %v1764 = vpack.c.b16 %v1754, %v1753
    %v1765 = vpack.c.b16 %v1756, %v1755
    %v1766 = vpack.c.b16 %v1758, %v1757
    %1775 = vmatpush.bf16.msra.mxu0 %v1766
    %1776 = vmatpush.bf16.msra.mxu0 %v1765
    %1777 = vmatpush.bf16.msra.mxu0 %v1764
    %1778 = vmatpush.bf16.msra.mxu0 %v1763
    %1779 = vmatpush.bf16.msra.mxu0 %v1762
    %1780 = vmatpush.bf16.msra.mxu0 %v1761
    %1781 = vmatpush.bf16.msra.mxu0 %v1760
    %1782 = vmatpush.bf16.msra.mxu0 %v1759
    %1783 = vmatmul.bf16.gmra.mxu0 %v1709
    %v1784 = vpop.f32.mrf.mxu0
    %v1785 = vadd.f32 0.0, %v1784
    %v1786 = vpop.f32.mrf.mxu0
    %1787 = vdwg.mxu0
    %v1788 = vadd.f32 %v1673, %v1785
    %s1789 = scalar_lea.vmem %s0, 28
    %v1790 = vld [vmem:[%s1789] sm:$0x3]
    %1792 = vst [vmem:[#allocation1] ss:$9 sm:$0xff] %v1790
    %v1793 = vld [vmem:[#allocation1] sm:$0xff]
    %v1794 = vld [vmem:[#allocation1 + $0x9] sm:$0xff]
    %1797 = vmatpush.bf16.msra.mxu0 %v165
    %1798 = vmatpush.bf16.msra.mxu0 %v164
    %1799 = vmatpush.bf16.msra.mxu0 %v163
    %1800 = vmatpush.bf16.msra.mxu0 %v162
    %1801 = vmatpush.bf16.msra.mxu0 %v161
    %1802 = vmatpush.bf16.msra.mxu0 %v160
    %1803 = vmatpush.bf16.msra.mxu0 %v159
    %1804 = vmatpush.bf16.msra.mxu0 %v158
    %1805 = vmatmul.bf16.gmra.mxu0 %v1793
    %v1806 = vpop.f32.mrf.mxu0
    %v1807 = vadd.f32 %v86, %v1806
    %v1808 = vpop.f32.mrf.mxu0
    %1809 = vdwg.mxu0
    %1810 = vmatpush.bf16.msra.mxu0 %v173
    %1811 = vmatpush.bf16.msra.mxu0 %v172
    %1812 = vmatpush.bf16.msra.mxu0 %v171
    %1813 = vmatpush.bf16.msra.mxu0 %v170
    %1814 = vmatpush.bf16.msra.mxu0 %v169
    %1815 = vmatpush.bf16.msra.mxu0 %v168
    %1816 = vmatpush.bf16.msra.mxu0 %v167
    %1817 = vmatpush.bf16.msra.mxu0 %v166
    %1818 = vmatmul.bf16.gmra.mxu0 %v1794
    %v1819 = vpop.f32.mrf.mxu0
    %v1820 = vadd.f32 %v1807, %v1819
    %v1821 = vpop.f32.mrf.mxu0
    %1822 = vdwg.mxu0
    %v1823 = vmax.f32 %v1820, 0.0
    %v1824 = vpack.c.bf16 %v1823, %v1823
    %s1825 = scalar_lea.vmem %s3, 896
    %v1826 = vld [vmem:[%s1825] sm:$0xf]
    %v1827 = vld [vmem:[%s1825 + $0x4] sm:$0xf]
    %v1828 = vld [vmem:[%s1825 + $0x8] sm:$0xf]
    %v1829 = vld [vmem:[%s1825 + $0xc] sm:$0xf]
    %v1830 = vld [vmem:[%s1825 + $0x10] sm:$0xf]
    %v1831 = vld [vmem:[%s1825 + $0x14] sm:$0xf]
    %v1832 = vld [vmem:[%s1825 + $0x18] sm:$0xf]
    %v1833 = vld [vmem:[%s1825 + $0x1c] sm:$0xf]
    %v1834 = vld [vmem:[%s1825 + $0x20] sm:$0xf]
    %v1835 = vld [vmem:[%s1825 + $0x24] sm:$0xf]
    %v1836 = vld [vmem:[%s1825 + $0x28] sm:$0xf]
    %v1837 = vld [vmem:[%s1825 + $0x2c] sm:$0xf]
    %v1838 = vld [vmem:[%s1825 + $0x30] sm:$0xf]
    %v1839 = vld [vmem:[%s1825 + $0x34] sm:$0xf]
    %v1840 = vld [vmem:[%s1825 + $0x38] sm:$0xf]
    %v1841 = vld [vmem:[%s1825 + $0x3c] sm:$0xf]
    %v1858 = vunpack.c.l.b16 %v1826
    %v1859 = vunpack.c.l.b16 %v1827
    %v1860 = vunpack.c.l.b16 %v1828
    %v1861 = vunpack.c.l.b16 %v1829
    %v1862 = vunpack.c.l.b16 %v1830
    %v1863 = vunpack.c.l.b16 %v1831
    %v1864 = vunpack.c.l.b16 %v1832
    %v1865 = vunpack.c.l.b16 %v1833
    %v1866 = vunpack.c.l.b16 %v1834
    %v1867 = vunpack.c.l.b16 %v1835
    %v1868 = vunpack.c.l.b16 %v1836
    %v1869 = vunpack.c.l.b16 %v1837
    %v1870 = vunpack.c.l.b16 %v1838
    %v1871 = vunpack.c.l.b16 %v1839
    %v1872 = vunpack.c.l.b16 %v1840
    %v1873 = vunpack.c.l.b16 %v1841
    %v1874 = vpack.c.b16 %v1859, %v1858
    %v1875 = vpack.c.b16 %v1861, %v1860
    %v1876 = vpack.c.b16 %v1863, %v1862
    %v1877 = vpack.c.b16 %v1865, %v1864
    %v1878 = vpack.c.b16 %v1867, %v1866
    %v1879 = vpack.c.b16 %v1869, %v1868
    %v1880 = vpack.c.b16 %v1871, %v1870
    %v1881 = vpack.c.b16 %v1873, %v1872
    %1890 = vmatpush.bf16.msra.mxu0 %v1881
    %1891 = vmatpush.bf16.msra.mxu0 %v1880
    %1892 = vmatpush.bf16.msra.mxu0 %v1879
    %1893 = vmatpush.bf16.msra.mxu0 %v1878
    %1894 = vmatpush.bf16.msra.mxu0 %v1877
    %1895 = vmatpush.bf16.msra.mxu0 %v1876
    %1896 = vmatpush.bf16.msra.mxu0 %v1875
    %1897 = vmatpush.bf16.msra.mxu0 %v1874
    %1898 = vmatmul.bf16.gmra.mxu0 %v1824
    %v1899 = vpop.f32.mrf.mxu0
    %v1900 = vadd.f32 0.0, %v1899
    %v1901 = vpop.f32.mrf.mxu0
    %1902 = vdwg.mxu0
    %v1903 = vadd.f32 %v1788, %v1900
    %s1904 = scalar_lea.vmem %s0, 30
    %v1905 = vld [vmem:[%s1904] sm:$0x3]
    %1907 = vst [vmem:[#allocation1] ss:$9 sm:$0xff] %v1905
    %v1908 = vld [vmem:[#allocation1] sm:$0xff]
    %v1909 = vld [vmem:[#allocation1 + $0x9] sm:$0xff]
    %1912 = vmatpush.bf16.msra.mxu0 %v165
    %1913 = vmatpush.bf16.msra.mxu0 %v164
    %1914 = vmatpush.bf16.msra.mxu0 %v163
    %1915 = vmatpush.bf16.msra.mxu0 %v162
    %1916 = vmatpush.bf16.msra.mxu0 %v161
    %1917 = vmatpush.bf16.msra.mxu0 %v160
    %1918 = vmatpush.bf16.msra.mxu0 %v159
    %1919 = vmatpush.bf16.msra.mxu0 %v158
    %1920 = vmatmul.bf16.gmra.mxu0 %v1908
    %v1921 = vpop.f32.mrf.mxu0
    %v1922 = vadd.f32 %v86, %v1921
    %v1923 = vpop.f32.mrf.mxu0
    %1924 = vdwg.mxu0
    %1925 = vmatpush.bf16.msra.mxu0 %v173
    %1926 = vmatpush.bf16.msra.mxu0 %v172
    %1927 = vmatpush.bf16.msra.mxu0 %v171
    %1928 = vmatpush.bf16.msra.mxu0 %v170
    %1929 = vmatpush.bf16.msra.mxu0 %v169
    %1930 = vmatpush.bf16.msra.mxu0 %v168
    %1931 = vmatpush.bf16.msra.mxu0 %v167
    %1932 = vmatpush.bf16.msra.mxu0 %v166
    %1933 = vmatmul.bf16.gmra.mxu0 %v1909
    %v1934 = vpop.f32.mrf.mxu0
    %v1935 = vadd.f32 %v1922, %v1934
    %v1936 = vpop.f32.mrf.mxu0
    %1937 = vdwg.mxu0
    %v1938 = vmax.f32 %v1935, 0.0
    %v1939 = vpack.c.bf16 %v1938, %v1938
    %s1940 = scalar_lea.vmem %s3, 960
    %v1941 = vld [vmem:[%s1940] sm:$0xf]
    %v1942 = vld [vmem:[%s1940 + $0x4] sm:$0xf]
    %v1943 = vld [vmem:[%s1940 + $0x8] sm:$0xf]
    %v1944 = vld [vmem:[%s1940 + $0xc] sm:$0xf]
    %v1945 = vld [vmem:[%s1940 + $0x10] sm:$0xf]
    %v1946 = vld [vmem:[%s1940 + $0x14] sm:$0xf]
    %v1947 = vld [vmem:[%s1940 + $0x18] sm:$0xf]
    %v1948 = vld [vmem:[%s1940 + $0x1c] sm:$0xf]
    %v1949 = vld [vmem:[%s1940 + $0x20] sm:$0xf]
    %v1950 = vld [vmem:[%s1940 + $0x24] sm:$0xf]
    %v1951 = vld [vmem:[%s1940 + $0x28] sm:$0xf]
    %v1952 = vld [vmem:[%s1940 + $0x2c] sm:$0xf]
    %v1953 = vld [vmem:[%s1940 + $0x30] sm:$0xf]
    %v1954 = vld [vmem:[%s1940 + $0x34] sm:$0xf]
    %v1955 = vld [vmem:[%s1940 + $0x38] sm:$0xf]
    %v1956 = vld [vmem:[%s1940 + $0x3c] sm:$0xf]
    %v1973 = vunpack.c.l.b16 %v1941
    %v1974 = vunpack.c.l.b16 %v1942
    %v1975 = vunpack.c.l.b16 %v1943
    %v1976 = vunpack.c.l.b16 %v1944
    %v1977 = vunpack.c.l.b16 %v1945
    %v1978 = vunpack.c.l.b16 %v1946
    %v1979 = vunpack.c.l.b16 %v1947
    %v1980 = vunpack.c.l.b16 %v1948
    %v1981 = vunpack.c.l.b16 %v1949
    %v1982 = vunpack.c.l.b16 %v1950
    %v1983 = vunpack.c.l.b16 %v1951
    %v1984 = vunpack.c.l.b16 %v1952
    %v1985 = vunpack.c.l.b16 %v1953
    %v1986 = vunpack.c.l.b16 %v1954
    %v1987 = vunpack.c.l.b16 %v1955
    %v1988 = vunpack.c.l.b16 %v1956
    %v1989 = vpack.c.b16 %v1974, %v1973
    %v1990 = vpack.c.b16 %v1976, %v1975
    %v1991 = vpack.c.b16 %v1978, %v1977
    %v1992 = vpack.c.b16 %v1980, %v1979
    %v1993 = vpack.c.b16 %v1982, %v1981
    %v1994 = vpack.c.b16 %v1984, %v1983
    %v1995 = vpack.c.b16 %v1986, %v1985
    %v1996 = vpack.c.b16 %v1988, %v1987
    %2005 = vmatpush.bf16.msra.mxu0 %v1996
    %2006 = vmatpush.bf16.msra.mxu0 %v1995
    %2007 = vmatpush.bf16.msra.mxu0 %v1994
    %2008 = vmatpush.bf16.msra.mxu0 %v1993
    %2009 = vmatpush.bf16.msra.mxu0 %v1992
    %2010 = vmatpush.bf16.msra.mxu0 %v1991
    %2011 = vmatpush.bf16.msra.mxu0 %v1990
    %2012 = vmatpush.bf16.msra.mxu0 %v1989
    %2013 = vmatmul.bf16.gmra.mxu0 %v1939
    %v2014 = vpop.f32.mrf.mxu0
    %v2015 = vadd.f32 0.0, %v2014
    %v2016 = vpop.f32.mrf.mxu0
    %2017 = vdwg.mxu0
    %v2018 = vadd.f32 %v1903, %v2015
    %v2019 = vld [vmem:[%s4] sm:$0x1]
    %v2021 = vperm.slane %v2019, 0
    %v2023 = vadd.f32 %v2018, %v2021
    %v2024 = vmax.f32 %v2023, 0.0
    %v2025 = vpack.c.bf16 %v2024, %v2024
    %v2026 = vld [vmem:[%s5] sm:$0xf]
    %v2027 = vld [vmem:[%s5 + $0x4] sm:$0xf]
    %v2028 = vld [vmem:[%s5 + $0x8] sm:$0xf]
    %v2029 = vld [vmem:[%s5 + $0xc] sm:$0xf]
    %v2030 = vld [vmem:[%s5 + $0x10] sm:$0xf]
    %v2031 = vld [vmem:[%s5 + $0x14] sm:$0xf]
    %v2032 = vld [vmem:[%s5 + $0x18] sm:$0xf]
    %v2033 = vld [vmem:[%s5 + $0x1c] sm:$0xf]
    %v2034 = vld [vmem:[%s5 + $0x20] sm:$0xf]
    %v2035 = vld [vmem:[%s5 + $0x24] sm:$0xf]
    %v2036 = vld [vmem:[%s5 + $0x28] sm:$0xf]
    %v2037 = vld [vmem:[%s5 + $0x2c] sm:$0xf]
    %v2038 = vld [vmem:[%s5 + $0x30] sm:$0xf]
    %v2039 = vld [vmem:[%s5 + $0x34] sm:$0xf]
    %v2040 = vld [vmem:[%s5 + $0x38] sm:$0xf]
    %v2041 = vld [vmem:[%s5 + $0x3c] sm:$0xf]
    %v2042 = vld [vmem:[%s6] sm:$0x1]
    %v2044 = vperm.slane %v2042, 0
    %v2062 = vunpack.c.l.b16 %v2026
    %v2063 = vunpack.c.l.b16 %v2027
    %v2064 = vunpack.c.l.b16 %v2028
    %v2065 = vunpack.c.l.b16 %v2029
    %v2066 = vunpack.c.l.b16 %v2030
    %v2067 = vunpack.c.l.b16 %v2031
    %v2068 = vunpack.c.l.b16 %v2032
    %v2069 = vunpack.c.l.b16 %v2033
    %v2070 = vunpack.c.l.b16 %v2034
    %v2071 = vunpack.c.l.b16 %v2035
    %v2072 = vunpack.c.l.b16 %v2036
    %v2073 = vunpack.c.l.b16 %v2037
    %v2074 = vunpack.c.l.b16 %v2038
    %v2075 = vunpack.c.l.b16 %v2039
    %v2076 = vunpack.c.l.b16 %v2040
    %v2077 = vunpack.c.l.b16 %v2041
    %v2078 = vpack.c.b16 %v2063, %v2062
    %v2079 = vpack.c.b16 %v2065, %v2064
    %v2080 = vpack.c.b16 %v2067, %v2066
    %v2081 = vpack.c.b16 %v2069, %v2068
    %v2082 = vpack.c.b16 %v2071, %v2070
    %v2083 = vpack.c.b16 %v2073, %v2072
    %v2084 = vpack.c.b16 %v2075, %v2074
    %v2085 = vpack.c.b16 %v2077, %v2076
    %2094 = vmatpush.bf16.msra.mxu0 %v2085
    %2095 = vmatpush.bf16.msra.mxu0 %v2084
    %2096 = vmatpush.bf16.msra.mxu0 %v2083
    %2097 = vmatpush.bf16.msra.mxu0 %v2082
    %2098 = vmatpush.bf16.msra.mxu0 %v2081
    %2099 = vmatpush.bf16.msra.mxu0 %v2080
    %2100 = vmatpush.bf16.msra.mxu0 %v2079
    %2101 = vmatpush.bf16.msra.mxu0 %v2078
    %2102 = vmatmul.bf16.gmra.mxu0 %v2025
    %v2103 = vpop.f32.mrf.mxu0
    %v2104 = vadd.f32 %v2044, %v2103
    %v2105 = vpop.f32.mrf.mxu0
    %2106 = vdwg.mxu0
    %v2107 = vmax.f32 %v2104, 0.0
    %v2108 = vpack.c.bf16 %v2107, %v2107
    %v2109 = vld [vmem:[%s7] sm:$0xff]
    %v2110 = vld [vmem:[%s7 + $0x8] sm:$0xff]
    %v2111 = vld [vmem:[%s7 + $0x10] sm:$0xff]
    %v2112 = vld [vmem:[%s7 + $0x18] sm:$0xff]
    %v2113 = vld [vmem:[%s7 + $0x20] sm:$0xff]
    %v2114 = vld [vmem:[%s7 + $0x28] sm:$0xff]
    %v2115 = vld [vmem:[%s7 + $0x30] sm:$0xff]
    %v2116 = vld [vmem:[%s7 + $0x38] sm:$0xff]
    %v2117 = vld [vmem:[%s7 + $0x40] sm:$0xff]
    %v2118 = vld [vmem:[%s7 + $0x48] sm:$0xff]
    %v2119 = vld [vmem:[%s7 + $0x50] sm:$0xff]
    %v2120 = vld [vmem:[%s7 + $0x58] sm:$0xff]
    %v2121 = vld [vmem:[%s7 + $0x60] sm:$0xff]
    %v2122 = vld [vmem:[%s7 + $0x68] sm:$0xff]
    %v2123 = vld [vmem:[%s7 + $0x70] sm:$0xff]
    %v2124 = vld [vmem:[%s7 + $0x78] sm:$0xff]
    %v2125 = vld [vmem:[%s8] sm:$0x3]
    %v2127 = vperm.slane %v2125, 0
    %v2128 = vperm.slane %v2125, 1
    %v2147 = vunpack.c.l.b16 %v2109
    %v2148 = vunpack.c.h.b16 %v2109
    %v2149 = vunpack.c.l.b16 %v2110
    %v2150 = vunpack.c.h.b16 %v2110
    %v2151 = vunpack.c.l.b16 %v2111
    %v2152 = vunpack.c.h.b16 %v2111
    %v2153 = vunpack.c.l.b16 %v2112
    %v2154 = vunpack.c.h.b16 %v2112
    %v2155 = vunpack.c.l.b16 %v2113
    %v2156 = vunpack.c.h.b16 %v2113
    %v2157 = vunpack.c.l.b16 %v2114
    %v2158 = vunpack.c.h.b16 %v2114
    %v2159 = vunpack.c.l.b16 %v2115
    %v2160 = vunpack.c.h.b16 %v2115
    %v2161 = vunpack.c.l.b16 %v2116
    %v2162 = vunpack.c.h.b16 %v2116
    %v2163 = vunpack.c.l.b16 %v2117
    %v2164 = vunpack.c.h.b16 %v2117
    %v2165 = vunpack.c.l.b16 %v2118
    %v2166 = vunpack.c.h.b16 %v2118
    %v2167 = vunpack.c.l.b16 %v2119
    %v2168 = vunpack.c.h.b16 %v2119
    %v2169 = vunpack.c.l.b16 %v2120
    %v2170 = vunpack.c.h.b16 %v2120
    %v2171 = vunpack.c.l.b16 %v2121
    %v2172 = vunpack.c.h.b16 %v2121
    %v2173 = vunpack.c.l.b16 %v2122
    %v2174 = vunpack.c.h.b16 %v2122
    %v2175 = vunpack.c.l.b16 %v2123
    %v2176 = vunpack.c.h.b16 %v2123
    %v2177 = vunpack.c.l.b16 %v2124
    %v2178 = vunpack.c.h.b16 %v2124
    %v2179 = vpack.c.b16 %v2149, %v2147
    %v2180 = vpack.c.b16 %v2150, %v2148
    %v2181 = vpack.c.b16 %v2153, %v2151
    %v2182 = vpack.c.b16 %v2154, %v2152
    %v2183 = vpack.c.b16 %v2157, %v2155
    %v2184 = vpack.c.b16 %v2158, %v2156
    %v2185 = vpack.c.b16 %v2161, %v2159
    %v2186 = vpack.c.b16 %v2162, %v2160
    %v2187 = vpack.c.b16 %v2165, %v2163
    %v2188 = vpack.c.b16 %v2166, %v2164
    %v2189 = vpack.c.b16 %v2169, %v2167
    %v2190 = vpack.c.b16 %v2170, %v2168
    %v2191 = vpack.c.b16 %v2173, %v2171
    %v2192 = vpack.c.b16 %v2174, %v2172
    %v2193 = vpack.c.b16 %v2177, %v2175
    %v2194 = vpack.c.b16 %v2178, %v2176
    %2211 = vmatpush.bf16.msra.mxu0 %v2193
    %2212 = vmatpush.bf16.msra.mxu0 %v2191
    %2213 = vmatpush.bf16.msra.mxu0 %v2189
    %2214 = vmatpush.bf16.msra.mxu0 %v2187
    %2215 = vmatpush.bf16.msra.mxu0 %v2185
    %2216 = vmatpush.bf16.msra.mxu0 %v2183
    %2217 = vmatpush.bf16.msra.mxu0 %v2181
    %2218 = vmatpush.bf16.msra.mxu0 %v2179
    %2219 = vmatmul.bf16.gmra.mxu0 %v2108
    %v2220 = vpop.f32.mrf.mxu0
    %v2221 = vadd.f32 %v2127, %v2220
    %v2222 = vpop.f32.mrf.mxu0
    %2223 = vdwg.mxu0
    %2224 = vmatpush.bf16.msra.mxu0 %v2194
    %2225 = vmatpush.bf16.msra.mxu0 %v2192
    %2226 = vmatpush.bf16.msra.mxu0 %v2190
    %2227 = vmatpush.bf16.msra.mxu0 %v2188
    %2228 = vmatpush.bf16.msra.mxu0 %v2186
    %2229 = vmatpush.bf16.msra.mxu0 %v2184
    %2230 = vmatpush.bf16.msra.mxu0 %v2182
    %2231 = vmatpush.bf16.msra.mxu0 %v2180
    %2232 = vmatmul.bf16.gmra.mxu0 %v2108
    %v2233 = vpop.f32.mrf.mxu0
    %v2234 = vadd.f32 %v2128, %v2233
    %v2235 = vpop.f32.mrf.mxu0
    %2236 = vdwg.mxu0
    %v2237 = vmax.f32 %v2221, 0.0
    %v2238 = vmax.f32 %v2234, 0.0
    %v2239 = vpack.c.bf16 %v2237, %v2237
    %v2240 = vpack.c.bf16 %v2238, %v2238
    %v2241 = vld [vmem:[%s9] sm:$0xff]
    %v2242 = vld [vmem:[%s9 + $0x8] sm:$0xff]
    %v2243 = vld [vmem:[%s9 + $0x10] sm:$0xff]
    %v2244 = vld [vmem:[%s9 + $0x18] sm:$0xff]
    %v2245 = vld [vmem:[%s9 + $0x20] sm:$0xff]
    %v2246 = vld [vmem:[%s9 + $0x28] sm:$0xff]
    %v2247 = vld [vmem:[%s9 + $0x30] sm:$0xff]
    %v2248 = vld [vmem:[%s9 + $0x38] sm:$0xff]
    %v2249 = vld [vmem:[%s9 + $0x40] sm:$0xff]
    %v2250 = vld [vmem:[%s9 + $0x48] sm:$0xff]
    %v2251 = vld [vmem:[%s9 + $0x50] sm:$0xff]
    %v2252 = vld [vmem:[%s9 + $0x58] sm:$0xff]
    %v2253 = vld [vmem:[%s9 + $0x60] sm:$0xff]
    %v2254 = vld [vmem:[%s9 + $0x68] sm:$0xff]
    %v2255 = vld [vmem:[%s9 + $0x70] sm:$0xff]
    %v2256 = vld [vmem:[%s9 + $0x78] sm:$0xff]
    %v2257 = vld [vmem:[%s9 + $0x80] sm:$0xff]
    %v2258 = vld [vmem:[%s9 + $0x88] sm:$0xff]
    %v2259 = vld [vmem:[%s9 + $0x90] sm:$0xff]
    %v2260 = vld [vmem:[%s9 + $0x98] sm:$0xff]
    %v2261 = vld [vmem:[%s9 + $0xa0] sm:$0xff]
    %v2262 = vld [vmem:[%s9 + $0xa8] sm:$0xff]
    %v2263 = vld [vmem:[%s9 + $0xb0] sm:$0xff]
    %v2264 = vld [vmem:[%s9 + $0xb8] sm:$0xff]
    %v2265 = vld [vmem:[%s9 + $0xc0] sm:$0xff]
    %v2266 = vld [vmem:[%s9 + $0xc8] sm:$0xff]
    %v2267 = vld [vmem:[%s9 + $0xd0] sm:$0xff]
    %v2268 = vld [vmem:[%s9 + $0xd8] sm:$0xff]
    %v2269 = vld [vmem:[%s9 + $0xe0] sm:$0xff]
    %v2270 = vld [vmem:[%s9 + $0xe8] sm:$0xff]
    %v2271 = vld [vmem:[%s9 + $0xf0] sm:$0xff]
    %v2272 = vld [vmem:[%s9 + $0xf8] sm:$0xff]
    %v2273 = vld [vmem:[%s10] sm:$0x3]
    %v2275 = vperm.slane %v2273, 0
    %v2276 = vperm.slane %v2273, 1
    %v2311 = vunpack.c.l.b16 %v2241
    %v2312 = vunpack.c.h.b16 %v2241
    %v2313 = vunpack.c.l.b16 %v2242
    %v2314 = vunpack.c.h.b16 %v2242
    %v2315 = vunpack.c.l.b16 %v2243
    %v2316 = vunpack.c.h.b16 %v2243
    %v2317 = vunpack.c.l.b16 %v2244
    %v2318 = vunpack.c.h.b16 %v2244
    %v2319 = vunpack.c.l.b16 %v2245
    %v2320 = vunpack.c.h.b16 %v2245
    %v2321 = vunpack.c.l.b16 %v2246
    %v2322 = vunpack.c.h.b16 %v2246
    %v2323 = vunpack.c.l.b16 %v2247
    %v2324 = vunpack.c.h.b16 %v2247
    %v2325 = vunpack.c.l.b16 %v2248
    %v2326 = vunpack.c.h.b16 %v2248
    %v2327 = vunpack.c.l.b16 %v2249
    %v2328 = vunpack.c.h.b16 %v2249
    %v2329 = vunpack.c.l.b16 %v2250
    %v2330 = vunpack.c.h.b16 %v2250
    %v2331 = vunpack.c.l.b16 %v2251
    %v2332 = vunpack.c.h.b16 %v2251
    %v2333 = vunpack.c.l.b16 %v2252
    %v2334 = vunpack.c.h.b16 %v2252
    %v2335 = vunpack.c.l.b16 %v2253
    %v2336 = vunpack.c.h.b16 %v2253
    %v2337 = vunpack.c.l.b16 %v2254
    %v2338 = vunpack.c.h.b16 %v2254
    %v2339 = vunpack.c.l.b16 %v2255
    %v2340 = vunpack.c.h.b16 %v2255
    %v2341 = vunpack.c.l.b16 %v2256
    %v2342 = vunpack.c.h.b16 %v2256
    %v2343 = vunpack.c.l.b16 %v2257
    %v2344 = vunpack.c.h.b16 %v2257
    %v2345 = vunpack.c.l.b16 %v2258
    %v2346 = vunpack.c.h.b16 %v2258
    %v2347 = vunpack.c.l.b16 %v2259
    %v2348 = vunpack.c.h.b16 %v2259
    %v2349 = vunpack.c.l.b16 %v2260
    %v2350 = vunpack.c.h.b16 %v2260
    %v2351 = vunpack.c.l.b16 %v2261
    %v2352 = vunpack.c.h.b16 %v2261
    %v2353 = vunpack.c.l.b16 %v2262
    %v2354 = vunpack.c.h.b16 %v2262
    %v2355 = vunpack.c.l.b16 %v2263
    %v2356 = vunpack.c.h.b16 %v2263
    %v2357 = vunpack.c.l.b16 %v2264
    %v2358 = vunpack.c.h.b16 %v2264
    %v2359 = vunpack.c.l.b16 %v2265
    %v2360 = vunpack.c.h.b16 %v2265
    %v2361 = vunpack.c.l.b16 %v2266
    %v2362 = vunpack.c.h.b16 %v2266
    %v2363 = vunpack.c.l.b16 %v2267
    %v2364 = vunpack.c.h.b16 %v2267
    %v2365 = vunpack.c.l.b16 %v2268
    %v2366 = vunpack.c.h.b16 %v2268
    %v2367 = vunpack.c.l.b16 %v2269
    %v2368 = vunpack.c.h.b16 %v2269
    %v2369 = vunpack.c.l.b16 %v2270
    %v2370 = vunpack.c.h.b16 %v2270
    %v2371 = vunpack.c.l.b16 %v2271
    %v2372 = vunpack.c.h.b16 %v2271
    %v2373 = vunpack.c.l.b16 %v2272
    %v2374 = vunpack.c.h.b16 %v2272
    %v2375 = vpack.c.b16 %v2313, %v2311
    %v2376 = vpack.c.b16 %v2314, %v2312
    %v2377 = vpack.c.b16 %v2317, %v2315
    %v2378 = vpack.c.b16 %v2318, %v2316
    %v2379 = vpack.c.b16 %v2321, %v2319
    %v2380 = vpack.c.b16 %v2322, %v2320
    %v2381 = vpack.c.b16 %v2325, %v2323
    %v2382 = vpack.c.b16 %v2326, %v2324
    %v2383 = vpack.c.b16 %v2329, %v2327
    %v2384 = vpack.c.b16 %v2330, %v2328
    %v2385 = vpack.c.b16 %v2333, %v2331
    %v2386 = vpack.c.b16 %v2334, %v2332
    %v2387 = vpack.c.b16 %v2337, %v2335
    %v2388 = vpack.c.b16 %v2338, %v2336
    %v2389 = vpack.c.b16 %v2341, %v2339
    %v2390 = vpack.c.b16 %v2342, %v2340
    %v2391 = vpack.c.b16 %v2345, %v2343
    %v2392 = vpack.c.b16 %v2346, %v2344
    %v2393 = vpack.c.b16 %v2349, %v2347
    %v2394 = vpack.c.b16 %v2350, %v2348
    %v2395 = vpack.c.b16 %v2353, %v2351
    %v2396 = vpack.c.b16 %v2354, %v2352
    %v2397 = vpack.c.b16 %v2357, %v2355
    %v2398 = vpack.c.b16 %v2358, %v2356
    %v2399 = vpack.c.b16 %v2361, %v2359
    %v2400 = vpack.c.b16 %v2362, %v2360
    %v2401 = vpack.c.b16 %v2365, %v2363
    %v2402 = vpack.c.b16 %v2366, %v2364
    %v2403 = vpack.c.b16 %v2369, %v2367
    %v2404 = vpack.c.b16 %v2370, %v2368
    %v2405 = vpack.c.b16 %v2373, %v2371
    %v2406 = vpack.c.b16 %v2374, %v2372
    %2439 = vmatpush.bf16.msra.mxu0 %v2389
    %2440 = vmatpush.bf16.msra.mxu0 %v2387
    %2441 = vmatpush.bf16.msra.mxu0 %v2385
    %2442 = vmatpush.bf16.msra.mxu0 %v2383
    %2443 = vmatpush.bf16.msra.mxu0 %v2381
    %2444 = vmatpush.bf16.msra.mxu0 %v2379
    %2445 = vmatpush.bf16.msra.mxu0 %v2377
    %2446 = vmatpush.bf16.msra.mxu0 %v2375
    %2447 = vmatmul.bf16.gmra.mxu0 %v2239
    %v2448 = vpop.f32.mrf.mxu0
    %v2449 = vadd.f32 %v2275, %v2448
    %v2450 = vpop.f32.mrf.mxu0
    %2451 = vdwg.mxu0
    %2452 = vmatpush.bf16.msra.mxu0 %v2405
    %2453 = vmatpush.bf16.msra.mxu0 %v2403
    %2454 = vmatpush.bf16.msra.mxu0 %v2401
    %2455 = vmatpush.bf16.msra.mxu0 %v2399
    %2456 = vmatpush.bf16.msra.mxu0 %v2397
    %2457 = vmatpush.bf16.msra.mxu0 %v2395
    %2458 = vmatpush.bf16.msra.mxu0 %v2393
    %2459 = vmatpush.bf16.msra.mxu0 %v2391
    %2460 = vmatmul.bf16.gmra.mxu0 %v2240
    %v2461 = vpop.f32.mrf.mxu0
    %v2462 = vadd.f32 %v2449, %v2461
    %v2463 = vpop.f32.mrf.mxu0
    %2464 = vdwg.mxu0
    %2465 = vmatpush.bf16.msra.mxu0 %v2390
    %2466 = vmatpush.bf16.msra.mxu0 %v2388
    %2467 = vmatpush.bf16.msra.mxu0 %v2386
    %2468 = vmatpush.bf16.msra.mxu0 %v2384
    %2469 = vmatpush.bf16.msra.mxu0 %v2382
    %2470 = vmatpush.bf16.msra.mxu0 %v2380
    %2471 = vmatpush.bf16.msra.mxu0 %v2378
    %2472 = vmatpush.bf16.msra.mxu0 %v2376
    %2473 = vmatmul.bf16.gmra.mxu0 %v2239
    %v2474 = vpop.f32.mrf.mxu0
    %v2475 = vadd.f32 %v2276, %v2474
    %v2476 = vpop.f32.mrf.mxu0
    %2477 = vdwg.mxu0
    %2478 = vmatpush.bf16.msra.mxu0 %v2406
    %2479 = vmatpush.bf16.msra.mxu0 %v2404
    %2480 = vmatpush.bf16.msra.mxu0 %v2402
    %2481 = vmatpush.bf16.msra.mxu0 %v2400
    %2482 = vmatpush.bf16.msra.mxu0 %v2398
    %2483 = vmatpush.bf16.msra.mxu0 %v2396
    %2484 = vmatpush.bf16.msra.mxu0 %v2394
    %2485 = vmatpush.bf16.msra.mxu0 %v2392
    %2486 = vmatmul.bf16.gmra.mxu0 %v2240
    %v2487 = vpop.f32.mrf.mxu0
    %v2488 = vadd.f32 %v2475, %v2487
    %v2489 = vpop.f32.mrf.mxu0
    %2490 = vdwg.mxu0
    %v2491 = vmax.f32 %v2462, 0.0
    %v2492 = vmax.f32 %v2488, 0.0
    %v2493 = vpack.c.bf16 %v2491, %v2491
    %v2494 = vpack.c.bf16 %v2492, %v2492
    %v2495 = vld [vmem:[%s11] sm:$0xf]
    %v2496 = vld [vmem:[%s11 + $0x4] sm:$0xf]
    %v2497 = vld [vmem:[%s11 + $0x8] sm:$0xf]
    %v2498 = vld [vmem:[%s11 + $0xc] sm:$0xf]
    %v2499 = vld [vmem:[%s11 + $0x10] sm:$0xf]
    %v2500 = vld [vmem:[%s11 + $0x14] sm:$0xf]
    %v2501 = vld [vmem:[%s11 + $0x18] sm:$0xf]
    %v2502 = vld [vmem:[%s11 + $0x1c] sm:$0xf]
    %v2503 = vld [vmem:[%s11 + $0x20] sm:$0xf]
    %v2504 = vld [vmem:[%s11 + $0x24] sm:$0xf]
    %v2505 = vld [vmem:[%s11 + $0x28] sm:$0xf]
    %v2506 = vld [vmem:[%s11 + $0x2c] sm:$0xf]
    %v2507 = vld [vmem:[%s11 + $0x30] sm:$0xf]
    %v2508 = vld [vmem:[%s11 + $0x34] sm:$0xf]
    %v2509 = vld [vmem:[%s11 + $0x38] sm:$0xf]
    %v2510 = vld [vmem:[%s11 + $0x3c] sm:$0xf]
    %v2511 = vld [vmem:[%s11 + $0x40] sm:$0xf]
    %v2512 = vld [vmem:[%s11 + $0x44] sm:$0xf]
    %v2513 = vld [vmem:[%s11 + $0x48] sm:$0xf]
    %v2514 = vld [vmem:[%s11 + $0x4c] sm:$0xf]
    %v2515 = vld [vmem:[%s11 + $0x50] sm:$0xf]
    %v2516 = vld [vmem:[%s11 + $0x54] sm:$0xf]
    %v2517 = vld [vmem:[%s11 + $0x58] sm:$0xf]
    %v2518 = vld [vmem:[%s11 + $0x5c] sm:$0xf]
    %v2519 = vld [vmem:[%s11 + $0x60] sm:$0xf]
    %v2520 = vld [vmem:[%s11 + $0x64] sm:$0xf]
    %v2521 = vld [vmem:[%s11 + $0x68] sm:$0xf]
    %v2522 = vld [vmem:[%s11 + $0x6c] sm:$0xf]
    %v2523 = vld [vmem:[%s11 + $0x70] sm:$0xf]
    %v2524 = vld [vmem:[%s11 + $0x74] sm:$0xf]
    %v2525 = vld [vmem:[%s11 + $0x78] sm:$0xf]
    %v2526 = vld [vmem:[%s11 + $0x7c] sm:$0xf]
    %v2527 = vld [vmem:[%s12] sm:$0x1]
    %v2529 = vperm.slane %v2527, 0
    %v2563 = vunpack.c.l.b16 %v2495
    %v2564 = vunpack.c.l.b16 %v2496
    %v2565 = vunpack.c.l.b16 %v2497
    %v2566 = vunpack.c.l.b16 %v2498
    %v2567 = vunpack.c.l.b16 %v2499
    %v2568 = vunpack.c.l.b16 %v2500
    %v2569 = vunpack.c.l.b16 %v2501
    %v2570 = vunpack.c.l.b16 %v2502
    %v2571 = vunpack.c.l.b16 %v2503
    %v2572 = vunpack.c.l.b16 %v2504
    %v2573 = vunpack.c.l.b16 %v2505
    %v2574 = vunpack.c.l.b16 %v2506
    %v2575 = vunpack.c.l.b16 %v2507
    %v2576 = vunpack.c.l.b16 %v2508
    %v2577 = vunpack.c.l.b16 %v2509
    %v2578 = vunpack.c.l.b16 %v2510
    %v2579 = vunpack.c.l.b16 %v2511
    %v2580 = vunpack.c.l.b16 %v2512
    %v2581 = vunpack.c.l.b16 %v2513
    %v2582 = vunpack.c.l.b16 %v2514
    %v2583 = vunpack.c.l.b16 %v2515
    %v2584 = vunpack.c.l.b16 %v2516
    %v2585 = vunpack.c.l.b16 %v2517
    %v2586 = vunpack.c.l.b16 %v2518
    %v2587 = vunpack.c.l.b16 %v2519
    %v2588 = vunpack.c.l.b16 %v2520
    %v2589 = vunpack.c.l.b16 %v2521
    %v2590 = vunpack.c.l.b16 %v2522
    %v2591 = vunpack.c.l.b16 %v2523
    %v2592 = vunpack.c.l.b16 %v2524
    %v2593 = vunpack.c.l.b16 %v2525
    %v2594 = vunpack.c.l.b16 %v2526
    %v2595 = vpack.c.b16 %v2564, %v2563
    %v2596 = vpack.c.b16 %v2566, %v2565
    %v2597 = vpack.c.b16 %v2568, %v2567
    %v2598 = vpack.c.b16 %v2570, %v2569
    %v2599 = vpack.c.b16 %v2572, %v2571
    %v2600 = vpack.c.b16 %v2574, %v2573
    %v2601 = vpack.c.b16 %v2576, %v2575
    %v2602 = vpack.c.b16 %v2578, %v2577
    %v2603 = vpack.c.b16 %v2580, %v2579
    %v2604 = vpack.c.b16 %v2582, %v2581
    %v2605 = vpack.c.b16 %v2584, %v2583
    %v2606 = vpack.c.b16 %v2586, %v2585
    %v2607 = vpack.c.b16 %v2588, %v2587
    %v2608 = vpack.c.b16 %v2590, %v2589
    %v2609 = vpack.c.b16 %v2592, %v2591
    %v2610 = vpack.c.b16 %v2594, %v2593
    %2627 = vmatpush.bf16.msra.mxu0 %v2602
    %2628 = vmatpush.bf16.msra.mxu0 %v2601
    %2629 = vmatpush.bf16.msra.mxu0 %v2600
    %2630 = vmatpush.bf16.msra.mxu0 %v2599
    %2631 = vmatpush.bf16.msra.mxu0 %v2598
    %2632 = vmatpush.bf16.msra.mxu0 %v2597
    %2633 = vmatpush.bf16.msra.mxu0 %v2596
    %2634 = vmatpush.bf16.msra.mxu0 %v2595
    %2635 = vmatmul.bf16.gmra.mxu0 %v2493
    %v2636 = vpop.f32.mrf.mxu0
    %v2637 = vadd.f32 %v2529, %v2636
    %v2638 = vpop.f32.mrf.mxu0
    %2639 = vdwg.mxu0
    %2640 = vmatpush.bf16.msra.mxu0 %v2610
    %2641 = vmatpush.bf16.msra.mxu0 %v2609
    %2642 = vmatpush.bf16.msra.mxu0 %v2608
    %2643 = vmatpush.bf16.msra.mxu0 %v2607
    %2644 = vmatpush.bf16.msra.mxu0 %v2606
    %2645 = vmatpush.bf16.msra.mxu0 %v2605
    %2646 = vmatpush.bf16.msra.mxu0 %v2604
    %2647 = vmatpush.bf16.msra.mxu0 %v2603
    %2648 = vmatmul.bf16.gmra.mxu0 %v2494
    %v2649 = vpop.f32.mrf.mxu0
    %v2650 = vadd.f32 %v2637, %v2649
    %v2651 = vpop.f32.mrf.mxu0
    %2652 = vdwg.mxu0
    %v2653 = vmax.f32 %v2650, 0.0
    %v2654 = vpack.c.bf16 %v2653, %v2653
    %v2655 = vld [vmem:[%s13] sm:$0xf]
    %v2656 = vld [vmem:[%s13 + $0x4] sm:$0xf]
    %v2657 = vld [vmem:[%s13 + $0x8] sm:$0xf]
    %v2658 = vld [vmem:[%s13 + $0xc] sm:$0xf]
    %v2659 = vld [vmem:[%s13 + $0x10] sm:$0xf]
    %v2660 = vld [vmem:[%s13 + $0x14] sm:$0xf]
    %v2661 = vld [vmem:[%s13 + $0x18] sm:$0xf]
    %v2662 = vld [vmem:[%s13 + $0x1c] sm:$0xf]
    %v2663 = vld [vmem:[%s13 + $0x20] sm:$0xf]
    %v2664 = vld [vmem:[%s13 + $0x24] sm:$0xf]
    %v2665 = vld [vmem:[%s13 + $0x28] sm:$0xf]
    %v2666 = vld [vmem:[%s13 + $0x2c] sm:$0xf]
    %v2667 = vld [vmem:[%s13 + $0x30] sm:$0xf]
    %v2668 = vld [vmem:[%s13 + $0x34] sm:$0xf]
    %v2669 = vld [vmem:[%s13 + $0x38] sm:$0xf]
    %v2670 = vld [vmem:[%s13 + $0x3c] sm:$0xf]
    %v2671 = vld [vmem:[%s14] sm:$0x1]
    %v2673 = vperm.slane %v2671, 0
    %v2691 = vunpack.c.l.b16 %v2655
    %v2692 = vunpack.c.l.b16 %v2656
    %v2693 = vunpack.c.l.b16 %v2657
    %v2694 = vunpack.c.l.b16 %v2658
    %v2695 = vunpack.c.l.b16 %v2659
    %v2696 = vunpack.c.l.b16 %v2660
    %v2697 = vunpack.c.l.b16 %v2661
    %v2698 = vunpack.c.l.b16 %v2662
    %v2699 = vunpack.c.l.b16 %v2663
    %v2700 = vunpack.c.l.b16 %v2664
    %v2701 = vunpack.c.l.b16 %v2665
    %v2702 = vunpack.c.l.b16 %v2666
    %v2703 = vunpack.c.l.b16 %v2667
    %v2704 = vunpack.c.l.b16 %v2668
    %v2705 = vunpack.c.l.b16 %v2669
    %v2706 = vunpack.c.l.b16 %v2670
    %v2707 = vpack.c.b16 %v2692, %v2691
    %v2708 = vpack.c.b16 %v2694, %v2693
    %v2709 = vpack.c.b16 %v2696, %v2695
    %v2710 = vpack.c.b16 %v2698, %v2697
    %v2711 = vpack.c.b16 %v2700, %v2699
    %v2712 = vpack.c.b16 %v2702, %v2701
    %v2713 = vpack.c.b16 %v2704, %v2703
    %v2714 = vpack.c.b16 %v2706, %v2705
    %2723 = vmatpush.bf16.msra.mxu0 %v2714
    %2724 = vmatpush.bf16.msra.mxu0 %v2713
    %2725 = vmatpush.bf16.msra.mxu0 %v2712
    %2726 = vmatpush.bf16.msra.mxu0 %v2711
    %2727 = vmatpush.bf16.msra.mxu0 %v2710
    %2728 = vmatpush.bf16.msra.mxu0 %v2709
    %2729 = vmatpush.bf16.msra.mxu0 %v2708
    %2730 = vmatpush.bf16.msra.mxu0 %v2707
    %2731 = vmatmul.bf16.gmra.mxu0 %v2654
    %v2732 = vpop.f32.mrf.mxu0
    %v2733 = vadd.f32 %v2673, %v2732
    %v2734 = vpop.f32.mrf.mxu0
    %2735 = vdwg.mxu0
    %2736 = vst [vmem:[#allocation2] sm:$0x3] %v2733
    // Predicated region
    $region62: #{hand_gesture_cnn_forward.7} parent=1 // pred_check
      _
    $region63: #{hand_gesture_cnn_forward.7} parent=1 // pred_check_branch
      %2738 = sbr.rel (0) target = $region65
    $region64: #{hand_gesture_cnn_forward.7} parent=1 // pred_region
      %2740 = vsyncadd [#allocation3], 0
      %s2742 = sshll.u32 [#allocation2], 4
      %s2743 = int_to_ptr.vmem [resolvable:$true] %s2742
      %s2744 = sshll.u32 %s15, 4
      %s2745 = int_to_ptr.hbm [resolvable:$true] %s2744
      %2747 = dma.vmem_to_hbm [thread:$0]  %s2743, 32, %s2745, [#allocation3]
    $region65: #{hand_gesture_cnn_forward.7} parent=1 // pred_fallthru
      _
    // Predicated region
    $region66: #{hand_gesture_cnn_forward.7} parent=1 // pred_check
      _
    $region67: #{hand_gesture_cnn_forward.7} parent=1 // pred_check_branch
      %2749 = sbr.rel (0) target = $region69
    $region68: #{hand_gesture_cnn_forward.7} parent=1 // pred_region
      %2751 = dma.done [#allocation3], 32
    $region69: #{hand_gesture_cnn_forward.7} parent=1 // pred_fallthru
      _
    %2752 = vsyncpa [#allocation3], 1

</llo_original>
